<compile_context>
chip_gen: v5e
topology: v5e:2x2
jax: 0.10.0
libtpu: 0.0.40
codegen_flags: <defaults>
</compile_context>

<pallas_src>
import functools

import numpy as np
import jax
import jax.numpy as jnp
from jax.experimental import pallas as pl
from jax.experimental.pallas import tpu as pltpu


# ----------------------------------------------------------------------------
# Fused whole-network Pallas kernel
# ----------------------------------------------------------------------------
def _vdir_kernel(x_ref, eps_ref, s_ref, b_ref, *out_refs,
                 Nb, H, L, num_rir, num_res, add_global_res, train):
    """Full VDIR forward for a block of Nb batch elements.

    x_ref   : (Nb, H, L) f32   input image in the lane-dense state layout
    eps_ref : (Nb, H, L) f32   N(0,1) noise embedded at the latent channel lanes
    s_ref   : (nE, 3L, L) bf16 banded conv matrices (3 vertical taps stacked on K)
    b_ref   : (nE, 1, L) f32   bias rows (zero at channel-pad lanes)
    outputs : (Nb, H, L) f32   denoise [, dec, mu, sigma] states
    """
    xs = x_ref[...]                              # (Nb, H, L) f32
    zrow = jnp.zeros((Nb, 1, L), jnp.bfloat16)   # vertical "same"-padding row

    def dot_part(act, idx):
        # One lane-dense GEMM per conv: LHS rows are [row y-1 | row y | row y+1]
        # (K = 3L); horizontal taps, channels and horizontal zero padding are all
        # folded into the banded matrix s_ref[idx] (3L, L).
        a = act.astype(jnp.bfloat16)                              # cast once
        top = jnp.concatenate([zrow, a[:, :H - 1]], axis=1)       # rows y-1
        bot = jnp.concatenate([a[:, 1:], zrow], axis=1)           # rows y+1
        lhs = jnp.concatenate([top, a, bot], axis=2).reshape(Nb * H, 3 * L)
        return jnp.dot(lhs, s_ref[idx], preferred_element_type=jnp.float32)

    def finish(acc, idx, relu):
        acc = acc + b_ref[idx]                   # (1, L) broadcast, f32
        if relu:
            acc = jnp.maximum(acc, 0.0)
        return acc.reshape(Nb, H, L)

    def conv(act, idx, relu=False):
        return finish(dot_part(act, idx), idx, relu)

    # ---------------- Encoder ----------------
    h = conv(xs, 0, relu=True)
    h = conv(h, 1, relu=True)
    mu = conv(h, 2)
    sg = conv(h, 3)

    # ------- Reparameterization (fused): c = mu + eps * exp(sigma / 2) -------
    # (applied in test mode too, matching the PyTorch reference forward)
    c = mu + eps_ref[...] * jnp.exp(sg * 0.5)

    # ---------------- Denoiser ----------------
    # head conv over concat([x, c]) fused as two partial GEMMs
    g = finish(dot_part(xs, 4) + dot_part(c, 5), 4, relu=False)
    idx = 6
    for _ in range(num_rir):
        r = g
        for _ in range(num_res):
            t = conv(r, idx, relu=True); idx += 1
            t = conv(t, idx);            idx += 1
            r = r + t
        r = conv(r, idx); idx += 1
        g = g + r
    out = conv(g, idx); idx += 1                 # tail conv
    if add_global_res:
        out = out + xs                           # fused global residual

    out_refs[0][...] = out

    # ---------------- Decoder (train mode only returns it) ----------------
    if train:
        d = conv(c, idx, relu=True); idx += 1
        d = conv(d, idx, relu=True); idx += 1
        d = conv(d, idx)
        out_refs[1][...] = d
        out_refs[2][...] = mu
        out_refs[3][...] = sg


# ----------------------------------------------------------------------------
# Host-side packing: 3x3 conv -> banded lane-dense matrices (K = 3L)
# ----------------------------------------------------------------------------
def _banded_matrix(w, Cpad, W):
    """(3,3,Cin,Cout) conv weights -> (3L, L) banded matrix, L = W*Cpad.

    S[dy*L + xi*Cpad + ci, xo*Cpad + co] = w[dy, dx, ci, co] with xi = xo + dx - 1
    and entries outside [0, W) dropped, i.e. the horizontal taps, channels AND the
    horizontal zero padding of a 3x3 "same" conv are folded into one GEMM whose K
    spans the 3 vertical taps.
    """
    L = W * Cpad
    cin, cout = w.shape[2], w.shape[3]
    P = np.zeros((3, W, W), np.float32)          # P[dx, x_in, x_out]
    for dx in range(3):
        for xo in range(W):
            xi = xo + dx - 1
            if 0 <= xi < W:
                P[dx, xi, xo] = 1.0
    wpad = jnp.zeros((3, 3, Cpad, Cpad), jnp.float32).at[:, :, :cin, :cout].set(w)
    # S[dy, xi, ci, xo, co] = sum_dx P[dx, xi, xo] * w[dy, dx, ci, co]
    S = jnp.einsum("dio,edcf->eicof", jnp.asarray(P), wpad)
    return S.reshape(3 * L, L)


def _bias_row(b, Cpad, W):
    cout = b.shape[0]
    row = jnp.zeros((W, Cpad), jnp.float32).at[:, :cout].set(
        jnp.broadcast_to(b, (W, cout)))
    return row.reshape(1, W * Cpad)


def pack_vdir_params(params, in_ch, Cpad, W):
    """Stack every conv of the network into banded matrices + bias rows in the
    fixed order consumed by `_vdir_kernel`.  Call ONCE, outside the jitted fwd."""
    enc, den, dec = params["enc"], params["den"], params["dec"]
    entries = [
        (enc["c1"]["w"], enc["c1"]["b"]),
        (enc["c2"]["w"], enc["c2"]["b"]),
        (enc["mu"]["w"], enc["mu"]["b"]),
        (enc["sigma"]["w"], enc["sigma"]["b"]),
        # denoiser head: concat([x, c]) split into two partial convs
        (den["head"]["w"][:, :, :in_ch, :], den["head"]["b"]),
        (den["head"]["w"][:, :, in_ch:, :], jnp.zeros_like(den["head"]["b"])),
    ]
    for rir in den["rirs"]:
        for rb in rir["res"]:
            entries.append((rb["c1"]["w"], rb["c1"]["b"]))
            entries.append((rb["c2"]["w"], rb["c2"]["b"]))
        entries.append((rir["conv"]["w"], rir["conv"]["b"]))
    entries.append((den["tail"]["w"], den["tail"]["b"]))
    entries.append((dec["c1"]["w"], dec["c1"]["b"]))
    entries.append((dec["c2"]["w"], dec["c2"]["b"]))
    entries.append((dec["c3"]["w"], dec["c3"]["b"]))

    s_all = jnp.stack([_banded_matrix(w, Cpad, W) for w, _ in entries])
    b_all = jnp.stack([_bias_row(b, Cpad, W) for _, b in entries])
    return s_all.astype(jnp.bfloat16), b_all


# ----------------------------------------------------------------------------
# Forward on prepacked weights (this is what gets jitted; NCHW in / NCHW out)
# ----------------------------------------------------------------------------
def vdir_forward_packed(s_all, b_all, x_nchw, eps_key, *, in_ch, out_ch, feat,
                        wf, num_rir, num_res, Cpad, mode="test",
                        batch_block=None):
    N, _, H, W = x_nchw.shape
    L = W * Cpad
    train = (mode == "train")
    if not train:                       # decoder entries unused in test mode
        s_all, b_all = s_all[:-3], b_all[:-3]
    n_entries = s_all.shape[0]

    Nb = N if batch_block is None else min(batch_block, N)
    assert N % Nb == 0, "batch_block must divide the batch size"

    # embed NCHW tensors into the lane-dense internal state layout (N, H, W*Cpad)
    def to_state(a_nchw, C):
        a = jnp.transpose(a_nchw, (0, 2, 3, 1)).astype(jnp.float32)  # NHWC
        a = jnp.pad(a, ((0, 0), (0, 0), (0, 0), (0, Cpad - C)))
        return a.reshape(N, H, L)

    x_state = to_state(x_nchw, in_ch)
    # torch.normal(mean=0, std=1, size=mu.shape) equivalent
    eps = jax.random.normal(eps_key, (N, feat, H, W), jnp.float32)
    eps_state = to_state(eps, feat)

    kernel = functools.partial(
        _vdir_kernel, Nb=Nb, H=H, L=L, num_rir=num_rir, num_res=num_res,
        add_global_res=(in_ch == out_ch), train=train)

    state_spec = pl.BlockSpec((Nb, H, L), lambda n: (n, 0, 0))
    n_out = 4 if train else 1

    outs = pl.pallas_call(
        kernel,
        out_shape=[jax.ShapeDtypeStruct((N, H, L), jnp.float32)] * n_out,
        grid=(N // Nb,),
        in_specs=[
            state_spec,
            state_spec,
            pl.BlockSpec((n_entries, 3 * L, L), lambda n: (0, 0, 0)),
            pl.BlockSpec((n_entries, 1, L), lambda n: (0, 0, 0)),
        ],
        out_specs=[state_spec] * n_out,
        compiler_params=pltpu.CompilerParams(
            dimension_semantics=("parallel",),
            vmem_limit_bytes=32 * 1024 * 1024),
    )(x_state, eps_state, s_all, b_all)

    def from_state(st, C):
        t = st.reshape(N, H, W, Cpad)[..., :C]
        return jnp.transpose(t, (0, 3, 1, 2))

    denoise = from_state(outs[0], out_ch)
    if train:
        return (denoise, from_state(outs[1], out_ch),
                from_state(outs[2], feat), from_state(outs[3], feat))
    return denoise


def make_vdir_forward(params, in_ch, out_ch, feat, wf, num_rir, num_res, W,
                      mode="test"):
    """Pack weights ONCE (banded bf16 stack), return a jitted forward fn."""
    Cpad = max(in_ch, out_ch, feat, wf)
    s_all, b_all = pack_vdir_params(params, in_ch, Cpad, W)
    fwd = jax.jit(functools.partial(
        vdir_forward_packed, in_ch=in_ch, out_ch=out_ch, feat=feat, wf=wf,
        num_rir=num_rir, num_res=num_res, Cpad=Cpad, mode=mode))
    return lambda x, eps_key: fwd(s_all, b_all, x, eps_key)


# ----------------------------------------------------------------------------
# Parameter construction (deterministic, synthetic)
# ----------------------------------------------------------------------------
def _conv_params(key, cin, cout, scale=0.05):
    w = scale * jax.random.normal(key, (3, 3, cin, cout), jnp.float32)
    b = jnp.zeros((cout,), jnp.float32)
    return {"w": w, "b": b}


def init_vdir_params(key, in_ch, out_ch, feat, wf, num_rir, num_res):
    n_keys = 4 + 2 + num_rir * (1 + 2 * num_res) + 3
    keys = iter(jax.random.split(key, n_keys))
    params = {}
    params["enc"] = {
        "c1": _conv_params(next(keys), in_ch, wf),
        "c2": _conv_params(next(keys), wf, wf),
        "mu": _conv_params(next(keys), wf, feat),
        "sigma": _conv_params(next(keys), wf, feat),
    }
    den = {
        "head": _conv_params(next(keys), in_ch + feat, wf),
        "tail": _conv_params(next(keys), wf, out_ch),
        "rirs": [],
    }
    for _ in range(num_rir):
        rir = {"res": [], "conv": _conv_params(next(keys), wf, wf)}
        for _ in range(num_res):
            rir["res"].append({
                "c1": _conv_params(next(keys), wf, wf),
                "c2": _conv_params(next(keys), wf, wf),
            })
        den["rirs"].append(rir)
    params["den"] = den
    params["dec"] = {
        "c1": _conv_params(next(keys), feat, wf),
        "c2": _conv_params(next(keys), wf, wf),
        "c3": _conv_params(next(keys), wf, out_ch),
    }
    return params


# ----------------------------------------------------------------------------
# Pure-JAX reference (for correctness check)
# ----------------------------------------------------------------------------
def _conv_ref(x, w, b, relu=False):
    y = jax.lax.conv_general_dilated(
        x, w, window_strides=(1, 1), padding="SAME",
        dimension_numbers=("NHWC", "HWIO", "NHWC"),
        precision=jax.lax.Precision.HIGHEST)
    y = y + b
    return jnp.maximum(y, 0.0) if relu else y


def vdir_reference(params, x_nchw, eps_key, mode="test"):
    enc, den, dec = params["enc"], params["den"], params["dec"]
    x = jnp.transpose(x_nchw, (0, 2, 3, 1))
    h = _conv_ref(x, enc["c1"]["w"], enc["c1"]["b"], relu=True)
    h = _conv_ref(h, enc["c2"]["w"], enc["c2"]["b"], relu=True)
    mu = _conv_ref(h, enc["mu"]["w"], enc["mu"]["b"])
    sg = _conv_ref(h, enc["sigma"]["w"], enc["sigma"]["b"])
    N, H, W, feat = mu.shape
    eps = jax.random.normal(eps_key, (N, feat, H, W), jnp.float32)
    eps = jnp.transpose(eps, (0, 2, 3, 1))
    c = mu + eps * jnp.exp(sg * 0.5)
    g = _conv_ref(jnp.concatenate([x, c], axis=-1),
                  den["head"]["w"], den["head"]["b"])
    for rir in den["rirs"]:
        r = g
        for rb in rir["res"]:
            t = _conv_ref(r, rb["c1"]["w"], rb["c1"]["b"], relu=True)
            t = _conv_ref(t, rb["c2"]["w"], rb["c2"]["b"])
            r = r + t
        r = _conv_ref(r, rir["conv"]["w"], rir["conv"]["b"])
        g = g + r
    out = _conv_ref(g, den["tail"]["w"], den["tail"]["b"])
    if out.shape[-1] == x.shape[-1]:
        out = out + x
    d = _conv_ref(c, dec["c1"]["w"], dec["c1"]["b"], relu=True)
    d = _conv_ref(d, dec["c2"]["w"], dec["c2"]["b"], relu=True)
    d = _conv_ref(d, dec["c3"]["w"], dec["c3"]["b"])
    to_nchw = lambda a: jnp.transpose(a, (0, 3, 1, 2))
    if mode == "train":
        return to_nchw(out), to_nchw(d), to_nchw(mu), to_nchw(sg)
    return to_nchw(out)


# ----------------------------------------------------------------------------
if __name__ == "__main__":
    in_ch, out_ch, feat, wf, num_rir, num_res = 3, 3, 4, 8, 2, 2
    N, H, W = 2, 16, 16
    key = jax.random.PRNGKey(0)
    k_params, k_x, k_eps = jax.random.split(key, 3)

    params = init_vdir_params(k_params, in_ch, out_ch, feat, wf, num_rir, num_res)
    x = jax.random.normal(k_x, (N, in_ch, H, W), jnp.float32)   # NCHW like PyTorch

    # test mode (the common inference path: only the denoise map is computed)
    fwd_test = make_vdir_forward(params, in_ch, out_ch, feat, wf,
                                 num_rir, num_res, W, mode="test")
    out = jax.block_until_ready(fwd_test(x, k_eps))
    assert out.shape == (N, out_ch, H, W)
    assert bool(jnp.all(jnp.isfinite(out)))

    ref = jax.block_until_ready(vdir_reference(params, x, k_eps, mode="test"))
    max_err = float(jnp.max(jnp.abs(out - ref)))
    assert max_err < 5e-2, f"test-mode max abs error vs reference: {max_err}"

    # train mode (denoise, dec, mu, sigma)
    fwd_train = make_vdir_forward(params, in_ch, out_ch, feat, wf,
                                  num_rir, num_res, W, mode="train")
    outs = jax.block_until_ready(fwd_train(x, k_eps))
    refs = jax.block_until_ready(vdir_reference(params, x, k_eps, mode="train"))
    for o, r in zip(outs, refs):
        assert o.shape == r.shape
        e = float(jnp.max(jnp.abs(o - r)))
        assert e < 5e-2, f"train-mode max abs error vs reference: {e}"

    print("KERNEL_OK")
</pallas_src>

<mosaic_0001>
module attributes {stable_mosaic.version = 11 : i64} {
  func.func @_vdir_kernel(%arg0: i32, %arg1: memref<2x16x128xf32, #tpu.memory_space<vmem>>, %arg2: memref<2x16x128xf32, #tpu.memory_space<vmem>>, %arg3: memref<17x384x128xbf16, #tpu.memory_space<vmem>>, %arg4: memref<17x1x128xf32, #tpu.memory_space<vmem>>, %arg5: memref<2x16x128xf32, #tpu.memory_space<vmem>>) attributes {dimension_semantics = [#tpu.dimension_semantics<parallel>], iteration_bounds = array<i64: 1>, scalar_prefetch = 0 : i64, scratch_operands = 0 : i64, tpu.core_type = #tpu.core_type<tc>, window_params = [{transform_indices = @transform_0, window_bounds = array<i64: 2, 16, 128>}, {transform_indices = @transform_1, window_bounds = array<i64: 2, 16, 128>}, {pipeline_mode = #tpu.pipeline_mode<synchronous>, transform_indices = @transform_2, window_bounds = array<i64: 17, 384, 128>}, {pipeline_mode = #tpu.pipeline_mode<synchronous>, transform_indices = @transform_3, window_bounds = array<i64: 17, 1, 128>}, {transform_indices = @transform_4, window_bounds = array<i64: 2, 16, 128>}]} {
    %c0 = arith.constant 0 : index
    %c0_0 = arith.constant 0 : index
    %c0_1 = arith.constant 0 : index
    %0 = vector.load %arg1[%c0, %c0_0, %c0_1] : memref<2x16x128xf32, #tpu.memory_space<vmem>>, vector<2x16x128xf32>
    %cst = arith.constant 0.000000e+00 : bf16
    %1 = vector.broadcast %cst : bf16 to vector<2x1x128xbf16>
    %2 = arith.truncf %0 : vector<2x16x128xf32> to vector<2x16x128xbf16>
    %3 = vector.extract_strided_slice %2 {offsets = [0, 0, 0], sizes = [2, 15, 128], strides = [1, 1, 1]} : vector<2x16x128xbf16> to vector<2x15x128xbf16>
    %4 = tpu.concatenate %1, %3 in 1 : vector<2x1x128xbf16>, vector<2x15x128xbf16> -> vector<2x16x128xbf16>
    %5 = vector.extract_strided_slice %2 {offsets = [0, 1, 0], sizes = [2, 15, 128], strides = [1, 1, 1]} : vector<2x16x128xbf16> to vector<2x15x128xbf16>
    %6 = tpu.concatenate %5, %1 in 1 : vector<2x15x128xbf16>, vector<2x1x128xbf16> -> vector<2x16x128xbf16>
    %7 = tpu.concatenate %4, %2, %6 in 2 : vector<2x16x128xbf16>, vector<2x16x128xbf16>, vector<2x16x128xbf16> -> vector<2x16x384xbf16>
    %8 = vector.shape_cast %7 : vector<2x16x384xbf16> to vector<32x384xbf16>
    %c0_2 = arith.constant 0 : index
    %c0_3 = arith.constant 0 : index
    %c0_4 = arith.constant 0 : index
    %9 = vector.load %arg3[%c0_2, %c0_3, %c0_4] : memref<17x384x128xbf16, #tpu.memory_space<vmem>>, vector<1x384x128xbf16>
    %10 = vector.shape_cast %9 : vector<1x384x128xbf16> to vector<384x128xbf16>
    %cst_5 = arith.constant dense<0.000000e+00> : vector<32x128xf32>
    %11 = tpu.matmul %8, %10, %cst_5 {dimension_numbers = #tpu.dot_dimension_numbers<[1], [0], [0], [1], [0, 0, 1, 1], [], []>} : vector<32x384xbf16>, vector<384x128xbf16>, vector<32x128xf32> -> vector<32x128xf32>
    %c0_6 = arith.constant 0 : index
    %c0_7 = arith.constant 0 : index
    %c0_8 = arith.constant 0 : index
    %12 = vector.load %arg4[%c0_6, %c0_7, %c0_8] : memref<17x1x128xf32, #tpu.memory_space<vmem>>, vector<1x1x128xf32>
    %13 = vector.shape_cast %12 : vector<1x1x128xf32> to vector<1x128xf32>
    %14 = vector.broadcast %13 : vector<1x128xf32> to vector<32x128xf32>
    %15 = arith.addf %11, %14 : vector<32x128xf32>
    %cst_9 = arith.constant 0.000000e+00 : f32
    %16 = vector.broadcast %cst_9 : f32 to vector<32x128xf32>
    %17 = arith.maximumf %15, %16 : vector<32x128xf32>
    %18 = vector.shape_cast %17 : vector<32x128xf32> to vector<2x16x128xf32>
    %19 = arith.truncf %18 : vector<2x16x128xf32> to vector<2x16x128xbf16>
    %20 = vector.extract_strided_slice %19 {offsets = [0, 0, 0], sizes = [2, 15, 128], strides = [1, 1, 1]} : vector<2x16x128xbf16> to vector<2x15x128xbf16>
    %21 = tpu.concatenate %1, %20 in 1 : vector<2x1x128xbf16>, vector<2x15x128xbf16> -> vector<2x16x128xbf16>
    %22 = vector.extract_strided_slice %19 {offsets = [0, 1, 0], sizes = [2, 15, 128], strides = [1, 1, 1]} : vector<2x16x128xbf16> to vector<2x15x128xbf16>
    %23 = tpu.concatenate %22, %1 in 1 : vector<2x15x128xbf16>, vector<2x1x128xbf16> -> vector<2x16x128xbf16>
    %24 = tpu.concatenate %21, %19, %23 in 2 : vector<2x16x128xbf16>, vector<2x16x128xbf16>, vector<2x16x128xbf16> -> vector<2x16x384xbf16>
    %25 = vector.shape_cast %24 : vector<2x16x384xbf16> to vector<32x384xbf16>
    %c1 = arith.constant 1 : index
    %c0_10 = arith.constant 0 : index
    %c0_11 = arith.constant 0 : index
    %26 = vector.load %arg3[%c1, %c0_10, %c0_11] : memref<17x384x128xbf16, #tpu.memory_space<vmem>>, vector<1x384x128xbf16>
    %27 = vector.shape_cast %26 : vector<1x384x128xbf16> to vector<384x128xbf16>
    %cst_12 = arith.constant dense<0.000000e+00> : vector<32x128xf32>
    %28 = tpu.matmul %25, %27, %cst_12 {dimension_numbers = #tpu.dot_dimension_numbers<[1], [0], [0], [1], [0, 0, 1, 1], [], []>} : vector<32x384xbf16>, vector<384x128xbf16>, vector<32x128xf32> -> vector<32x128xf32>
    %c1_13 = arith.constant 1 : index
    %c0_14 = arith.constant 0 : index
    %c0_15 = arith.constant 0 : index
    %29 = vector.load %arg4[%c1_13, %c0_14, %c0_15] : memref<17x1x128xf32, #tpu.memory_space<vmem>>, vector<1x1x128xf32>
    %30 = vector.shape_cast %29 : vector<1x1x128xf32> to vector<1x128xf32>
    %31 = vector.broadcast %30 : vector<1x128xf32> to vector<32x128xf32>
    %32 = arith.addf %28, %31 : vector<32x128xf32>
    %cst_16 = arith.constant 0.000000e+00 : f32
    %33 = vector.broadcast %cst_16 : f32 to vector<32x128xf32>
    %34 = arith.maximumf %32, %33 : vector<32x128xf32>
    %35 = vector.shape_cast %34 : vector<32x128xf32> to vector<2x16x128xf32>
    %36 = arith.truncf %35 : vector<2x16x128xf32> to vector<2x16x128xbf16>
    %37 = vector.extract_strided_slice %36 {offsets = [0, 0, 0], sizes = [2, 15, 128], strides = [1, 1, 1]} : vector<2x16x128xbf16> to vector<2x15x128xbf16>
    %38 = tpu.concatenate %1, %37 in 1 : vector<2x1x128xbf16>, vector<2x15x128xbf16> -> vector<2x16x128xbf16>
    %39 = vector.extract_strided_slice %36 {offsets = [0, 1, 0], sizes = [2, 15, 128], strides = [1, 1, 1]} : vector<2x16x128xbf16> to vector<2x15x128xbf16>
    %40 = tpu.concatenate %39, %1 in 1 : vector<2x15x128xbf16>, vector<2x1x128xbf16> -> vector<2x16x128xbf16>
    %41 = tpu.concatenate %38, %36, %40 in 2 : vector<2x16x128xbf16>, vector<2x16x128xbf16>, vector<2x16x128xbf16> -> vector<2x16x384xbf16>
    %42 = vector.shape_cast %41 : vector<2x16x384xbf16> to vector<32x384xbf16>
    %c2 = arith.constant 2 : index
    %c0_17 = arith.constant 0 : index
    %c0_18 = arith.constant 0 : index
    %43 = vector.load %arg3[%c2, %c0_17, %c0_18] : memref<17x384x128xbf16, #tpu.memory_space<vmem>>, vector<1x384x128xbf16>
    %44 = vector.shape_cast %43 : vector<1x384x128xbf16> to vector<384x128xbf16>
    %cst_19 = arith.constant dense<0.000000e+00> : vector<32x128xf32>
    %45 = tpu.matmul %42, %44, %cst_19 {dimension_numbers = #tpu.dot_dimension_numbers<[1], [0], [0], [1], [0, 0, 1, 1], [], []>} : vector<32x384xbf16>, vector<384x128xbf16>, vector<32x128xf32> -> vector<32x128xf32>
    %c2_20 = arith.constant 2 : index
    %c0_21 = arith.constant 0 : index
    %c0_22 = arith.constant 0 : index
    %46 = vector.load %arg4[%c2_20, %c0_21, %c0_22] : memref<17x1x128xf32, #tpu.memory_space<vmem>>, vector<1x1x128xf32>
    %47 = vector.shape_cast %46 : vector<1x1x128xf32> to vector<1x128xf32>
    %48 = vector.broadcast %47 : vector<1x128xf32> to vector<32x128xf32>
    %49 = arith.addf %45, %48 : vector<32x128xf32>
    %50 = vector.shape_cast %49 : vector<32x128xf32> to vector<2x16x128xf32>
    %51 = arith.truncf %35 : vector<2x16x128xf32> to vector<2x16x128xbf16>
    %52 = vector.extract_strided_slice %51 {offsets = [0, 0, 0], sizes = [2, 15, 128], strides = [1, 1, 1]} : vector<2x16x128xbf16> to vector<2x15x128xbf16>
    %53 = tpu.concatenate %1, %52 in 1 : vector<2x1x128xbf16>, vector<2x15x128xbf16> -> vector<2x16x128xbf16>
    %54 = vector.extract_strided_slice %51 {offsets = [0, 1, 0], sizes = [2, 15, 128], strides = [1, 1, 1]} : vector<2x16x128xbf16> to vector<2x15x128xbf16>
    %55 = tpu.concatenate %54, %1 in 1 : vector<2x15x128xbf16>, vector<2x1x128xbf16> -> vector<2x16x128xbf16>
    %56 = tpu.concatenate %53, %51, %55 in 2 : vector<2x16x128xbf16>, vector<2x16x128xbf16>, vector<2x16x128xbf16> -> vector<2x16x384xbf16>
    %57 = vector.shape_cast %56 : vector<2x16x384xbf16> to vector<32x384xbf16>
    %c3 = arith.constant 3 : index
    %c0_23 = arith.constant 0 : index
    %c0_24 = arith.constant 0 : index
    %58 = vector.load %arg3[%c3, %c0_23, %c0_24] : memref<17x384x128xbf16, #tpu.memory_space<vmem>>, vector<1x384x128xbf16>
    %59 = vector.shape_cast %58 : vector<1x384x128xbf16> to vector<384x128xbf16>
    %cst_25 = arith.constant dense<0.000000e+00> : vector<32x128xf32>
    %60 = tpu.matmul %57, %59, %cst_25 {dimension_numbers = #tpu.dot_dimension_numbers<[1], [0], [0], [1], [0, 0, 1, 1], [], []>} : vector<32x384xbf16>, vector<384x128xbf16>, vector<32x128xf32> -> vector<32x128xf32>
    %c3_26 = arith.constant 3 : index
    %c0_27 = arith.constant 0 : index
    %c0_28 = arith.constant 0 : index
    %61 = vector.load %arg4[%c3_26, %c0_27, %c0_28] : memref<17x1x128xf32, #tpu.memory_space<vmem>>, vector<1x1x128xf32>
    %62 = vector.shape_cast %61 : vector<1x1x128xf32> to vector<1x128xf32>
    %63 = vector.broadcast %62 : vector<1x128xf32> to vector<32x128xf32>
    %64 = arith.addf %60, %63 : vector<32x128xf32>
    %65 = vector.shape_cast %64 : vector<32x128xf32> to vector<2x16x128xf32>
    %c0_29 = arith.constant 0 : index
    %c0_30 = arith.constant 0 : index
    %c0_31 = arith.constant 0 : index
    %66 = vector.load %arg2[%c0_29, %c0_30, %c0_31] : memref<2x16x128xf32, #tpu.memory_space<vmem>>, vector<2x16x128xf32>
    %cst_32 = arith.constant 5.000000e-01 : f32
    %67 = vector.broadcast %cst_32 : f32 to vector<2x16x128xf32>
    %68 = arith.mulf %65, %67 : vector<2x16x128xf32>
    %69 = math.exp %68 : vector<2x16x128xf32>
    %70 = arith.mulf %66, %69 : vector<2x16x128xf32>
    %71 = arith.addf %50, %70 : vector<2x16x128xf32>
    %72 = arith.truncf %0 : vector<2x16x128xf32> to vector<2x16x128xbf16>
    %73 = vector.extract_strided_slice %72 {offsets = [0, 0, 0], sizes = [2, 15, 128], strides = [1, 1, 1]} : vector<2x16x128xbf16> to vector<2x15x128xbf16>
    %74 = tpu.concatenate %1, %73 in 1 : vector<2x1x128xbf16>, vector<2x15x128xbf16> -> vector<2x16x128xbf16>
    %75 = vector.extract_strided_slice %72 {offsets = [0, 1, 0], sizes = [2, 15, 128], strides = [1, 1, 1]} : vector<2x16x128xbf16> to vector<2x15x128xbf16>
    %76 = tpu.concatenate %75, %1 in 1 : vector<2x15x128xbf16>, vector<2x1x128xbf16> -> vector<2x16x128xbf16>
    %77 = tpu.concatenate %74, %72, %76 in 2 : vector<2x16x128xbf16>, vector<2x16x128xbf16>, vector<2x16x128xbf16> -> vector<2x16x384xbf16>
    %78 = vector.shape_cast %77 : vector<2x16x384xbf16> to vector<32x384xbf16>
    %c4 = arith.constant 4 : index
    %c0_33 = arith.constant 0 : index
    %c0_34 = arith.constant 0 : index
    %79 = vector.load %arg3[%c4, %c0_33, %c0_34] : memref<17x384x128xbf16, #tpu.memory_space<vmem>>, vector<1x384x128xbf16>
    %80 = vector.shape_cast %79 : vector<1x384x128xbf16> to vector<384x128xbf16>
    %cst_35 = arith.constant dense<0.000000e+00> : vector<32x128xf32>
    %81 = tpu.matmul %78, %80, %cst_35 {dimension_numbers = #tpu.dot_dimension_numbers<[1], [0], [0], [1], [0, 0, 1, 1], [], []>} : vector<32x384xbf16>, vector<384x128xbf16>, vector<32x128xf32> -> vector<32x128xf32>
    %82 = arith.truncf %71 : vector<2x16x128xf32> to vector<2x16x128xbf16>
    %83 = vector.extract_strided_slice %82 {offsets = [0, 0, 0], sizes = [2, 15, 128], strides = [1, 1, 1]} : vector<2x16x128xbf16> to vector<2x15x128xbf16>
    %84 = tpu.concatenate %1, %83 in 1 : vector<2x1x128xbf16>, vector<2x15x128xbf16> -> vector<2x16x128xbf16>
    %85 = vector.extract_strided_slice %82 {offsets = [0, 1, 0], sizes = [2, 15, 128], strides = [1, 1, 1]} : vector<2x16x128xbf16> to vector<2x15x128xbf16>
    %86 = tpu.concatenate %85, %1 in 1 : vector<2x15x128xbf16>, vector<2x1x128xbf16> -> vector<2x16x128xbf16>
    %87 = tpu.concatenate %84, %82, %86 in 2 : vector<2x16x128xbf16>, vector<2x16x128xbf16>, vector<2x16x128xbf16> -> vector<2x16x384xbf16>
    %88 = vector.shape_cast %87 : vector<2x16x384xbf16> to vector<32x384xbf16>
    %c5 = arith.constant 5 : index
    %c0_36 = arith.constant 0 : index
    %c0_37 = arith.constant 0 : index
    %89 = vector.load %arg3[%c5, %c0_36, %c0_37] : memref<17x384x128xbf16, #tpu.memory_space<vmem>>, vector<1x384x128xbf16>
    %90 = vector.shape_cast %89 : vector<1x384x128xbf16> to vector<384x128xbf16>
    %cst_38 = arith.constant dense<0.000000e+00> : vector<32x128xf32>
    %91 = tpu.matmul %88, %90, %cst_38 {dimension_numbers = #tpu.dot_dimension_numbers<[1], [0], [0], [1], [0, 0, 1, 1], [], []>} : vector<32x384xbf16>, vector<384x128xbf16>, vector<32x128xf32> -> vector<32x128xf32>
    %92 = arith.addf %81, %91 : vector<32x128xf32>
    %c4_39 = arith.constant 4 : index
    %c0_40 = arith.constant 0 : index
    %c0_41 = arith.constant 0 : index
    %93 = vector.load %arg4[%c4_39, %c0_40, %c0_41] : memref<17x1x128xf32, #tpu.memory_space<vmem>>, vector<1x1x128xf32>
    %94 = vector.shape_cast %93 : vector<1x1x128xf32> to vector<1x128xf32>
    %95 = vector.broadcast %94 : vector<1x128xf32> to vector<32x128xf32>
    %96 = arith.addf %92, %95 : vector<32x128xf32>
    %97 = vector.shape_cast %96 : vector<32x128xf32> to vector<2x16x128xf32>
    %98 = arith.truncf %97 : vector<2x16x128xf32> to vector<2x16x128xbf16>
    %99 = vector.extract_strided_slice %98 {offsets = [0, 0, 0], sizes = [2, 15, 128], strides = [1, 1, 1]} : vector<2x16x128xbf16> to vector<2x15x128xbf16>
    %100 = tpu.concatenate %1, %99 in 1 : vector<2x1x128xbf16>, vector<2x15x128xbf16> -> vector<2x16x128xbf16>
    %101 = vector.extract_strided_slice %98 {offsets = [0, 1, 0], sizes = [2, 15, 128], strides = [1, 1, 1]} : vector<2x16x128xbf16> to vector<2x15x128xbf16>
    %102 = tpu.concatenate %101, %1 in 1 : vector<2x15x128xbf16>, vector<2x1x128xbf16> -> vector<2x16x128xbf16>
    %103 = tpu.concatenate %100, %98, %102 in 2 : vector<2x16x128xbf16>, vector<2x16x128xbf16>, vector<2x16x128xbf16> -> vector<2x16x384xbf16>
    %104 = vector.shape_cast %103 : vector<2x16x384xbf16> to vector<32x384xbf16>
    %c6 = arith.constant 6 : index
    %c0_42 = arith.constant 0 : index
    %c0_43 = arith.constant 0 : index
    %105 = vector.load %arg3[%c6, %c0_42, %c0_43] : memref<17x384x128xbf16, #tpu.memory_space<vmem>>, vector<1x384x128xbf16>
    %106 = vector.shape_cast %105 : vector<1x384x128xbf16> to vector<384x128xbf16>
    %cst_44 = arith.constant dense<0.000000e+00> : vector<32x128xf32>
    %107 = tpu.matmul %104, %106, %cst_44 {dimension_numbers = #tpu.dot_dimension_numbers<[1], [0], [0], [1], [0, 0, 1, 1], [], []>} : vector<32x384xbf16>, vector<384x128xbf16>, vector<32x128xf32> -> vector<32x128xf32>
    %c6_45 = arith.constant 6 : index
    %c0_46 = arith.constant 0 : index
    %c0_47 = arith.constant 0 : index
    %108 = vector.load %arg4[%c6_45, %c0_46, %c0_47] : memref<17x1x128xf32, #tpu.memory_space<vmem>>, vector<1x1x128xf32>
    %109 = vector.shape_cast %108 : vector<1x1x128xf32> to vector<1x128xf32>
    %110 = vector.broadcast %109 : vector<1x128xf32> to vector<32x128xf32>
    %111 = arith.addf %107, %110 : vector<32x128xf32>
    %cst_48 = arith.constant 0.000000e+00 : f32
    %112 = vector.broadcast %cst_48 : f32 to vector<32x128xf32>
    %113 = arith.maximumf %111, %112 : vector<32x128xf32>
    %114 = vector.shape_cast %113 : vector<32x128xf32> to vector<2x16x128xf32>
    %115 = arith.truncf %114 : vector<2x16x128xf32> to vector<2x16x128xbf16>
    %116 = vector.extract_strided_slice %115 {offsets = [0, 0, 0], sizes = [2, 15, 128], strides = [1, 1, 1]} : vector<2x16x128xbf16> to vector<2x15x128xbf16>
    %117 = tpu.concatenate %1, %116 in 1 : vector<2x1x128xbf16>, vector<2x15x128xbf16> -> vector<2x16x128xbf16>
    %118 = vector.extract_strided_slice %115 {offsets = [0, 1, 0], sizes = [2, 15, 128], strides = [1, 1, 1]} : vector<2x16x128xbf16> to vector<2x15x128xbf16>
    %119 = tpu.concatenate %118, %1 in 1 : vector<2x15x128xbf16>, vector<2x1x128xbf16> -> vector<2x16x128xbf16>
    %120 = tpu.concatenate %117, %115, %119 in 2 : vector<2x16x128xbf16>, vector<2x16x128xbf16>, vector<2x16x128xbf16> -> vector<2x16x384xbf16>
    %121 = vector.shape_cast %120 : vector<2x16x384xbf16> to vector<32x384xbf16>
    %c7 = arith.constant 7 : index
    %c0_49 = arith.constant 0 : index
    %c0_50 = arith.constant 0 : index
    %122 = vector.load %arg3[%c7, %c0_49, %c0_50] : memref<17x384x128xbf16, #tpu.memory_space<vmem>>, vector<1x384x128xbf16>
    %123 = vector.shape_cast %122 : vector<1x384x128xbf16> to vector<384x128xbf16>
    %cst_51 = arith.constant dense<0.000000e+00> : vector<32x128xf32>
    %124 = tpu.matmul %121, %123, %cst_51 {dimension_numbers = #tpu.dot_dimension_numbers<[1], [0], [0], [1], [0, 0, 1, 1], [], []>} : vector<32x384xbf16>, vector<384x128xbf16>, vector<32x128xf32> -> vector<32x128xf32>
    %c7_52 = arith.constant 7 : index
    %c0_53 = arith.constant 0 : index
    %c0_54 = arith.constant 0 : index
    %125 = vector.load %arg4[%c7_52, %c0_53, %c0_54] : memref<17x1x128xf32, #tpu.memory_space<vmem>>, vector<1x1x128xf32>
    %126 = vector.shape_cast %125 : vector<1x1x128xf32> to vector<1x128xf32>
    %127 = vector.broadcast %126 : vector<1x128xf32> to vector<32x128xf32>
    %128 = arith.addf %124, %127 : vector<32x128xf32>
    %129 = vector.shape_cast %128 : vector<32x128xf32> to vector<2x16x128xf32>
    %130 = arith.addf %97, %129 : vector<2x16x128xf32>
    %131 = arith.truncf %130 : vector<2x16x128xf32> to vector<2x16x128xbf16>
    %132 = vector.extract_strided_slice %131 {offsets = [0, 0, 0], sizes = [2, 15, 128], strides = [1, 1, 1]} : vector<2x16x128xbf16> to vector<2x15x128xbf16>
    %133 = tpu.concatenate %1, %132 in 1 : vector<2x1x128xbf16>, vector<2x15x128xbf16> -> vector<2x16x128xbf16>
    %134 = vector.extract_strided_slice %131 {offsets = [0, 1, 0], sizes = [2, 15, 128], strides = [1, 1, 1]} : vector<2x16x128xbf16> to vector<2x15x128xbf16>
    %135 = tpu.concatenate %134, %1 in 1 : vector<2x15x128xbf16>, vector<2x1x128xbf16> -> vector<2x16x128xbf16>
    %136 = tpu.concatenate %133, %131, %135 in 2 : vector<2x16x128xbf16>, vector<2x16x128xbf16>, vector<2x16x128xbf16> -> vector<2x16x384xbf16>
    %137 = vector.shape_cast %136 : vector<2x16x384xbf16> to vector<32x384xbf16>
    %c8 = arith.constant 8 : index
    %c0_55 = arith.constant 0 : index
    %c0_56 = arith.constant 0 : index
    %138 = vector.load %arg3[%c8, %c0_55, %c0_56] : memref<17x384x128xbf16, #tpu.memory_space<vmem>>, vector<1x384x128xbf16>
    %139 = vector.shape_cast %138 : vector<1x384x128xbf16> to vector<384x128xbf16>
    %cst_57 = arith.constant dense<0.000000e+00> : vector<32x128xf32>
    %140 = tpu.matmul %137, %139, %cst_57 {dimension_numbers = #tpu.dot_dimension_numbers<[1], [0], [0], [1], [0, 0, 1, 1], [], []>} : vector<32x384xbf16>, vector<384x128xbf16>, vector<32x128xf32> -> vector<32x128xf32>
    %c8_58 = arith.constant 8 : index
    %c0_59 = arith.constant 0 : index
    %c0_60 = arith.constant 0 : index
    %141 = vector.load %arg4[%c8_58, %c0_59, %c0_60] : memref<17x1x128xf32, #tpu.memory_space<vmem>>, vector<1x1x128xf32>
    %142 = vector.shape_cast %141 : vector<1x1x128xf32> to vector<1x128xf32>
    %143 = vector.broadcast %142 : vector<1x128xf32> to vector<32x128xf32>
    %144 = arith.addf %140, %143 : vector<32x128xf32>
    %cst_61 = arith.constant 0.000000e+00 : f32
    %145 = vector.broadcast %cst_61 : f32 to vector<32x128xf32>
    %146 = arith.maximumf %144, %145 : vector<32x128xf32>
    %147 = vector.shape_cast %146 : vector<32x128xf32> to vector<2x16x128xf32>
    %148 = arith.truncf %147 : vector<2x16x128xf32> to vector<2x16x128xbf16>
    %149 = vector.extract_strided_slice %148 {offsets = [0, 0, 0], sizes = [2, 15, 128], strides = [1, 1, 1]} : vector<2x16x128xbf16> to vector<2x15x128xbf16>
    %150 = tpu.concatenate %1, %149 in 1 : vector<2x1x128xbf16>, vector<2x15x128xbf16> -> vector<2x16x128xbf16>
    %151 = vector.extract_strided_slice %148 {offsets = [0, 1, 0], sizes = [2, 15, 128], strides = [1, 1, 1]} : vector<2x16x128xbf16> to vector<2x15x128xbf16>
    %152 = tpu.concatenate %151, %1 in 1 : vector<2x15x128xbf16>, vector<2x1x128xbf16> -> vector<2x16x128xbf16>
    %153 = tpu.concatenate %150, %148, %152 in 2 : vector<2x16x128xbf16>, vector<2x16x128xbf16>, vector<2x16x128xbf16> -> vector<2x16x384xbf16>
    %154 = vector.shape_cast %153 : vector<2x16x384xbf16> to vector<32x384xbf16>
    %c9 = arith.constant 9 : index
    %c0_62 = arith.constant 0 : index
    %c0_63 = arith.constant 0 : index
    %155 = vector.load %arg3[%c9, %c0_62, %c0_63] : memref<17x384x128xbf16, #tpu.memory_space<vmem>>, vector<1x384x128xbf16>
    %156 = vector.shape_cast %155 : vector<1x384x128xbf16> to vector<384x128xbf16>
    %cst_64 = arith.constant dense<0.000000e+00> : vector<32x128xf32>
    %157 = tpu.matmul %154, %156, %cst_64 {dimension_numbers = #tpu.dot_dimension_numbers<[1], [0], [0], [1], [0, 0, 1, 1], [], []>} : vector<32x384xbf16>, vector<384x128xbf16>, vector<32x128xf32> -> vector<32x128xf32>
    %c9_65 = arith.constant 9 : index
    %c0_66 = arith.constant 0 : index
    %c0_67 = arith.constant 0 : index
    %158 = vector.load %arg4[%c9_65, %c0_66, %c0_67] : memref<17x1x128xf32, #tpu.memory_space<vmem>>, vector<1x1x128xf32>
    %159 = vector.shape_cast %158 : vector<1x1x128xf32> to vector<1x128xf32>
    %160 = vector.broadcast %159 : vector<1x128xf32> to vector<32x128xf32>
    %161 = arith.addf %157, %160 : vector<32x128xf32>
    %162 = vector.shape_cast %161 : vector<32x128xf32> to vector<2x16x128xf32>
    %163 = arith.addf %130, %162 : vector<2x16x128xf32>
    %164 = arith.truncf %163 : vector<2x16x128xf32> to vector<2x16x128xbf16>
    %165 = vector.extract_strided_slice %164 {offsets = [0, 0, 0], sizes = [2, 15, 128], strides = [1, 1, 1]} : vector<2x16x128xbf16> to vector<2x15x128xbf16>
    %166 = tpu.concatenate %1, %165 in 1 : vector<2x1x128xbf16>, vector<2x15x128xbf16> -> vector<2x16x128xbf16>
    %167 = vector.extract_strided_slice %164 {offsets = [0, 1, 0], sizes = [2, 15, 128], strides = [1, 1, 1]} : vector<2x16x128xbf16> to vector<2x15x128xbf16>
    %168 = tpu.concatenate %167, %1 in 1 : vector<2x15x128xbf16>, vector<2x1x128xbf16> -> vector<2x16x128xbf16>
    %169 = tpu.concatenate %166, %164, %168 in 2 : vector<2x16x128xbf16>, vector<2x16x128xbf16>, vector<2x16x128xbf16> -> vector<2x16x384xbf16>
    %170 = vector.shape_cast %169 : vector<2x16x384xbf16> to vector<32x384xbf16>
    %c10 = arith.constant 10 : index
    %c0_68 = arith.constant 0 : index
    %c0_69 = arith.constant 0 : index
    %171 = vector.load %arg3[%c10, %c0_68, %c0_69] : memref<17x384x128xbf16, #tpu.memory_space<vmem>>, vector<1x384x128xbf16>
    %172 = vector.shape_cast %171 : vector<1x384x128xbf16> to vector<384x128xbf16>
    %cst_70 = arith.constant dense<0.000000e+00> : vector<32x128xf32>
    %173 = tpu.matmul %170, %172, %cst_70 {dimension_numbers = #tpu.dot_dimension_numbers<[1], [0], [0], [1], [0, 0, 1, 1], [], []>} : vector<32x384xbf16>, vector<384x128xbf16>, vector<32x128xf32> -> vector<32x128xf32>
    %c10_71 = arith.constant 10 : index
    %c0_72 = arith.constant 0 : index
    %c0_73 = arith.constant 0 : index
    %174 = vector.load %arg4[%c10_71, %c0_72, %c0_73] : memref<17x1x128xf32, #tpu.memory_space<vmem>>, vector<1x1x128xf32>
    %175 = vector.shape_cast %174 : vector<1x1x128xf32> to vector<1x128xf32>
    %176 = vector.broadcast %175 : vector<1x128xf32> to vector<32x128xf32>
    %177 = arith.addf %173, %176 : vector<32x128xf32>
    %178 = vector.shape_cast %177 : vector<32x128xf32> to vector<2x16x128xf32>
    %179 = arith.addf %97, %178 : vector<2x16x128xf32>
    %180 = arith.truncf %179 : vector<2x16x128xf32> to vector<2x16x128xbf16>
    %181 = vector.extract_strided_slice %180 {offsets = [0, 0, 0], sizes = [2, 15, 128], strides = [1, 1, 1]} : vector<2x16x128xbf16> to vector<2x15x128xbf16>
    %182 = tpu.concatenate %1, %181 in 1 : vector<2x1x128xbf16>, vector<2x15x128xbf16> -> vector<2x16x128xbf16>
    %183 = vector.extract_strided_slice %180 {offsets = [0, 1, 0], sizes = [2, 15, 128], strides = [1, 1, 1]} : vector<2x16x128xbf16> to vector<2x15x128xbf16>
    %184 = tpu.concatenate %183, %1 in 1 : vector<2x15x128xbf16>, vector<2x1x128xbf16> -> vector<2x16x128xbf16>
    %185 = tpu.concatenate %182, %180, %184 in 2 : vector<2x16x128xbf16>, vector<2x16x128xbf16>, vector<2x16x128xbf16> -> vector<2x16x384xbf16>
    %186 = vector.shape_cast %185 : vector<2x16x384xbf16> to vector<32x384xbf16>
    %c11 = arith.constant 11 : index
    %c0_74 = arith.constant 0 : index
    %c0_75 = arith.constant 0 : index
    %187 = vector.load %arg3[%c11, %c0_74, %c0_75] : memref<17x384x128xbf16, #tpu.memory_space<vmem>>, vector<1x384x128xbf16>
    %188 = vector.shape_cast %187 : vector<1x384x128xbf16> to vector<384x128xbf16>
    %cst_76 = arith.constant dense<0.000000e+00> : vector<32x128xf32>
    %189 = tpu.matmul %186, %188, %cst_76 {dimension_numbers = #tpu.dot_dimension_numbers<[1], [0], [0], [1], [0, 0, 1, 1], [], []>} : vector<32x384xbf16>, vector<384x128xbf16>, vector<32x128xf32> -> vector<32x128xf32>
    %c11_77 = arith.constant 11 : index
    %c0_78 = arith.constant 0 : index
    %c0_79 = arith.constant 0 : index
    %190 = vector.load %arg4[%c11_77, %c0_78, %c0_79] : memref<17x1x128xf32, #tpu.memory_space<vmem>>, vector<1x1x128xf32>
    %191 = vector.shape_cast %190 : vector<1x1x128xf32> to vector<1x128xf32>
    %192 = vector.broadcast %191 : vector<1x128xf32> to vector<32x128xf32>
    %193 = arith.addf %189, %192 : vector<32x128xf32>
    %cst_80 = arith.constant 0.000000e+00 : f32
    %194 = vector.broadcast %cst_80 : f32 to vector<32x128xf32>
    %195 = arith.maximumf %193, %194 : vector<32x128xf32>
    %196 = vector.shape_cast %195 : vector<32x128xf32> to vector<2x16x128xf32>
    %197 = arith.truncf %196 : vector<2x16x128xf32> to vector<2x16x128xbf16>
    %198 = vector.extract_strided_slice %197 {offsets = [0, 0, 0], sizes = [2, 15, 128], strides = [1, 1, 1]} : vector<2x16x128xbf16> to vector<2x15x128xbf16>
    %199 = tpu.concatenate %1, %198 in 1 : vector<2x1x128xbf16>, vector<2x15x128xbf16> -> vector<2x16x128xbf16>
    %200 = vector.extract_strided_slice %197 {offsets = [0, 1, 0], sizes = [2, 15, 128], strides = [1, 1, 1]} : vector<2x16x128xbf16> to vector<2x15x128xbf16>
    %201 = tpu.concatenate %200, %1 in 1 : vector<2x15x128xbf16>, vector<2x1x128xbf16> -> vector<2x16x128xbf16>
    %202 = tpu.concatenate %199, %197, %201 in 2 : vector<2x16x128xbf16>, vector<2x16x128xbf16>, vector<2x16x128xbf16> -> vector<2x16x384xbf16>
    %203 = vector.shape_cast %202 : vector<2x16x384xbf16> to vector<32x384xbf16>
    %c12 = arith.constant 12 : index
    %c0_81 = arith.constant 0 : index
    %c0_82 = arith.constant 0 : index
    %204 = vector.load %arg3[%c12, %c0_81, %c0_82] : memref<17x384x128xbf16, #tpu.memory_space<vmem>>, vector<1x384x128xbf16>
    %205 = vector.shape_cast %204 : vector<1x384x128xbf16> to vector<384x128xbf16>
    %cst_83 = arith.constant dense<0.000000e+00> : vector<32x128xf32>
    %206 = tpu.matmul %203, %205, %cst_83 {dimension_numbers = #tpu.dot_dimension_numbers<[1], [0], [0], [1], [0, 0, 1, 1], [], []>} : vector<32x384xbf16>, vector<384x128xbf16>, vector<32x128xf32> -> vector<32x128xf32>
    %c12_84 = arith.constant 12 : index
    %c0_85 = arith.constant 0 : index
    %c0_86 = arith.constant 0 : index
    %207 = vector.load %arg4[%c12_84, %c0_85, %c0_86] : memref<17x1x128xf32, #tpu.memory_space<vmem>>, vector<1x1x128xf32>
    %208 = vector.shape_cast %207 : vector<1x1x128xf32> to vector<1x128xf32>
    %209 = vector.broadcast %208 : vector<1x128xf32> to vector<32x128xf32>
    %210 = arith.addf %206, %209 : vector<32x128xf32>
    %211 = vector.shape_cast %210 : vector<32x128xf32> to vector<2x16x128xf32>
    %212 = arith.addf %179, %211 : vector<2x16x128xf32>
    %213 = arith.truncf %212 : vector<2x16x128xf32> to vector<2x16x128xbf16>
    %214 = vector.extract_strided_slice %213 {offsets = [0, 0, 0], sizes = [2, 15, 128], strides = [1, 1, 1]} : vector<2x16x128xbf16> to vector<2x15x128xbf16>
    %215 = tpu.concatenate %1, %214 in 1 : vector<2x1x128xbf16>, vector<2x15x128xbf16> -> vector<2x16x128xbf16>
    %216 = vector.extract_strided_slice %213 {offsets = [0, 1, 0], sizes = [2, 15, 128], strides = [1, 1, 1]} : vector<2x16x128xbf16> to vector<2x15x128xbf16>
    %217 = tpu.concatenate %216, %1 in 1 : vector<2x15x128xbf16>, vector<2x1x128xbf16> -> vector<2x16x128xbf16>
    %218 = tpu.concatenate %215, %213, %217 in 2 : vector<2x16x128xbf16>, vector<2x16x128xbf16>, vector<2x16x128xbf16> -> vector<2x16x384xbf16>
    %219 = vector.shape_cast %218 : vector<2x16x384xbf16> to vector<32x384xbf16>
    %c13 = arith.constant 13 : index
    %c0_87 = arith.constant 0 : index
    %c0_88 = arith.constant 0 : index
    %220 = vector.load %arg3[%c13, %c0_87, %c0_88] : memref<17x384x128xbf16, #tpu.memory_space<vmem>>, vector<1x384x128xbf16>
    %221 = vector.shape_cast %220 : vector<1x384x128xbf16> to vector<384x128xbf16>
    %cst_89 = arith.constant dense<0.000000e+00> : vector<32x128xf32>
    %222 = tpu.matmul %219, %221, %cst_89 {dimension_numbers = #tpu.dot_dimension_numbers<[1], [0], [0], [1], [0, 0, 1, 1], [], []>} : vector<32x384xbf16>, vector<384x128xbf16>, vector<32x128xf32> -> vector<32x128xf32>
    %c13_90 = arith.constant 13 : index
    %c0_91 = arith.constant 0 : index
    %c0_92 = arith.constant 0 : index
    %223 = vector.load %arg4[%c13_90, %c0_91, %c0_92] : memref<17x1x128xf32, #tpu.memory_space<vmem>>, vector<1x1x128xf32>
    %224 = vector.shape_cast %223 : vector<1x1x128xf32> to vector<1x128xf32>
    %225 = vector.broadcast %224 : vector<1x128xf32> to vector<32x128xf32>
    %226 = arith.addf %222, %225 : vector<32x128xf32>
    %cst_93 = arith.constant 0.000000e+00 : f32
    %227 = vector.broadcast %cst_93 : f32 to vector<32x128xf32>
    %228 = arith.maximumf %226, %227 : vector<32x128xf32>
    %229 = vector.shape_cast %228 : vector<32x128xf32> to vector<2x16x128xf32>
    %230 = arith.truncf %229 : vector<2x16x128xf32> to vector<2x16x128xbf16>
    %231 = vector.extract_strided_slice %230 {offsets = [0, 0, 0], sizes = [2, 15, 128], strides = [1, 1, 1]} : vector<2x16x128xbf16> to vector<2x15x128xbf16>
    %232 = tpu.concatenate %1, %231 in 1 : vector<2x1x128xbf16>, vector<2x15x128xbf16> -> vector<2x16x128xbf16>
    %233 = vector.extract_strided_slice %230 {offsets = [0, 1, 0], sizes = [2, 15, 128], strides = [1, 1, 1]} : vector<2x16x128xbf16> to vector<2x15x128xbf16>
    %234 = tpu.concatenate %233, %1 in 1 : vector<2x15x128xbf16>, vector<2x1x128xbf16> -> vector<2x16x128xbf16>
    %235 = tpu.concatenate %232, %230, %234 in 2 : vector<2x16x128xbf16>, vector<2x16x128xbf16>, vector<2x16x128xbf16> -> vector<2x16x384xbf16>
    %236 = vector.shape_cast %235 : vector<2x16x384xbf16> to vector<32x384xbf16>
    %c14 = arith.constant 14 : index
    %c0_94 = arith.constant 0 : index
    %c0_95 = arith.constant 0 : index
    %237 = vector.load %arg3[%c14, %c0_94, %c0_95] : memref<17x384x128xbf16, #tpu.memory_space<vmem>>, vector<1x384x128xbf16>
    %238 = vector.shape_cast %237 : vector<1x384x128xbf16> to vector<384x128xbf16>
    %cst_96 = arith.constant dense<0.000000e+00> : vector<32x128xf32>
    %239 = tpu.matmul %236, %238, %cst_96 {dimension_numbers = #tpu.dot_dimension_numbers<[1], [0], [0], [1], [0, 0, 1, 1], [], []>} : vector<32x384xbf16>, vector<384x128xbf16>, vector<32x128xf32> -> vector<32x128xf32>
    %c14_97 = arith.constant 14 : index
    %c0_98 = arith.constant 0 : index
    %c0_99 = arith.constant 0 : index
    %240 = vector.load %arg4[%c14_97, %c0_98, %c0_99] : memref<17x1x128xf32, #tpu.memory_space<vmem>>, vector<1x1x128xf32>
    %241 = vector.shape_cast %240 : vector<1x1x128xf32> to vector<1x128xf32>
    %242 = vector.broadcast %241 : vector<1x128xf32> to vector<32x128xf32>
    %243 = arith.addf %239, %242 : vector<32x128xf32>
    %244 = vector.shape_cast %243 : vector<32x128xf32> to vector<2x16x128xf32>
    %245 = arith.addf %212, %244 : vector<2x16x128xf32>
    %246 = arith.truncf %245 : vector<2x16x128xf32> to vector<2x16x128xbf16>
    %247 = vector.extract_strided_slice %246 {offsets = [0, 0, 0], sizes = [2, 15, 128], strides = [1, 1, 1]} : vector<2x16x128xbf16> to vector<2x15x128xbf16>
    %248 = tpu.concatenate %1, %247 in 1 : vector<2x1x128xbf16>, vector<2x15x128xbf16> -> vector<2x16x128xbf16>
    %249 = vector.extract_strided_slice %246 {offsets = [0, 1, 0], sizes = [2, 15, 128], strides = [1, 1, 1]} : vector<2x16x128xbf16> to vector<2x15x128xbf16>
    %250 = tpu.concatenate %249, %1 in 1 : vector<2x15x128xbf16>, vector<2x1x128xbf16> -> vector<2x16x128xbf16>
    %251 = tpu.concatenate %248, %246, %250 in 2 : vector<2x16x128xbf16>, vector<2x16x128xbf16>, vector<2x16x128xbf16> -> vector<2x16x384xbf16>
    %252 = vector.shape_cast %251 : vector<2x16x384xbf16> to vector<32x384xbf16>
    %c15 = arith.constant 15 : index
    %c0_100 = arith.constant 0 : index
    %c0_101 = arith.constant 0 : index
    %253 = vector.load %arg3[%c15, %c0_100, %c0_101] : memref<17x384x128xbf16, #tpu.memory_space<vmem>>, vector<1x384x128xbf16>
    %254 = vector.shape_cast %253 : vector<1x384x128xbf16> to vector<384x128xbf16>
    %cst_102 = arith.constant dense<0.000000e+00> : vector<32x128xf32>
    %255 = tpu.matmul %252, %254, %cst_102 {dimension_numbers = #tpu.dot_dimension_numbers<[1], [0], [0], [1], [0, 0, 1, 1], [], []>} : vector<32x384xbf16>, vector<384x128xbf16>, vector<32x128xf32> -> vector<32x128xf32>
    %c15_103 = arith.constant 15 : index
    %c0_104 = arith.constant 0 : index
    %c0_105 = arith.constant 0 : index
    %256 = vector.load %arg4[%c15_103, %c0_104, %c0_105] : memref<17x1x128xf32, #tpu.memory_space<vmem>>, vector<1x1x128xf32>
    %257 = vector.shape_cast %256 : vector<1x1x128xf32> to vector<1x128xf32>
    %258 = vector.broadcast %257 : vector<1x128xf32> to vector<32x128xf32>
    %259 = arith.addf %255, %258 : vector<32x128xf32>
    %260 = vector.shape_cast %259 : vector<32x128xf32> to vector<2x16x128xf32>
    %261 = arith.addf %179, %260 : vector<2x16x128xf32>
    %262 = arith.truncf %261 : vector<2x16x128xf32> to vector<2x16x128xbf16>
    %263 = vector.extract_strided_slice %262 {offsets = [0, 0, 0], sizes = [2, 15, 128], strides = [1, 1, 1]} : vector<2x16x128xbf16> to vector<2x15x128xbf16>
    %264 = tpu.concatenate %1, %263 in 1 : vector<2x1x128xbf16>, vector<2x15x128xbf16> -> vector<2x16x128xbf16>
    %265 = vector.extract_strided_slice %262 {offsets = [0, 1, 0], sizes = [2, 15, 128], strides = [1, 1, 1]} : vector<2x16x128xbf16> to vector<2x15x128xbf16>
    %266 = tpu.concatenate %265, %1 in 1 : vector<2x15x128xbf16>, vector<2x1x128xbf16> -> vector<2x16x128xbf16>
    %267 = tpu.concatenate %264, %262, %266 in 2 : vector<2x16x128xbf16>, vector<2x16x128xbf16>, vector<2x16x128xbf16> -> vector<2x16x384xbf16>
    %268 = vector.shape_cast %267 : vector<2x16x384xbf16> to vector<32x384xbf16>
    %c16 = arith.constant 16 : index
    %c0_106 = arith.constant 0 : index
    %c0_107 = arith.constant 0 : index
    %269 = vector.load %arg3[%c16, %c0_106, %c0_107] : memref<17x384x128xbf16, #tpu.memory_space<vmem>>, vector<1x384x128xbf16>
    %270 = vector.shape_cast %269 : vector<1x384x128xbf16> to vector<384x128xbf16>
    %cst_108 = arith.constant dense<0.000000e+00> : vector<32x128xf32>
    %271 = tpu.matmul %268, %270, %cst_108 {dimension_numbers = #tpu.dot_dimension_numbers<[1], [0], [0], [1], [0, 0, 1, 1], [], []>} : vector<32x384xbf16>, vector<384x128xbf16>, vector<32x128xf32> -> vector<32x128xf32>
    %c16_109 = arith.constant 16 : index
    %c0_110 = arith.constant 0 : index
    %c0_111 = arith.constant 0 : index
    %272 = vector.load %arg4[%c16_109, %c0_110, %c0_111] : memref<17x1x128xf32, #tpu.memory_space<vmem>>, vector<1x1x128xf32>
    %273 = vector.shape_cast %272 : vector<1x1x128xf32> to vector<1x128xf32>
    %274 = vector.broadcast %273 : vector<1x128xf32> to vector<32x128xf32>
    %275 = arith.addf %271, %274 : vector<32x128xf32>
    %276 = vector.shape_cast %275 : vector<32x128xf32> to vector<2x16x128xf32>
    %277 = arith.addf %276, %0 : vector<2x16x128xf32>
    %c0_112 = arith.constant 0 : index
    %c0_113 = arith.constant 0 : index
    %c0_114 = arith.constant 0 : index
    %278 = vector.load %arg5[%c0_112, %c0_113, %c0_114] : memref<2x16x128xf32, #tpu.memory_space<vmem>>, vector<2x16x128xf32>
    tpu.vector_store %arg5[%c0_112, %c0_113, %c0_114], %277 {strides = array<i32>} : memref<2x16x128xf32, #tpu.memory_space<vmem>>, vector<2x16x128xf32>,
    return
  }
  func.func @transform_0(%arg0: i32) -> (i32, i32, i32) {
    %c0_i32 = arith.constant 0 : i32
    %c0_i32_0 = arith.constant 0 : i32
    %c0_i32_1 = arith.constant 0 : i32
    return %arg0, %c0_i32, %c0_i32_0 : i32, i32, i32
  }
  func.func @transform_1(%arg0: i32) -> (i32, i32, i32) {
    %c0_i32 = arith.constant 0 : i32
    %c0_i32_0 = arith.constant 0 : i32
    %c0_i32_1 = arith.constant 0 : i32
    return %arg0, %c0_i32, %c0_i32_0 : i32, i32, i32
  }
  func.func @transform_2(%arg0: i32) -> (i32, i32, i32) {
    %c0_i32 = arith.constant 0 : i32
    %c0_i32_0 = arith.constant 0 : i32
    %c0_i32_1 = arith.constant 0 : i32
    %c0_i32_2 = arith.constant 0 : i32
    return %c0_i32, %c0_i32_0, %c0_i32_1 : i32, i32, i32
  }
  func.func @transform_3(%arg0: i32) -> (i32, i32, i32) {
    %c0_i32 = arith.constant 0 : i32
    %c0_i32_0 = arith.constant 0 : i32
    %c0_i32_1 = arith.constant 0 : i32
    %c0_i32_2 = arith.constant 0 : i32
    return %c0_i32, %c0_i32_0, %c0_i32_1 : i32, i32, i32
  }
  func.func @transform_4(%arg0: i32) -> (i32, i32, i32) {
    %c0_i32 = arith.constant 0 : i32
    %c0_i32_0 = arith.constant 0 : i32
    %c0_i32_1 = arith.constant 0 : i32
    return %arg0, %c0_i32, %c0_i32_0 : i32, i32, i32
  }
}

</mosaic_0001>

<llo_original>
// kernel: vdir_forward_packed.1
$region0: #{vdir_forward_packed.1}
  #allocation0 [shape = 'u32[]', space=smem, size = 0x4, offset = 0x4, fixed_abs, tag = 'smem constant byte address 0x4 - core index']
  #allocation1 [shape = 'u32[72,128]{1,0:T(1,128)}', space=vmem, size = 0x9000, scoped, tag = 'internal scratch']
  %s0 = inlined_call_operand.vmem [shape: f32[2,16,128], index: 0, kind: input, shape index: {}]
  %s1 = inlined_call_operand.vmem [shape: f32[2,16,128], index: 1, kind: input, shape index: {}]
  %s2 = inlined_call_operand.vmem [shape: bf16[17,384,128], index: 2, kind: input, shape index: {}]
  %s3 = inlined_call_operand.vmem [shape: f32[17,1,128], index: 3, kind: input, shape index: {}]
  %s4 = inlined_call_operand.vmem [shape: f32[2,16,128], index: 4, kind: output, shape index: {}]
  %s5 = sld [smem:[#allocation0]]
  $region26: #{vdir_forward_packed.1} parent=0
    _
  %s7 = ssub.s32 1, %s5
  %s8 = scalar_select 0, %s7, %s5
  // Predicated region
  $region2: #{vdir_forward_packed.1} parent=0 // pred_check
    _
  $region3: #{vdir_forward_packed.1} parent=0 // pred_check_branch
    %10 = sbr.rel (0) target = $region5
  $region4: #{vdir_forward_packed.1} parent=0 // pred_region
    _
  $region5: #{vdir_forward_packed.1} parent=0 // pred_fallthru
    _
  // Predicated region
  $region6: #{vdir_forward_packed.1} parent=0 // pred_check
    _
  $region7: #{vdir_forward_packed.1} parent=0 // pred_check_branch
    %12 = sbr.rel (0) target = $region9
  $region8: #{vdir_forward_packed.1} parent=0 // pred_region
    _
  $region9: #{vdir_forward_packed.1} parent=0 // pred_fallthru
    _
  // Predicated region
  $region10: #{vdir_forward_packed.1} parent=0 // pred_check
    _
  $region11: #{vdir_forward_packed.1} parent=0 // pred_check_branch
    %14 = sbr.rel (0) target = $region13
  $region12: #{vdir_forward_packed.1} parent=0 // pred_region
    _
  $region13: #{vdir_forward_packed.1} parent=0 // pred_fallthru
    _
  // Predicated region
  $region14: #{vdir_forward_packed.1} parent=0 // pred_check
    _
  $region15: #{vdir_forward_packed.1} parent=0 // pred_check_branch
    %16 = sbr.rel (0) target = $region17
  $region16: #{vdir_forward_packed.1} parent=0 // pred_region
    _
  $region17: #{vdir_forward_packed.1} parent=0 // pred_fallthru
    _
  %v18 = vld [vmem:[%s0] sm:$0xff]
  %v19 = vld [vmem:[%s0 + $0x8] sm:$0xff]
  %v20 = vld [vmem:[%s0 + $0x10] sm:$0xff]
  %v21 = vld [vmem:[%s0 + $0x18] sm:$0xff]
  %v22 = vpack.c.bf16 %v18, %v18
  %v23 = vpack.c.bf16 %v19, %v19
  %v24 = vpack.c.bf16 %v20, %v20
  %v25 = vpack.c.bf16 %v21, %v21
  %v30 = vunpack.c.l.b16 %v22
  %v31 = vunpack.c.l.b16 %v23
  %v32 = vunpack.c.l.b16 %v24
  %v33 = vunpack.c.l.b16 %v25
  %v34 = vpack.c.b16 %v31, %v30
  %v35 = vpack.c.b16 %v33, %v32
  %v37 = vshrl.u32 %v34, 16
  %v39 = vrot.slane %v37, 7
  %v40 = vshll.u32 %v34, 16
  %v42 = vor.u32 %v39, %v40
  %v44 = vshrl.u32 %v35, 16
  %v46 = vrot.slane %v44, 7
  %v47 = vshll.u32 %v35, 16
  %v49 = vor.u32 %v46, %v47
  %vm52 = vcmask 1040384
  %vm53 = vsmask.f32 256
  %vm54 = vmand %vm52, %vm53
  %v55 = vsel %vm54, 0, %v42
  %v56 = vsel %vm54, 0, %v49
  %v57 = vrot.slane %v40, 1
  %v58 = vor.u32 %v37, %v57
  %v59 = vrot.slane %v47, 1
  %v60 = vor.u32 %v44, %v59
  %vm63 = vcmask 1047552
  %vm64 = vsmask.f32 7424
  %vm65 = vmand %vm63, %vm64
  %v66 = vsel %vm65, %v58, 0
  %v67 = vsel %vm65, %v60, 0
  %v70 = vld [vmem:[%s2] sm:$0xf]
  %v71 = vld [vmem:[%s2 + $0x4] sm:$0xf]
  %v72 = vld [vmem:[%s2 + $0x8] sm:$0xf]
  %v73 = vld [vmem:[%s2 + $0xc] sm:$0xf]
  %v74 = vld [vmem:[%s2 + $0x10] sm:$0xf]
  %v75 = vld [vmem:[%s2 + $0x14] sm:$0xf]
  %v76 = vld [vmem:[%s2 + $0x18] sm:$0xf]
  %v77 = vld [vmem:[%s2 + $0x1c] sm:$0xf]
  %v78 = vld [vmem:[%s2 + $0x20] sm:$0xf]
  %v79 = vld [vmem:[%s2 + $0x24] sm:$0xf]
  %v80 = vld [vmem:[%s2 + $0x28] sm:$0xf]
  %v81 = vld [vmem:[%s2 + $0x2c] sm:$0xf]
  %v82 = vld [vmem:[%s2 + $0x30] sm:$0xf]
  %v83 = vld [vmem:[%s2 + $0x34] sm:$0xf]
  %v84 = vld [vmem:[%s2 + $0x38] sm:$0xf]
  %v85 = vld [vmem:[%s2 + $0x3c] sm:$0xf]
  %v86 = vld [vmem:[%s2 + $0x40] sm:$0xf]
  %v87 = vld [vmem:[%s2 + $0x44] sm:$0xf]
  %v88 = vld [vmem:[%s2 + $0x48] sm:$0xf]
  %v89 = vld [vmem:[%s2 + $0x4c] sm:$0xf]
  %v90 = vld [vmem:[%s2 + $0x50] sm:$0xf]
  %v91 = vld [vmem:[%s2 + $0x54] sm:$0xf]
  %v92 = vld [vmem:[%s2 + $0x58] sm:$0xf]
  %v93 = vld [vmem:[%s2 + $0x5c] sm:$0xf]
  %v94 = vld [vmem:[%s2 + $0x60] sm:$0xf]
  %v95 = vld [vmem:[%s2 + $0x64] sm:$0xf]
  %v96 = vld [vmem:[%s2 + $0x68] sm:$0xf]
  %v97 = vld [vmem:[%s2 + $0x6c] sm:$0xf]
  %v98 = vld [vmem:[%s2 + $0x70] sm:$0xf]
  %v99 = vld [vmem:[%s2 + $0x74] sm:$0xf]
  %v100 = vld [vmem:[%s2 + $0x78] sm:$0xf]
  %v101 = vld [vmem:[%s2 + $0x7c] sm:$0xf]
  %v102 = vld [vmem:[%s2 + $0x80] sm:$0xf]
  %v103 = vld [vmem:[%s2 + $0x84] sm:$0xf]
  %v104 = vld [vmem:[%s2 + $0x88] sm:$0xf]
  %v105 = vld [vmem:[%s2 + $0x8c] sm:$0xf]
  %v106 = vld [vmem:[%s2 + $0x90] sm:$0xf]
  %v107 = vld [vmem:[%s2 + $0x94] sm:$0xf]
  %v108 = vld [vmem:[%s2 + $0x98] sm:$0xf]
  %v109 = vld [vmem:[%s2 + $0x9c] sm:$0xf]
  %v110 = vld [vmem:[%s2 + $0xa0] sm:$0xf]
  %v111 = vld [vmem:[%s2 + $0xa4] sm:$0xf]
  %v112 = vld [vmem:[%s2 + $0xa8] sm:$0xf]
  %v113 = vld [vmem:[%s2 + $0xac] sm:$0xf]
  %v114 = vld [vmem:[%s2 + $0xb0] sm:$0xf]
  %v115 = vld [vmem:[%s2 + $0xb4] sm:$0xf]
  %v116 = vld [vmem:[%s2 + $0xb8] sm:$0xf]
  %v117 = vld [vmem:[%s2 + $0xbc] sm:$0xf]
  %v118 = vld [vmem:[%s3] sm:$0x1]
  %v120 = vperm.slane %v118, 0
  %v170 = vunpack.c.l.b16 %v70
  %v171 = vunpack.c.l.b16 %v71
  %v172 = vunpack.c.l.b16 %v72
  %v173 = vunpack.c.l.b16 %v73
  %v174 = vunpack.c.l.b16 %v74
  %v175 = vunpack.c.l.b16 %v75
  %v176 = vunpack.c.l.b16 %v76
  %v177 = vunpack.c.l.b16 %v77
  %v178 = vunpack.c.l.b16 %v78
  %v179 = vunpack.c.l.b16 %v79
  %v180 = vunpack.c.l.b16 %v80
  %v181 = vunpack.c.l.b16 %v81
  %v182 = vunpack.c.l.b16 %v82
  %v183 = vunpack.c.l.b16 %v83
  %v184 = vunpack.c.l.b16 %v84
  %v185 = vunpack.c.l.b16 %v85
  %v186 = vunpack.c.l.b16 %v86
  %v187 = vunpack.c.l.b16 %v87
  %v188 = vunpack.c.l.b16 %v88
  %v189 = vunpack.c.l.b16 %v89
  %v190 = vunpack.c.l.b16 %v90
  %v191 = vunpack.c.l.b16 %v91
  %v192 = vunpack.c.l.b16 %v92
  %v193 = vunpack.c.l.b16 %v93
  %v194 = vunpack.c.l.b16 %v94
  %v195 = vunpack.c.l.b16 %v95
  %v196 = vunpack.c.l.b16 %v96
  %v197 = vunpack.c.l.b16 %v97
  %v198 = vunpack.c.l.b16 %v98
  %v199 = vunpack.c.l.b16 %v99
  %v200 = vunpack.c.l.b16 %v100
  %v201 = vunpack.c.l.b16 %v101
  %v202 = vunpack.c.l.b16 %v102
  %v203 = vunpack.c.l.b16 %v103
  %v204 = vunpack.c.l.b16 %v104
  %v205 = vunpack.c.l.b16 %v105
  %v206 = vunpack.c.l.b16 %v106
  %v207 = vunpack.c.l.b16 %v107
  %v208 = vunpack.c.l.b16 %v108
  %v209 = vunpack.c.l.b16 %v109
  %v210 = vunpack.c.l.b16 %v110
  %v211 = vunpack.c.l.b16 %v111
  %v212 = vunpack.c.l.b16 %v112
  %v213 = vunpack.c.l.b16 %v113
  %v214 = vunpack.c.l.b16 %v114
  %v215 = vunpack.c.l.b16 %v115
  %v216 = vunpack.c.l.b16 %v116
  %v217 = vunpack.c.l.b16 %v117
  %v218 = vpack.c.b16 %v171, %v170
  %v219 = vpack.c.b16 %v173, %v172
  %v220 = vpack.c.b16 %v175, %v174
  %v221 = vpack.c.b16 %v177, %v176
  %v222 = vpack.c.b16 %v179, %v178
  %v223 = vpack.c.b16 %v181, %v180
  %v224 = vpack.c.b16 %v183, %v182
  %v225 = vpack.c.b16 %v185, %v184
  %v226 = vpack.c.b16 %v187, %v186
  %v227 = vpack.c.b16 %v189, %v188
  %v228 = vpack.c.b16 %v191, %v190
  %v229 = vpack.c.b16 %v193, %v192
  %v230 = vpack.c.b16 %v195, %v194
  %v231 = vpack.c.b16 %v197, %v196
  %v232 = vpack.c.b16 %v199, %v198
  %v233 = vpack.c.b16 %v201, %v200
  %v234 = vpack.c.b16 %v203, %v202
  %v235 = vpack.c.b16 %v205, %v204
  %v236 = vpack.c.b16 %v207, %v206
  %v237 = vpack.c.b16 %v209, %v208
  %v238 = vpack.c.b16 %v211, %v210
  %v239 = vpack.c.b16 %v213, %v212
  %v240 = vpack.c.b16 %v215, %v214
  %v241 = vpack.c.b16 %v217, %v216
  %266 = vmatpush.bf16.msra.mxu0 %v225
  %267 = vmatpush.bf16.msra.mxu0 %v224
  %268 = vmatpush.bf16.msra.mxu0 %v223
  %269 = vmatpush.bf16.msra.mxu0 %v222
  %270 = vmatpush.bf16.msra.mxu0 %v221
  %271 = vmatpush.bf16.msra.mxu0 %v220
  %272 = vmatpush.bf16.msra.mxu0 %v219
  %273 = vmatpush.bf16.msra.mxu0 %v218
  %274 = vmatmul.bf16.gmra.mxu0 %v55
  %v275 = vpop.f32.mrf.mxu0
  %v276 = vadd.f32 %v120, %v275
  %v277 = vpop.f32.mrf.mxu0
  %v278 = vadd.f32 %v120, %v277
  %279 = vmatmul.bf16.gmra.mxu0 %v56
  %v280 = vpop.f32.mrf.mxu0
  %v281 = vadd.f32 %v120, %v280
  %v282 = vpop.f32.mrf.mxu0
  %v283 = vadd.f32 %v120, %v282
  %284 = vdwg.mxu0
  %285 = vmatpush.bf16.msra.mxu0 %v233
  %286 = vmatpush.bf16.msra.mxu0 %v232
  %287 = vmatpush.bf16.msra.mxu0 %v231
  %288 = vmatpush.bf16.msra.mxu0 %v230
  %289 = vmatpush.bf16.msra.mxu0 %v229
  %290 = vmatpush.bf16.msra.mxu0 %v228
  %291 = vmatpush.bf16.msra.mxu0 %v227
  %292 = vmatpush.bf16.msra.mxu0 %v226
  %293 = vmatmul.bf16.gmra.mxu0 %v34
  %v294 = vpop.f32.mrf.mxu0
  %v295 = vadd.f32 %v276, %v294
  %v296 = vpop.f32.mrf.mxu0
  %v297 = vadd.f32 %v278, %v296
  %298 = vmatmul.bf16.gmra.mxu0 %v35
  %v299 = vpop.f32.mrf.mxu0
  %v300 = vadd.f32 %v281, %v299
  %v301 = vpop.f32.mrf.mxu0
  %v302 = vadd.f32 %v283, %v301
  %303 = vdwg.mxu0
  %304 = vmatpush.bf16.msra.mxu0 %v241
  %305 = vmatpush.bf16.msra.mxu0 %v240
  %306 = vmatpush.bf16.msra.mxu0 %v239
  %307 = vmatpush.bf16.msra.mxu0 %v238
  %308 = vmatpush.bf16.msra.mxu0 %v237
  %309 = vmatpush.bf16.msra.mxu0 %v236
  %310 = vmatpush.bf16.msra.mxu0 %v235
  %311 = vmatpush.bf16.msra.mxu0 %v234
  %312 = vmatmul.bf16.gmra.mxu0 %v66
  %v313 = vpop.f32.mrf.mxu0
  %v314 = vadd.f32 %v295, %v313
  %v315 = vpop.f32.mrf.mxu0
  %v316 = vadd.f32 %v297, %v315
  %317 = vmatmul.bf16.gmra.mxu0 %v67
  %v318 = vpop.f32.mrf.mxu0
  %v319 = vadd.f32 %v300, %v318
  %v320 = vpop.f32.mrf.mxu0
  %v321 = vadd.f32 %v302, %v320
  %322 = vdwg.mxu0
  %v323 = vmax.f32 %v314, 0.0
  %v324 = vmax.f32 %v316, 0.0
  %v325 = vmax.f32 %v319, 0.0
  %v326 = vmax.f32 %v321, 0.0
  %v327 = vpack.c.bf16 %v323, %v323
  %v328 = vpack.c.bf16 %v324, %v324
  %v329 = vpack.c.bf16 %v325, %v325
  %v330 = vpack.c.bf16 %v326, %v326
  %v335 = vunpack.c.l.b16 %v327
  %v336 = vunpack.c.l.b16 %v328
  %v337 = vunpack.c.l.b16 %v329
  %v338 = vunpack.c.l.b16 %v330
  %v339 = vpack.c.b16 %v336, %v335
  %v340 = vpack.c.b16 %v338, %v337
  %v342 = vshrl.u32 %v339, 16
  %v344 = vrot.slane %v342, 7
  %v345 = vshll.u32 %v339, 16
  %v347 = vor.u32 %v344, %v345
  %v349 = vshrl.u32 %v340, 16
  %v351 = vrot.slane %v349, 7
  %v352 = vshll.u32 %v340, 16
  %v354 = vor.u32 %v351, %v352
  %v357 = vsel %vm54, 0, %v347
  %v358 = vsel %vm54, 0, %v354
  %v359 = vrot.slane %v345, 1
  %v360 = vor.u32 %v342, %v359
  %v361 = vrot.slane %v352, 1
  %v362 = vor.u32 %v349, %v361
  %v365 = vsel %vm65, %v360, 0
  %v366 = vsel %vm65, %v362, 0
  %s369 = scalar_lea.vmem %s2, 192
  %v370 = vld [vmem:[%s369] sm:$0xf]
  %v371 = vld [vmem:[%s369 + $0x4] sm:$0xf]
  %v372 = vld [vmem:[%s369 + $0x8] sm:$0xf]
  %v373 = vld [vmem:[%s369 + $0xc] sm:$0xf]
  %v374 = vld [vmem:[%s369 + $0x10] sm:$0xf]
  %v375 = vld [vmem:[%s369 + $0x14] sm:$0xf]
  %v376 = vld [vmem:[%s369 + $0x18] sm:$0xf]
  %v377 = vld [vmem:[%s369 + $0x1c] sm:$0xf]
  %v378 = vld [vmem:[%s369 + $0x20] sm:$0xf]
  %v379 = vld [vmem:[%s369 + $0x24] sm:$0xf]
  %v380 = vld [vmem:[%s369 + $0x28] sm:$0xf]
  %v381 = vld [vmem:[%s369 + $0x2c] sm:$0xf]
  %v382 = vld [vmem:[%s369 + $0x30] sm:$0xf]
  %v383 = vld [vmem:[%s369 + $0x34] sm:$0xf]
  %v384 = vld [vmem:[%s369 + $0x38] sm:$0xf]
  %v385 = vld [vmem:[%s369 + $0x3c] sm:$0xf]
  %v386 = vld [vmem:[%s369 + $0x40] sm:$0xf]
  %v387 = vld [vmem:[%s369 + $0x44] sm:$0xf]
  %v388 = vld [vmem:[%s369 + $0x48] sm:$0xf]
  %v389 = vld [vmem:[%s369 + $0x4c] sm:$0xf]
  %v390 = vld [vmem:[%s369 + $0x50] sm:$0xf]
  %v391 = vld [vmem:[%s369 + $0x54] sm:$0xf]
  %v392 = vld [vmem:[%s369 + $0x58] sm:$0xf]
  %v393 = vld [vmem:[%s369 + $0x5c] sm:$0xf]
  %v394 = vld [vmem:[%s369 + $0x60] sm:$0xf]
  %v395 = vld [vmem:[%s369 + $0x64] sm:$0xf]
  %v396 = vld [vmem:[%s369 + $0x68] sm:$0xf]
  %v397 = vld [vmem:[%s369 + $0x6c] sm:$0xf]
  %v398 = vld [vmem:[%s369 + $0x70] sm:$0xf]
  %v399 = vld [vmem:[%s369 + $0x74] sm:$0xf]
  %v400 = vld [vmem:[%s369 + $0x78] sm:$0xf]
  %v401 = vld [vmem:[%s369 + $0x7c] sm:$0xf]
  %v402 = vld [vmem:[%s369 + $0x80] sm:$0xf]
  %v403 = vld [vmem:[%s369 + $0x84] sm:$0xf]
  %v404 = vld [vmem:[%s369 + $0x88] sm:$0xf]
  %v405 = vld [vmem:[%s369 + $0x8c] sm:$0xf]
  %v406 = vld [vmem:[%s369 + $0x90] sm:$0xf]
  %v407 = vld [vmem:[%s369 + $0x94] sm:$0xf]
  %v408 = vld [vmem:[%s369 + $0x98] sm:$0xf]
  %v409 = vld [vmem:[%s369 + $0x9c] sm:$0xf]
  %v410 = vld [vmem:[%s369 + $0xa0] sm:$0xf]
  %v411 = vld [vmem:[%s369 + $0xa4] sm:$0xf]
  %v412 = vld [vmem:[%s369 + $0xa8] sm:$0xf]
  %v413 = vld [vmem:[%s369 + $0xac] sm:$0xf]
  %v414 = vld [vmem:[%s369 + $0xb0] sm:$0xf]
  %v415 = vld [vmem:[%s369 + $0xb4] sm:$0xf]
  %v416 = vld [vmem:[%s369 + $0xb8] sm:$0xf]
  %v417 = vld [vmem:[%s369 + $0xbc] sm:$0xf]
  %s418 = scalar_lea.vmem %s3, 1
  %v419 = vld [vmem:[%s418] sm:$0x1]
  %v421 = vperm.slane %v419, 0
  %v471 = vunpack.c.l.b16 %v370
  %v472 = vunpack.c.l.b16 %v371
  %v473 = vunpack.c.l.b16 %v372
  %v474 = vunpack.c.l.b16 %v373
  %v475 = vunpack.c.l.b16 %v374
  %v476 = vunpack.c.l.b16 %v375
  %v477 = vunpack.c.l.b16 %v376
  %v478 = vunpack.c.l.b16 %v377
  %v479 = vunpack.c.l.b16 %v378
  %v480 = vunpack.c.l.b16 %v379
  %v481 = vunpack.c.l.b16 %v380
  %v482 = vunpack.c.l.b16 %v381
  %v483 = vunpack.c.l.b16 %v382
  %v484 = vunpack.c.l.b16 %v383
  %v485 = vunpack.c.l.b16 %v384
  %v486 = vunpack.c.l.b16 %v385
  %v487 = vunpack.c.l.b16 %v386
  %v488 = vunpack.c.l.b16 %v387
  %v489 = vunpack.c.l.b16 %v388
  %v490 = vunpack.c.l.b16 %v389
  %v491 = vunpack.c.l.b16 %v390
  %v492 = vunpack.c.l.b16 %v391
  %v493 = vunpack.c.l.b16 %v392
  %v494 = vunpack.c.l.b16 %v393
  %v495 = vunpack.c.l.b16 %v394
  %v496 = vunpack.c.l.b16 %v395
  %v497 = vunpack.c.l.b16 %v396
  %v498 = vunpack.c.l.b16 %v397
  %v499 = vunpack.c.l.b16 %v398
  %v500 = vunpack.c.l.b16 %v399
  %v501 = vunpack.c.l.b16 %v400
  %v502 = vunpack.c.l.b16 %v401
  %v503 = vunpack.c.l.b16 %v402
  %v504 = vunpack.c.l.b16 %v403
  %v505 = vunpack.c.l.b16 %v404
  %v506 = vunpack.c.l.b16 %v405
  %v507 = vunpack.c.l.b16 %v406
  %v508 = vunpack.c.l.b16 %v407
  %v509 = vunpack.c.l.b16 %v408
  %v510 = vunpack.c.l.b16 %v409
  %v511 = vunpack.c.l.b16 %v410
  %v512 = vunpack.c.l.b16 %v411
  %v513 = vunpack.c.l.b16 %v412
  %v514 = vunpack.c.l.b16 %v413
  %v515 = vunpack.c.l.b16 %v414
  %v516 = vunpack.c.l.b16 %v415
  %v517 = vunpack.c.l.b16 %v416
  %v518 = vunpack.c.l.b16 %v417
  %v519 = vpack.c.b16 %v472, %v471
  %v520 = vpack.c.b16 %v474, %v473
  %v521 = vpack.c.b16 %v476, %v475
  %v522 = vpack.c.b16 %v478, %v477
  %v523 = vpack.c.b16 %v480, %v479
  %v524 = vpack.c.b16 %v482, %v481
  %v525 = vpack.c.b16 %v484, %v483
  %v526 = vpack.c.b16 %v486, %v485
  %v527 = vpack.c.b16 %v488, %v487
  %v528 = vpack.c.b16 %v490, %v489
  %v529 = vpack.c.b16 %v492, %v491
  %v530 = vpack.c.b16 %v494, %v493
  %v531 = vpack.c.b16 %v496, %v495
  %v532 = vpack.c.b16 %v498, %v497
  %v533 = vpack.c.b16 %v500, %v499
  %v534 = vpack.c.b16 %v502, %v501
  %v535 = vpack.c.b16 %v504, %v503
  %v536 = vpack.c.b16 %v506, %v505
  %v537 = vpack.c.b16 %v508, %v507
  %v538 = vpack.c.b16 %v510, %v509
  %v539 = vpack.c.b16 %v512, %v511
  %v540 = vpack.c.b16 %v514, %v513
  %v541 = vpack.c.b16 %v516, %v515
  %v542 = vpack.c.b16 %v518, %v517
  %567 = vmatpush.bf16.msra.mxu0 %v526
  %568 = vmatpush.bf16.msra.mxu0 %v525
  %569 = vmatpush.bf16.msra.mxu0 %v524
  %570 = vmatpush.bf16.msra.mxu0 %v523
  %571 = vmatpush.bf16.msra.mxu0 %v522
  %572 = vmatpush.bf16.msra.mxu0 %v521
  %573 = vmatpush.bf16.msra.mxu0 %v520
  %574 = vmatpush.bf16.msra.mxu0 %v519
  %575 = vmatmul.bf16.gmra.mxu0 %v357
  %v576 = vpop.f32.mrf.mxu0
  %v577 = vadd.f32 %v421, %v576
  %v578 = vpop.f32.mrf.mxu0
  %v579 = vadd.f32 %v421, %v578
  %580 = vmatmul.bf16.gmra.mxu0 %v358
  %v581 = vpop.f32.mrf.mxu0
  %v582 = vadd.f32 %v421, %v581
  %v583 = vpop.f32.mrf.mxu0
  %v584 = vadd.f32 %v421, %v583
  %585 = vdwg.mxu0
  %586 = vmatpush.bf16.msra.mxu0 %v534
  %587 = vmatpush.bf16.msra.mxu0 %v533
  %588 = vmatpush.bf16.msra.mxu0 %v532
  %589 = vmatpush.bf16.msra.mxu0 %v531
  %590 = vmatpush.bf16.msra.mxu0 %v530
  %591 = vmatpush.bf16.msra.mxu0 %v529
  %592 = vmatpush.bf16.msra.mxu0 %v528
  %593 = vmatpush.bf16.msra.mxu0 %v527
  %594 = vmatmul.bf16.gmra.mxu0 %v339
  %v595 = vpop.f32.mrf.mxu0
  %v596 = vadd.f32 %v577, %v595
  %v597 = vpop.f32.mrf.mxu0
  %v598 = vadd.f32 %v579, %v597
  %599 = vmatmul.bf16.gmra.mxu0 %v340
  %v600 = vpop.f32.mrf.mxu0
  %v601 = vadd.f32 %v582, %v600
  %v602 = vpop.f32.mrf.mxu0
  %v603 = vadd.f32 %v584, %v602
  %604 = vdwg.mxu0
  %605 = vmatpush.bf16.msra.mxu0 %v542
  %606 = vmatpush.bf16.msra.mxu0 %v541
  %607 = vmatpush.bf16.msra.mxu0 %v540
  %608 = vmatpush.bf16.msra.mxu0 %v539
  %609 = vmatpush.bf16.msra.mxu0 %v538
  %610 = vmatpush.bf16.msra.mxu0 %v537
  %611 = vmatpush.bf16.msra.mxu0 %v536
  %612 = vmatpush.bf16.msra.mxu0 %v535
  %613 = vmatmul.bf16.gmra.mxu0 %v365
  %v614 = vpop.f32.mrf.mxu0
  %v615 = vadd.f32 %v596, %v614
  %v616 = vpop.f32.mrf.mxu0
  %v617 = vadd.f32 %v598, %v616
  %618 = vmatmul.bf16.gmra.mxu0 %v366
  %v619 = vpop.f32.mrf.mxu0
  %v620 = vadd.f32 %v601, %v619
  %v621 = vpop.f32.mrf.mxu0
  %v622 = vadd.f32 %v603, %v621
  %623 = vdwg.mxu0
  %v624 = vmax.f32 %v615, 0.0
  %v625 = vmax.f32 %v617, 0.0
  %v626 = vmax.f32 %v620, 0.0
  %v627 = vmax.f32 %v622, 0.0
  %v628 = vpack.c.bf16 %v624, %v624
  %v629 = vpack.c.bf16 %v625, %v625
  %v630 = vpack.c.bf16 %v626, %v626
  %v631 = vpack.c.bf16 %v627, %v627
  %v636 = vunpack.c.l.b16 %v628
  %v637 = vunpack.c.l.b16 %v629
  %v638 = vunpack.c.l.b16 %v630
  %v639 = vunpack.c.l.b16 %v631
  %v640 = vpack.c.b16 %v637, %v636
  %v641 = vpack.c.b16 %v639, %v638
  %v643 = vshrl.u32 %v640, 16
  %v645 = vrot.slane %v643, 7
  %v646 = vshll.u32 %v640, 16
  %v648 = vor.u32 %v645, %v646
  %v650 = vshrl.u32 %v641, 16
  %v652 = vrot.slane %v650, 7
  %v653 = vshll.u32 %v641, 16
  %v655 = vor.u32 %v652, %v653
  %v658 = vsel %vm54, 0, %v648
  %v659 = vsel %vm54, 0, %v655
  %v660 = vrot.slane %v646, 1
  %v661 = vor.u32 %v643, %v660
  %v662 = vrot.slane %v653, 1
  %v663 = vor.u32 %v650, %v662
  %v666 = vsel %vm65, %v661, 0
  %v667 = vsel %vm65, %v663, 0
  %s670 = scalar_lea.vmem %s2, 384
  %v671 = vld [vmem:[%s670] sm:$0xf]
  %v672 = vld [vmem:[%s670 + $0x4] sm:$0xf]
  %v673 = vld [vmem:[%s670 + $0x8] sm:$0xf]
  %v674 = vld [vmem:[%s670 + $0xc] sm:$0xf]
  %v675 = vld [vmem:[%s670 + $0x10] sm:$0xf]
  %v676 = vld [vmem:[%s670 + $0x14] sm:$0xf]
  %v677 = vld [vmem:[%s670 + $0x18] sm:$0xf]
  %v678 = vld [vmem:[%s670 + $0x1c] sm:$0xf]
  %v679 = vld [vmem:[%s670 + $0x20] sm:$0xf]
  %v680 = vld [vmem:[%s670 + $0x24] sm:$0xf]
  %v681 = vld [vmem:[%s670 + $0x28] sm:$0xf]
  %v682 = vld [vmem:[%s670 + $0x2c] sm:$0xf]
  %v683 = vld [vmem:[%s670 + $0x30] sm:$0xf]
  %v684 = vld [vmem:[%s670 + $0x34] sm:$0xf]
  %v685 = vld [vmem:[%s670 + $0x38] sm:$0xf]
  %v686 = vld [vmem:[%s670 + $0x3c] sm:$0xf]
  %v687 = vld [vmem:[%s670 + $0x40] sm:$0xf]
  %v688 = vld [vmem:[%s670 + $0x44] sm:$0xf]
  %v689 = vld [vmem:[%s670 + $0x48] sm:$0xf]
  %v690 = vld [vmem:[%s670 + $0x4c] sm:$0xf]
  %v691 = vld [vmem:[%s670 + $0x50] sm:$0xf]
  %v692 = vld [vmem:[%s670 + $0x54] sm:$0xf]
  %v693 = vld [vmem:[%s670 + $0x58] sm:$0xf]
  %v694 = vld [vmem:[%s670 + $0x5c] sm:$0xf]
  %v695 = vld [vmem:[%s670 + $0x60] sm:$0xf]
  %v696 = vld [vmem:[%s670 + $0x64] sm:$0xf]
  %v697 = vld [vmem:[%s670 + $0x68] sm:$0xf]
  %v698 = vld [vmem:[%s670 + $0x6c] sm:$0xf]
  %v699 = vld [vmem:[%s670 + $0x70] sm:$0xf]
  %v700 = vld [vmem:[%s670 + $0x74] sm:$0xf]
  %v701 = vld [vmem:[%s670 + $0x78] sm:$0xf]
  %v702 = vld [vmem:[%s670 + $0x7c] sm:$0xf]
  %v703 = vld [vmem:[%s670 + $0x80] sm:$0xf]
  %v704 = vld [vmem:[%s670 + $0x84] sm:$0xf]
  %v705 = vld [vmem:[%s670 + $0x88] sm:$0xf]
  %v706 = vld [vmem:[%s670 + $0x8c] sm:$0xf]
  %v707 = vld [vmem:[%s670 + $0x90] sm:$0xf]
  %v708 = vld [vmem:[%s670 + $0x94] sm:$0xf]
  %v709 = vld [vmem:[%s670 + $0x98] sm:$0xf]
  %v710 = vld [vmem:[%s670 + $0x9c] sm:$0xf]
  %v711 = vld [vmem:[%s670 + $0xa0] sm:$0xf]
  %v712 = vld [vmem:[%s670 + $0xa4] sm:$0xf]
  %v713 = vld [vmem:[%s670 + $0xa8] sm:$0xf]
  %v714 = vld [vmem:[%s670 + $0xac] sm:$0xf]
  %v715 = vld [vmem:[%s670 + $0xb0] sm:$0xf]
  %v716 = vld [vmem:[%s670 + $0xb4] sm:$0xf]
  %v717 = vld [vmem:[%s670 + $0xb8] sm:$0xf]
  %v718 = vld [vmem:[%s670 + $0xbc] sm:$0xf]
  %s719 = scalar_lea.vmem %s3, 2
  %v720 = vld [vmem:[%s719] sm:$0x1]
  %v722 = vperm.slane %v720, 0
  %v772 = vunpack.c.l.b16 %v671
  %v773 = vunpack.c.l.b16 %v672
  %v774 = vunpack.c.l.b16 %v673
  %v775 = vunpack.c.l.b16 %v674
  %v776 = vunpack.c.l.b16 %v675
  %v777 = vunpack.c.l.b16 %v676
  %v778 = vunpack.c.l.b16 %v677
  %v779 = vunpack.c.l.b16 %v678
  %v780 = vunpack.c.l.b16 %v679
  %v781 = vunpack.c.l.b16 %v680
  %v782 = vunpack.c.l.b16 %v681
  %v783 = vunpack.c.l.b16 %v682
  %v784 = vunpack.c.l.b16 %v683
  %v785 = vunpack.c.l.b16 %v684
  %v786 = vunpack.c.l.b16 %v685
  %v787 = vunpack.c.l.b16 %v686
  %v788 = vunpack.c.l.b16 %v687
  %v789 = vunpack.c.l.b16 %v688
  %v790 = vunpack.c.l.b16 %v689
  %v791 = vunpack.c.l.b16 %v690
  %v792 = vunpack.c.l.b16 %v691
  %v793 = vunpack.c.l.b16 %v692
  %v794 = vunpack.c.l.b16 %v693
  %v795 = vunpack.c.l.b16 %v694
  %v796 = vunpack.c.l.b16 %v695
  %v797 = vunpack.c.l.b16 %v696
  %v798 = vunpack.c.l.b16 %v697
  %v799 = vunpack.c.l.b16 %v698
  %v800 = vunpack.c.l.b16 %v699
  %v801 = vunpack.c.l.b16 %v700
  %v802 = vunpack.c.l.b16 %v701
  %v803 = vunpack.c.l.b16 %v702
  %v804 = vunpack.c.l.b16 %v703
  %v805 = vunpack.c.l.b16 %v704
  %v806 = vunpack.c.l.b16 %v705
  %v807 = vunpack.c.l.b16 %v706
  %v808 = vunpack.c.l.b16 %v707
  %v809 = vunpack.c.l.b16 %v708
  %v810 = vunpack.c.l.b16 %v709
  %v811 = vunpack.c.l.b16 %v710
  %v812 = vunpack.c.l.b16 %v711
  %v813 = vunpack.c.l.b16 %v712
  %v814 = vunpack.c.l.b16 %v713
  %v815 = vunpack.c.l.b16 %v714
  %v816 = vunpack.c.l.b16 %v715
  %v817 = vunpack.c.l.b16 %v716
  %v818 = vunpack.c.l.b16 %v717
  %v819 = vunpack.c.l.b16 %v718
  %v820 = vpack.c.b16 %v773, %v772
  %v821 = vpack.c.b16 %v775, %v774
  %v822 = vpack.c.b16 %v777, %v776
  %v823 = vpack.c.b16 %v779, %v778
  %v824 = vpack.c.b16 %v781, %v780
  %v825 = vpack.c.b16 %v783, %v782
  %v826 = vpack.c.b16 %v785, %v784
  %v827 = vpack.c.b16 %v787, %v786
  %v828 = vpack.c.b16 %v789, %v788
  %v829 = vpack.c.b16 %v791, %v790
  %v830 = vpack.c.b16 %v793, %v792
  %v831 = vpack.c.b16 %v795, %v794
  %v832 = vpack.c.b16 %v797, %v796
  %v833 = vpack.c.b16 %v799, %v798
  %v834 = vpack.c.b16 %v801, %v800
  %v835 = vpack.c.b16 %v803, %v802
  %v836 = vpack.c.b16 %v805, %v804
  %v837 = vpack.c.b16 %v807, %v806
  %v838 = vpack.c.b16 %v809, %v808
  %v839 = vpack.c.b16 %v811, %v810
  %v840 = vpack.c.b16 %v813, %v812
  %v841 = vpack.c.b16 %v815, %v814
  %v842 = vpack.c.b16 %v817, %v816
  %v843 = vpack.c.b16 %v819, %v818
  %868 = vmatpush.bf16.msra.mxu0 %v827
  %869 = vmatpush.bf16.msra.mxu0 %v826
  %870 = vmatpush.bf16.msra.mxu0 %v825
  %871 = vmatpush.bf16.msra.mxu0 %v824
  %872 = vmatpush.bf16.msra.mxu0 %v823
  %873 = vmatpush.bf16.msra.mxu0 %v822
  %874 = vmatpush.bf16.msra.mxu0 %v821
  %875 = vmatpush.bf16.msra.mxu0 %v820
  %876 = vmatmul.bf16.gmra.mxu0 %v658
  %v877 = vpop.f32.mrf.mxu0
  %v878 = vadd.f32 %v722, %v877
  %v879 = vpop.f32.mrf.mxu0
  %v880 = vadd.f32 %v722, %v879
  %881 = vmatmul.bf16.gmra.mxu0 %v659
  %v882 = vpop.f32.mrf.mxu0
  %v883 = vadd.f32 %v722, %v882
  %v884 = vpop.f32.mrf.mxu0
  %v885 = vadd.f32 %v722, %v884
  %886 = vdwg.mxu0
  %887 = vmatpush.bf16.msra.mxu0 %v835
  %888 = vmatpush.bf16.msra.mxu0 %v834
  %889 = vmatpush.bf16.msra.mxu0 %v833
  %890 = vmatpush.bf16.msra.mxu0 %v832
  %891 = vmatpush.bf16.msra.mxu0 %v831
  %892 = vmatpush.bf16.msra.mxu0 %v830
  %893 = vmatpush.bf16.msra.mxu0 %v829
  %894 = vmatpush.bf16.msra.mxu0 %v828
  %895 = vmatmul.bf16.gmra.mxu0 %v640
  %v896 = vpop.f32.mrf.mxu0
  %v897 = vadd.f32 %v878, %v896
  %v898 = vpop.f32.mrf.mxu0
  %v899 = vadd.f32 %v880, %v898
  %900 = vmatmul.bf16.gmra.mxu0 %v641
  %v901 = vpop.f32.mrf.mxu0
  %v902 = vadd.f32 %v883, %v901
  %v903 = vpop.f32.mrf.mxu0
  %v904 = vadd.f32 %v885, %v903
  %905 = vdwg.mxu0
  %906 = vmatpush.bf16.msra.mxu0 %v843
  %907 = vmatpush.bf16.msra.mxu0 %v842
  %908 = vmatpush.bf16.msra.mxu0 %v841
  %909 = vmatpush.bf16.msra.mxu0 %v840
  %910 = vmatpush.bf16.msra.mxu0 %v839
  %911 = vmatpush.bf16.msra.mxu0 %v838
  %912 = vmatpush.bf16.msra.mxu0 %v837
  %913 = vmatpush.bf16.msra.mxu0 %v836
  %914 = vmatmul.bf16.gmra.mxu0 %v666
  %v915 = vpop.f32.mrf.mxu0
  %v916 = vadd.f32 %v897, %v915
  %v917 = vpop.f32.mrf.mxu0
  %v918 = vadd.f32 %v899, %v917
  %919 = vmatmul.bf16.gmra.mxu0 %v667
  %v920 = vpop.f32.mrf.mxu0
  %v921 = vadd.f32 %v902, %v920
  %v922 = vpop.f32.mrf.mxu0
  %v923 = vadd.f32 %v904, %v922
  %924 = vdwg.mxu0
  %s925 = scalar_lea.vmem %s2, 576
  %v926 = vld [vmem:[%s925] sm:$0xf]
  %v927 = vld [vmem:[%s925 + $0x4] sm:$0xf]
  %v928 = vld [vmem:[%s925 + $0x8] sm:$0xf]
  %v929 = vld [vmem:[%s925 + $0xc] sm:$0xf]
  %v930 = vld [vmem:[%s925 + $0x10] sm:$0xf]
  %v931 = vld [vmem:[%s925 + $0x14] sm:$0xf]
  %v932 = vld [vmem:[%s925 + $0x18] sm:$0xf]
  %v933 = vld [vmem:[%s925 + $0x1c] sm:$0xf]
  %v934 = vld [vmem:[%s925 + $0x20] sm:$0xf]
  %v935 = vld [vmem:[%s925 + $0x24] sm:$0xf]
  %v936 = vld [vmem:[%s925 + $0x28] sm:$0xf]
  %v937 = vld [vmem:[%s925 + $0x2c] sm:$0xf]
  %v938 = vld [vmem:[%s925 + $0x30] sm:$0xf]
  %v939 = vld [vmem:[%s925 + $0x34] sm:$0xf]
  %v940 = vld [vmem:[%s925 + $0x38] sm:$0xf]
  %v941 = vld [vmem:[%s925 + $0x3c] sm:$0xf]
  %v942 = vld [vmem:[%s925 + $0x40] sm:$0xf]
  %v943 = vld [vmem:[%s925 + $0x44] sm:$0xf]
  %v944 = vld [vmem:[%s925 + $0x48] sm:$0xf]
  %v945 = vld [vmem:[%s925 + $0x4c] sm:$0xf]
  %v946 = vld [vmem:[%s925 + $0x50] sm:$0xf]
  %v947 = vld [vmem:[%s925 + $0x54] sm:$0xf]
  %v948 = vld [vmem:[%s925 + $0x58] sm:$0xf]
  %v949 = vld [vmem:[%s925 + $0x5c] sm:$0xf]
  %v950 = vld [vmem:[%s925 + $0x60] sm:$0xf]
  %v951 = vld [vmem:[%s925 + $0x64] sm:$0xf]
  %v952 = vld [vmem:[%s925 + $0x68] sm:$0xf]
  %v953 = vld [vmem:[%s925 + $0x6c] sm:$0xf]
  %v954 = vld [vmem:[%s925 + $0x70] sm:$0xf]
  %v955 = vld [vmem:[%s925 + $0x74] sm:$0xf]
  %v956 = vld [vmem:[%s925 + $0x78] sm:$0xf]
  %v957 = vld [vmem:[%s925 + $0x7c] sm:$0xf]
  %v958 = vld [vmem:[%s925 + $0x80] sm:$0xf]
  %v959 = vld [vmem:[%s925 + $0x84] sm:$0xf]
  %v960 = vld [vmem:[%s925 + $0x88] sm:$0xf]
  %v961 = vld [vmem:[%s925 + $0x8c] sm:$0xf]
  %v962 = vld [vmem:[%s925 + $0x90] sm:$0xf]
  %v963 = vld [vmem:[%s925 + $0x94] sm:$0xf]
  %v964 = vld [vmem:[%s925 + $0x98] sm:$0xf]
  %v965 = vld [vmem:[%s925 + $0x9c] sm:$0xf]
  %v966 = vld [vmem:[%s925 + $0xa0] sm:$0xf]
  %v967 = vld [vmem:[%s925 + $0xa4] sm:$0xf]
  %v968 = vld [vmem:[%s925 + $0xa8] sm:$0xf]
  %v969 = vld [vmem:[%s925 + $0xac] sm:$0xf]
  %v970 = vld [vmem:[%s925 + $0xb0] sm:$0xf]
  %v971 = vld [vmem:[%s925 + $0xb4] sm:$0xf]
  %v972 = vld [vmem:[%s925 + $0xb8] sm:$0xf]
  %v973 = vld [vmem:[%s925 + $0xbc] sm:$0xf]
  %s974 = scalar_lea.vmem %s3, 3
  %v975 = vld [vmem:[%s974] sm:$0x1]
  %v977 = vperm.slane %v975, 0
  %v1027 = vunpack.c.l.b16 %v926
  %v1028 = vunpack.c.l.b16 %v927
  %v1029 = vunpack.c.l.b16 %v928
  %v1030 = vunpack.c.l.b16 %v929
  %v1031 = vunpack.c.l.b16 %v930
  %v1032 = vunpack.c.l.b16 %v931
  %v1033 = vunpack.c.l.b16 %v932
  %v1034 = vunpack.c.l.b16 %v933
  %v1035 = vunpack.c.l.b16 %v934
  %v1036 = vunpack.c.l.b16 %v935
  %v1037 = vunpack.c.l.b16 %v936
  %v1038 = vunpack.c.l.b16 %v937
  %v1039 = vunpack.c.l.b16 %v938
  %v1040 = vunpack.c.l.b16 %v939
  %v1041 = vunpack.c.l.b16 %v940
  %v1042 = vunpack.c.l.b16 %v941
  %v1043 = vunpack.c.l.b16 %v942
  %v1044 = vunpack.c.l.b16 %v943
  %v1045 = vunpack.c.l.b16 %v944
  %v1046 = vunpack.c.l.b16 %v945
  %v1047 = vunpack.c.l.b16 %v946
  %v1048 = vunpack.c.l.b16 %v947
  %v1049 = vunpack.c.l.b16 %v948
  %v1050 = vunpack.c.l.b16 %v949
  %v1051 = vunpack.c.l.b16 %v950
  %v1052 = vunpack.c.l.b16 %v951
  %v1053 = vunpack.c.l.b16 %v952
  %v1054 = vunpack.c.l.b16 %v953
  %v1055 = vunpack.c.l.b16 %v954
  %v1056 = vunpack.c.l.b16 %v955
  %v1057 = vunpack.c.l.b16 %v956
  %v1058 = vunpack.c.l.b16 %v957
  %v1059 = vunpack.c.l.b16 %v958
  %v1060 = vunpack.c.l.b16 %v959
  %v1061 = vunpack.c.l.b16 %v960
  %v1062 = vunpack.c.l.b16 %v961
  %v1063 = vunpack.c.l.b16 %v962
  %v1064 = vunpack.c.l.b16 %v963
  %v1065 = vunpack.c.l.b16 %v964
  %v1066 = vunpack.c.l.b16 %v965
  %v1067 = vunpack.c.l.b16 %v966
  %v1068 = vunpack.c.l.b16 %v967
  %v1069 = vunpack.c.l.b16 %v968
  %v1070 = vunpack.c.l.b16 %v969
  %v1071 = vunpack.c.l.b16 %v970
  %v1072 = vunpack.c.l.b16 %v971
  %v1073 = vunpack.c.l.b16 %v972
  %v1074 = vunpack.c.l.b16 %v973
  %v1075 = vpack.c.b16 %v1028, %v1027
  %v1076 = vpack.c.b16 %v1030, %v1029
  %v1077 = vpack.c.b16 %v1032, %v1031
  %v1078 = vpack.c.b16 %v1034, %v1033
  %v1079 = vpack.c.b16 %v1036, %v1035
  %v1080 = vpack.c.b16 %v1038, %v1037
  %v1081 = vpack.c.b16 %v1040, %v1039
  %v1082 = vpack.c.b16 %v1042, %v1041
  %v1083 = vpack.c.b16 %v1044, %v1043
  %v1084 = vpack.c.b16 %v1046, %v1045
  %v1085 = vpack.c.b16 %v1048, %v1047
  %v1086 = vpack.c.b16 %v1050, %v1049
  %v1087 = vpack.c.b16 %v1052, %v1051
  %v1088 = vpack.c.b16 %v1054, %v1053
  %v1089 = vpack.c.b16 %v1056, %v1055
  %v1090 = vpack.c.b16 %v1058, %v1057
  %v1091 = vpack.c.b16 %v1060, %v1059
  %v1092 = vpack.c.b16 %v1062, %v1061
  %v1093 = vpack.c.b16 %v1064, %v1063
  %v1094 = vpack.c.b16 %v1066, %v1065
  %v1095 = vpack.c.b16 %v1068, %v1067
  %v1096 = vpack.c.b16 %v1070, %v1069
  %v1097 = vpack.c.b16 %v1072, %v1071
  %v1098 = vpack.c.b16 %v1074, %v1073
  %1123 = vmatpush.bf16.msra.mxu0 %v1082
  %1124 = vmatpush.bf16.msra.mxu0 %v1081
  %1125 = vmatpush.bf16.msra.mxu0 %v1080
  %1126 = vmatpush.bf16.msra.mxu0 %v1079
  %1127 = vmatpush.bf16.msra.mxu0 %v1078
  %1128 = vmatpush.bf16.msra.mxu0 %v1077
  %1129 = vmatpush.bf16.msra.mxu0 %v1076
  %1130 = vmatpush.bf16.msra.mxu0 %v1075
  %1131 = vmatmul.bf16.gmra.mxu0 %v658
  %v1132 = vpop.f32.mrf.mxu0
  %v1133 = vadd.f32 %v977, %v1132
  %v1134 = vpop.f32.mrf.mxu0
  %v1135 = vadd.f32 %v977, %v1134
  %1136 = vmatmul.bf16.gmra.mxu0 %v659
  %v1137 = vpop.f32.mrf.mxu0
  %v1138 = vadd.f32 %v977, %v1137
  %v1139 = vpop.f32.mrf.mxu0
  %v1140 = vadd.f32 %v977, %v1139
  %1141 = vdwg.mxu0
  %1142 = vmatpush.bf16.msra.mxu0 %v1090
  %1143 = vmatpush.bf16.msra.mxu0 %v1089
  %1144 = vmatpush.bf16.msra.mxu0 %v1088
  %1145 = vmatpush.bf16.msra.mxu0 %v1087
  %1146 = vmatpush.bf16.msra.mxu0 %v1086
  %1147 = vmatpush.bf16.msra.mxu0 %v1085
  %1148 = vmatpush.bf16.msra.mxu0 %v1084
  %1149 = vmatpush.bf16.msra.mxu0 %v1083
  %1150 = vmatmul.bf16.gmra.mxu0 %v640
  %v1151 = vpop.f32.mrf.mxu0
  %v1152 = vadd.f32 %v1133, %v1151
  %v1153 = vpop.f32.mrf.mxu0
  %v1154 = vadd.f32 %v1135, %v1153
  %1155 = vmatmul.bf16.gmra.mxu0 %v641
  %v1156 = vpop.f32.mrf.mxu0
  %v1157 = vadd.f32 %v1138, %v1156
  %v1158 = vpop.f32.mrf.mxu0
  %v1159 = vadd.f32 %v1140, %v1158
  %1160 = vdwg.mxu0
  %1161 = vmatpush.bf16.msra.mxu0 %v1098
  %1162 = vmatpush.bf16.msra.mxu0 %v1097
  %1163 = vmatpush.bf16.msra.mxu0 %v1096
  %1164 = vmatpush.bf16.msra.mxu0 %v1095
  %1165 = vmatpush.bf16.msra.mxu0 %v1094
  %1166 = vmatpush.bf16.msra.mxu0 %v1093
  %1167 = vmatpush.bf16.msra.mxu0 %v1092
  %1168 = vmatpush.bf16.msra.mxu0 %v1091
  %1169 = vmatmul.bf16.gmra.mxu0 %v666
  %v1170 = vpop.f32.mrf.mxu0
  %v1171 = vadd.f32 %v1152, %v1170
  %v1172 = vpop.f32.mrf.mxu0
  %v1173 = vadd.f32 %v1154, %v1172
  %1174 = vmatmul.bf16.gmra.mxu0 %v667
  %v1175 = vpop.f32.mrf.mxu0
  %v1176 = vadd.f32 %v1157, %v1175
  %v1177 = vpop.f32.mrf.mxu0
  %v1178 = vadd.f32 %v1159, %v1177
  %1179 = vdwg.mxu0
  %v1180 = vld [vmem:[%s1] sm:$0xff]
  %v1181 = vld [vmem:[%s1 + $0x8] sm:$0xff]
  %v1182 = vld [vmem:[%s1 + $0x10] sm:$0xff]
  %v1183 = vld [vmem:[%s1 + $0x18] sm:$0xff]
  %v1184 = vmul.f32 %v1171, 0.5
  %v1185 = vmul.f32 %v1173, 0.5
  %v1186 = vmul.f32 %v1176, 0.5
  %v1187 = vmul.f32 %v1178, 0.5
  %v1188 = vmul.f32 %v1184, 1.442695
  %v1189 = vpow.pop %v1188
  %v1190 = vmul.f32 %v1185, 1.442695
  %v1191 = vpow.pop %v1190
  %v1192 = vmul.f32 %v1186, 1.442695
  %v1193 = vpow.pop %v1192
  %v1194 = vmul.f32 %v1187, 1.442695
  %v1195 = vpow.pop %v1194
  %v1196 = vmul.f32 %v1180, %v1189
  %v1197 = vmul.f32 %v1181, %v1191
  %v1198 = vmul.f32 %v1182, %v1193
  %v1199 = vmul.f32 %v1183, %v1195
  %v1200 = vadd.f32 %v916, %v1196
  %v1201 = vadd.f32 %v918, %v1197
  %v1202 = vadd.f32 %v921, %v1198
  %v1203 = vadd.f32 %v923, %v1199
  %s1204 = scalar_lea.vmem %s2, 768
  %v1205 = vld [vmem:[%s1204] sm:$0xf]
  %v1206 = vld [vmem:[%s1204 + $0x4] sm:$0xf]
  %v1207 = vld [vmem:[%s1204 + $0x8] sm:$0xf]
  %v1208 = vld [vmem:[%s1204 + $0xc] sm:$0xf]
  %v1209 = vld [vmem:[%s1204 + $0x10] sm:$0xf]
  %v1210 = vld [vmem:[%s1204 + $0x14] sm:$0xf]
  %v1211 = vld [vmem:[%s1204 + $0x18] sm:$0xf]
  %v1212 = vld [vmem:[%s1204 + $0x1c] sm:$0xf]
  %v1213 = vld [vmem:[%s1204 + $0x20] sm:$0xf]
  %v1214 = vld [vmem:[%s1204 + $0x24] sm:$0xf]
  %v1215 = vld [vmem:[%s1204 + $0x28] sm:$0xf]
  %v1216 = vld [vmem:[%s1204 + $0x2c] sm:$0xf]
  %v1217 = vld [vmem:[%s1204 + $0x30] sm:$0xf]
  %v1218 = vld [vmem:[%s1204 + $0x34] sm:$0xf]
  %v1219 = vld [vmem:[%s1204 + $0x38] sm:$0xf]
  %v1220 = vld [vmem:[%s1204 + $0x3c] sm:$0xf]
  %v1221 = vld [vmem:[%s1204 + $0x40] sm:$0xf]
  %v1222 = vld [vmem:[%s1204 + $0x44] sm:$0xf]
  %v1223 = vld [vmem:[%s1204 + $0x48] sm:$0xf]
  %v1224 = vld [vmem:[%s1204 + $0x4c] sm:$0xf]
  %v1225 = vld [vmem:[%s1204 + $0x50] sm:$0xf]
  %v1226 = vld [vmem:[%s1204 + $0x54] sm:$0xf]
  %v1227 = vld [vmem:[%s1204 + $0x58] sm:$0xf]
  %v1228 = vld [vmem:[%s1204 + $0x5c] sm:$0xf]
  %v1229 = vld [vmem:[%s1204 + $0x60] sm:$0xf]
  %v1230 = vld [vmem:[%s1204 + $0x64] sm:$0xf]
  %v1231 = vld [vmem:[%s1204 + $0x68] sm:$0xf]
  %v1232 = vld [vmem:[%s1204 + $0x6c] sm:$0xf]
  %v1233 = vld [vmem:[%s1204 + $0x70] sm:$0xf]
  %v1234 = vld [vmem:[%s1204 + $0x74] sm:$0xf]
  %v1235 = vld [vmem:[%s1204 + $0x78] sm:$0xf]
  %v1236 = vld [vmem:[%s1204 + $0x7c] sm:$0xf]
  %v1237 = vld [vmem:[%s1204 + $0x80] sm:$0xf]
  %v1238 = vld [vmem:[%s1204 + $0x84] sm:$0xf]
  %v1239 = vld [vmem:[%s1204 + $0x88] sm:$0xf]
  %v1240 = vld [vmem:[%s1204 + $0x8c] sm:$0xf]
  %v1241 = vld [vmem:[%s1204 + $0x90] sm:$0xf]
  %v1242 = vld [vmem:[%s1204 + $0x94] sm:$0xf]
  %v1243 = vld [vmem:[%s1204 + $0x98] sm:$0xf]
  %v1244 = vld [vmem:[%s1204 + $0x9c] sm:$0xf]
  %v1245 = vld [vmem:[%s1204 + $0xa0] sm:$0xf]
  %v1246 = vld [vmem:[%s1204 + $0xa4] sm:$0xf]
  %v1247 = vld [vmem:[%s1204 + $0xa8] sm:$0xf]
  %v1248 = vld [vmem:[%s1204 + $0xac] sm:$0xf]
  %v1249 = vld [vmem:[%s1204 + $0xb0] sm:$0xf]
  %v1250 = vld [vmem:[%s1204 + $0xb4] sm:$0xf]
  %v1251 = vld [vmem:[%s1204 + $0xb8] sm:$0xf]
  %v1252 = vld [vmem:[%s1204 + $0xbc] sm:$0xf]
  %v1253 = vpack.c.bf16 %v1200, %v1200
  %v1254 = vpack.c.bf16 %v1201, %v1201
  %v1255 = vpack.c.bf16 %v1202, %v1202
  %v1256 = vpack.c.bf16 %v1203, %v1203
  %v1261 = vunpack.c.l.b16 %v1253
  %v1262 = vunpack.c.l.b16 %v1254
  %v1263 = vunpack.c.l.b16 %v1255
  %v1264 = vunpack.c.l.b16 %v1256
  %v1265 = vpack.c.b16 %v1262, %v1261
  %v1266 = vpack.c.b16 %v1264, %v1263
  %v1268 = vshrl.u32 %v1265, 16
  %v1270 = vrot.slane %v1268, 7
  %v1271 = vshll.u32 %v1265, 16
  %v1273 = vor.u32 %v1270, %v1271
  %v1275 = vshrl.u32 %v1266, 16
  %v1277 = vrot.slane %v1275, 7
  %v1278 = vshll.u32 %v1266, 16
  %v1280 = vor.u32 %v1277, %v1278
  %v1283 = vsel %vm54, 0, %v1273
  %v1284 = vsel %vm54, 0, %v1280
  %v1285 = vrot.slane %v1271, 1
  %v1286 = vor.u32 %v1268, %v1285
  %v1287 = vrot.slane %v1278, 1
  %v1288 = vor.u32 %v1275, %v1287
  %v1291 = vsel %vm65, %v1286, 0
  %v1292 = vsel %vm65, %v1288, 0
  %s1295 = scalar_lea.vmem %s2, 960
  %v1296 = vld [vmem:[%s1295] sm:$0xf]
  %v1297 = vld [vmem:[%s1295 + $0x4] sm:$0xf]
  %v1298 = vld [vmem:[%s1295 + $0x8] sm:$0xf]
  %v1299 = vld [vmem:[%s1295 + $0xc] sm:$0xf]
  %v1300 = vld [vmem:[%s1295 + $0x10] sm:$0xf]
  %v1301 = vld [vmem:[%s1295 + $0x14] sm:$0xf]
  %v1302 = vld [vmem:[%s1295 + $0x18] sm:$0xf]
  %v1303 = vld [vmem:[%s1295 + $0x1c] sm:$0xf]
  %v1304 = vld [vmem:[%s1295 + $0x20] sm:$0xf]
  %v1305 = vld [vmem:[%s1295 + $0x24] sm:$0xf]
  %v1306 = vld [vmem:[%s1295 + $0x28] sm:$0xf]
  %v1307 = vld [vmem:[%s1295 + $0x2c] sm:$0xf]
  %v1308 = vld [vmem:[%s1295 + $0x30] sm:$0xf]
  %v1309 = vld [vmem:[%s1295 + $0x34] sm:$0xf]
  %v1310 = vld [vmem:[%s1295 + $0x38] sm:$0xf]
  %v1311 = vld [vmem:[%s1295 + $0x3c] sm:$0xf]
  %v1312 = vld [vmem:[%s1295 + $0x40] sm:$0xf]
  %v1313 = vld [vmem:[%s1295 + $0x44] sm:$0xf]
  %v1314 = vld [vmem:[%s1295 + $0x48] sm:$0xf]
  %v1315 = vld [vmem:[%s1295 + $0x4c] sm:$0xf]
  %v1316 = vld [vmem:[%s1295 + $0x50] sm:$0xf]
  %v1317 = vld [vmem:[%s1295 + $0x54] sm:$0xf]
  %v1318 = vld [vmem:[%s1295 + $0x58] sm:$0xf]
  %v1319 = vld [vmem:[%s1295 + $0x5c] sm:$0xf]
  %v1320 = vld [vmem:[%s1295 + $0x60] sm:$0xf]
  %v1321 = vld [vmem:[%s1295 + $0x64] sm:$0xf]
  %v1322 = vld [vmem:[%s1295 + $0x68] sm:$0xf]
  %v1323 = vld [vmem:[%s1295 + $0x6c] sm:$0xf]
  %v1324 = vld [vmem:[%s1295 + $0x70] sm:$0xf]
  %v1325 = vld [vmem:[%s1295 + $0x74] sm:$0xf]
  %v1326 = vld [vmem:[%s1295 + $0x78] sm:$0xf]
  %v1327 = vld [vmem:[%s1295 + $0x7c] sm:$0xf]
  %v1328 = vld [vmem:[%s1295 + $0x80] sm:$0xf]
  %v1329 = vld [vmem:[%s1295 + $0x84] sm:$0xf]
  %v1330 = vld [vmem:[%s1295 + $0x88] sm:$0xf]
  %v1331 = vld [vmem:[%s1295 + $0x8c] sm:$0xf]
  %v1332 = vld [vmem:[%s1295 + $0x90] sm:$0xf]
  %v1333 = vld [vmem:[%s1295 + $0x94] sm:$0xf]
  %v1334 = vld [vmem:[%s1295 + $0x98] sm:$0xf]
  %v1335 = vld [vmem:[%s1295 + $0x9c] sm:$0xf]
  %v1336 = vld [vmem:[%s1295 + $0xa0] sm:$0xf]
  %v1337 = vld [vmem:[%s1295 + $0xa4] sm:$0xf]
  %v1338 = vld [vmem:[%s1295 + $0xa8] sm:$0xf]
  %v1339 = vld [vmem:[%s1295 + $0xac] sm:$0xf]
  %v1340 = vld [vmem:[%s1295 + $0xb0] sm:$0xf]
  %v1341 = vld [vmem:[%s1295 + $0xb4] sm:$0xf]
  %v1342 = vld [vmem:[%s1295 + $0xb8] sm:$0xf]
  %v1343 = vld [vmem:[%s1295 + $0xbc] sm:$0xf]
  %v1392 = vunpack.c.l.b16 %v1296
  %v1393 = vunpack.c.l.b16 %v1297
  %v1394 = vunpack.c.l.b16 %v1298
  %v1395 = vunpack.c.l.b16 %v1299
  %v1396 = vunpack.c.l.b16 %v1300
  %v1397 = vunpack.c.l.b16 %v1301
  %v1398 = vunpack.c.l.b16 %v1302
  %v1399 = vunpack.c.l.b16 %v1303
  %v1400 = vunpack.c.l.b16 %v1304
  %v1401 = vunpack.c.l.b16 %v1305
  %v1402 = vunpack.c.l.b16 %v1306
  %v1403 = vunpack.c.l.b16 %v1307
  %v1404 = vunpack.c.l.b16 %v1308
  %v1405 = vunpack.c.l.b16 %v1309
  %v1406 = vunpack.c.l.b16 %v1310
  %v1407 = vunpack.c.l.b16 %v1311
  %v1408 = vunpack.c.l.b16 %v1312
  %v1409 = vunpack.c.l.b16 %v1313
  %v1410 = vunpack.c.l.b16 %v1314
  %v1411 = vunpack.c.l.b16 %v1315
  %v1412 = vunpack.c.l.b16 %v1316
  %v1413 = vunpack.c.l.b16 %v1317
  %v1414 = vunpack.c.l.b16 %v1318
  %v1415 = vunpack.c.l.b16 %v1319
  %v1416 = vunpack.c.l.b16 %v1320
  %v1417 = vunpack.c.l.b16 %v1321
  %v1418 = vunpack.c.l.b16 %v1322
  %v1419 = vunpack.c.l.b16 %v1323
  %v1420 = vunpack.c.l.b16 %v1324
  %v1421 = vunpack.c.l.b16 %v1325
  %v1422 = vunpack.c.l.b16 %v1326
  %v1423 = vunpack.c.l.b16 %v1327
  %v1424 = vunpack.c.l.b16 %v1328
  %v1425 = vunpack.c.l.b16 %v1329
  %v1426 = vunpack.c.l.b16 %v1330
  %v1427 = vunpack.c.l.b16 %v1331
  %v1428 = vunpack.c.l.b16 %v1332
  %v1429 = vunpack.c.l.b16 %v1333
  %v1430 = vunpack.c.l.b16 %v1334
  %v1431 = vunpack.c.l.b16 %v1335
  %v1432 = vunpack.c.l.b16 %v1336
  %v1433 = vunpack.c.l.b16 %v1337
  %v1434 = vunpack.c.l.b16 %v1338
  %v1435 = vunpack.c.l.b16 %v1339
  %v1436 = vunpack.c.l.b16 %v1340
  %v1437 = vunpack.c.l.b16 %v1341
  %v1438 = vunpack.c.l.b16 %v1342
  %v1439 = vunpack.c.l.b16 %v1343
  %v1440 = vpack.c.b16 %v1393, %v1392
  %v1441 = vpack.c.b16 %v1395, %v1394
  %v1442 = vpack.c.b16 %v1397, %v1396
  %v1443 = vpack.c.b16 %v1399, %v1398
  %v1444 = vpack.c.b16 %v1401, %v1400
  %v1445 = vpack.c.b16 %v1403, %v1402
  %v1446 = vpack.c.b16 %v1405, %v1404
  %v1447 = vpack.c.b16 %v1407, %v1406
  %v1448 = vpack.c.b16 %v1409, %v1408
  %v1449 = vpack.c.b16 %v1411, %v1410
  %v1450 = vpack.c.b16 %v1413, %v1412
  %v1451 = vpack.c.b16 %v1415, %v1414
  %v1452 = vpack.c.b16 %v1417, %v1416
  %v1453 = vpack.c.b16 %v1419, %v1418
  %v1454 = vpack.c.b16 %v1421, %v1420
  %v1455 = vpack.c.b16 %v1423, %v1422
  %v1456 = vpack.c.b16 %v1425, %v1424
  %v1457 = vpack.c.b16 %v1427, %v1426
  %v1458 = vpack.c.b16 %v1429, %v1428
  %v1459 = vpack.c.b16 %v1431, %v1430
  %v1460 = vpack.c.b16 %v1433, %v1432
  %v1461 = vpack.c.b16 %v1435, %v1434
  %v1462 = vpack.c.b16 %v1437, %v1436
  %v1463 = vpack.c.b16 %v1439, %v1438
  %1488 = vmatpush.bf16.msra.mxu0 %v1447
  %1489 = vmatpush.bf16.msra.mxu0 %v1446
  %1490 = vmatpush.bf16.msra.mxu0 %v1445
  %1491 = vmatpush.bf16.msra.mxu0 %v1444
  %1492 = vmatpush.bf16.msra.mxu0 %v1443
  %1493 = vmatpush.bf16.msra.mxu0 %v1442
  %1494 = vmatpush.bf16.msra.mxu0 %v1441
  %1495 = vmatpush.bf16.msra.mxu0 %v1440
  %1496 = vmatmul.bf16.gmra.mxu0 %v1283
  %v1497 = vpop.f32.mrf.mxu0
  %v1498 = vadd.f32 0.0, %v1497
  %v1499 = vpop.f32.mrf.mxu0
  %v1500 = vadd.f32 0.0, %v1499
  %1501 = vmatmul.bf16.gmra.mxu0 %v1284
  %v1502 = vpop.f32.mrf.mxu0
  %v1503 = vadd.f32 0.0, %v1502
  %v1504 = vpop.f32.mrf.mxu0
  %v1505 = vadd.f32 0.0, %v1504
  %1506 = vdwg.mxu0
  %1507 = vmatpush.bf16.msra.mxu0 %v1455
  %1508 = vmatpush.bf16.msra.mxu0 %v1454
  %1509 = vmatpush.bf16.msra.mxu0 %v1453
  %1510 = vmatpush.bf16.msra.mxu0 %v1452
  %1511 = vmatpush.bf16.msra.mxu0 %v1451
  %1512 = vmatpush.bf16.msra.mxu0 %v1450
  %1513 = vmatpush.bf16.msra.mxu0 %v1449
  %1514 = vmatpush.bf16.msra.mxu0 %v1448
  %1515 = vmatmul.bf16.gmra.mxu0 %v1265
  %v1516 = vpop.f32.mrf.mxu0
  %v1517 = vadd.f32 %v1498, %v1516
  %v1518 = vpop.f32.mrf.mxu0
  %v1519 = vadd.f32 %v1500, %v1518
  %1520 = vmatmul.bf16.gmra.mxu0 %v1266
  %v1521 = vpop.f32.mrf.mxu0
  %v1522 = vadd.f32 %v1503, %v1521
  %v1523 = vpop.f32.mrf.mxu0
  %v1524 = vadd.f32 %v1505, %v1523
  %1525 = vdwg.mxu0
  %1526 = vmatpush.bf16.msra.mxu0 %v1463
  %1527 = vmatpush.bf16.msra.mxu0 %v1462
  %1528 = vmatpush.bf16.msra.mxu0 %v1461
  %1529 = vmatpush.bf16.msra.mxu0 %v1460
  %1530 = vmatpush.bf16.msra.mxu0 %v1459
  %1531 = vmatpush.bf16.msra.mxu0 %v1458
  %1532 = vmatpush.bf16.msra.mxu0 %v1457
  %1533 = vmatpush.bf16.msra.mxu0 %v1456
  %1534 = vmatmul.bf16.gmra.mxu0 %v1291
  %v1535 = vpop.f32.mrf.mxu0
  %v1536 = vadd.f32 %v1517, %v1535
  %v1537 = vpop.f32.mrf.mxu0
  %v1538 = vadd.f32 %v1519, %v1537
  %1539 = vmatmul.bf16.gmra.mxu0 %v1292
  %v1540 = vpop.f32.mrf.mxu0
  %v1541 = vadd.f32 %v1522, %v1540
  %v1542 = vpop.f32.mrf.mxu0
  %v1543 = vadd.f32 %v1524, %v1542
  %1544 = vdwg.mxu0
  %v1593 = vunpack.c.l.b16 %v1205
  %v1594 = vunpack.c.l.b16 %v1206
  %v1595 = vunpack.c.l.b16 %v1207
  %v1596 = vunpack.c.l.b16 %v1208
  %v1597 = vunpack.c.l.b16 %v1209
  %v1598 = vunpack.c.l.b16 %v1210
  %v1599 = vunpack.c.l.b16 %v1211
  %v1600 = vunpack.c.l.b16 %v1212
  %v1601 = vunpack.c.l.b16 %v1213
  %v1602 = vunpack.c.l.b16 %v1214
  %v1603 = vunpack.c.l.b16 %v1215
  %v1604 = vunpack.c.l.b16 %v1216
  %v1605 = vunpack.c.l.b16 %v1217
  %v1606 = vunpack.c.l.b16 %v1218
  %v1607 = vunpack.c.l.b16 %v1219
  %v1608 = vunpack.c.l.b16 %v1220
  %v1609 = vunpack.c.l.b16 %v1221
  %v1610 = vunpack.c.l.b16 %v1222
  %v1611 = vunpack.c.l.b16 %v1223
  %v1612 = vunpack.c.l.b16 %v1224
  %v1613 = vunpack.c.l.b16 %v1225
  %v1614 = vunpack.c.l.b16 %v1226
  %v1615 = vunpack.c.l.b16 %v1227
  %v1616 = vunpack.c.l.b16 %v1228
  %v1617 = vunpack.c.l.b16 %v1229
  %v1618 = vunpack.c.l.b16 %v1230
  %v1619 = vunpack.c.l.b16 %v1231
  %v1620 = vunpack.c.l.b16 %v1232
  %v1621 = vunpack.c.l.b16 %v1233
  %v1622 = vunpack.c.l.b16 %v1234
  %v1623 = vunpack.c.l.b16 %v1235
  %v1624 = vunpack.c.l.b16 %v1236
  %v1625 = vunpack.c.l.b16 %v1237
  %v1626 = vunpack.c.l.b16 %v1238
  %v1627 = vunpack.c.l.b16 %v1239
  %v1628 = vunpack.c.l.b16 %v1240
  %v1629 = vunpack.c.l.b16 %v1241
  %v1630 = vunpack.c.l.b16 %v1242
  %v1631 = vunpack.c.l.b16 %v1243
  %v1632 = vunpack.c.l.b16 %v1244
  %v1633 = vunpack.c.l.b16 %v1245
  %v1634 = vunpack.c.l.b16 %v1246
  %v1635 = vunpack.c.l.b16 %v1247
  %v1636 = vunpack.c.l.b16 %v1248
  %v1637 = vunpack.c.l.b16 %v1249
  %v1638 = vunpack.c.l.b16 %v1250
  %v1639 = vunpack.c.l.b16 %v1251
  %v1640 = vunpack.c.l.b16 %v1252
  %v1641 = vpack.c.b16 %v1594, %v1593
  %v1642 = vpack.c.b16 %v1596, %v1595
  %v1643 = vpack.c.b16 %v1598, %v1597
  %v1644 = vpack.c.b16 %v1600, %v1599
  %v1645 = vpack.c.b16 %v1602, %v1601
  %v1646 = vpack.c.b16 %v1604, %v1603
  %v1647 = vpack.c.b16 %v1606, %v1605
  %v1648 = vpack.c.b16 %v1608, %v1607
  %v1649 = vpack.c.b16 %v1610, %v1609
  %v1650 = vpack.c.b16 %v1612, %v1611
  %v1651 = vpack.c.b16 %v1614, %v1613
  %v1652 = vpack.c.b16 %v1616, %v1615
  %v1653 = vpack.c.b16 %v1618, %v1617
  %v1654 = vpack.c.b16 %v1620, %v1619
  %v1655 = vpack.c.b16 %v1622, %v1621
  %v1656 = vpack.c.b16 %v1624, %v1623
  %v1657 = vpack.c.b16 %v1626, %v1625
  %v1658 = vpack.c.b16 %v1628, %v1627
  %v1659 = vpack.c.b16 %v1630, %v1629
  %v1660 = vpack.c.b16 %v1632, %v1631
  %v1661 = vpack.c.b16 %v1634, %v1633
  %v1662 = vpack.c.b16 %v1636, %v1635
  %v1663 = vpack.c.b16 %v1638, %v1637
  %v1664 = vpack.c.b16 %v1640, %v1639
  %1689 = vmatpush.bf16.msra.mxu0 %v1648
  %1690 = vmatpush.bf16.msra.mxu0 %v1647
  %1691 = vmatpush.bf16.msra.mxu0 %v1646
  %1692 = vmatpush.bf16.msra.mxu0 %v1645
  %1693 = vmatpush.bf16.msra.mxu0 %v1644
  %1694 = vmatpush.bf16.msra.mxu0 %v1643
  %1695 = vmatpush.bf16.msra.mxu0 %v1642
  %1696 = vmatpush.bf16.msra.mxu0 %v1641
  %1697 = vmatmul.bf16.gmra.mxu0 %v55
  %v1698 = vpop.f32.mrf.mxu0
  %v1699 = vadd.f32 %v1536, %v1698
  %v1700 = vpop.f32.mrf.mxu0
  %v1701 = vadd.f32 %v1538, %v1700
  %1702 = vmatmul.bf16.gmra.mxu0 %v56
  %v1703 = vpop.f32.mrf.mxu0
  %v1704 = vadd.f32 %v1541, %v1703
  %v1705 = vpop.f32.mrf.mxu0
  %v1706 = vadd.f32 %v1543, %v1705
  %1707 = vdwg.mxu0
  %1708 = vmatpush.bf16.msra.mxu0 %v1656
  %1709 = vmatpush.bf16.msra.mxu0 %v1655
  %1710 = vmatpush.bf16.msra.mxu0 %v1654
  %1711 = vmatpush.bf16.msra.mxu0 %v1653
  %1712 = vmatpush.bf16.msra.mxu0 %v1652
  %1713 = vmatpush.bf16.msra.mxu0 %v1651
  %1714 = vmatpush.bf16.msra.mxu0 %v1650
  %1715 = vmatpush.bf16.msra.mxu0 %v1649
  %1716 = vmatmul.bf16.gmra.mxu0 %v34
  %v1717 = vpop.f32.mrf.mxu0
  %v1718 = vadd.f32 %v1699, %v1717
  %v1719 = vpop.f32.mrf.mxu0
  %v1720 = vadd.f32 %v1701, %v1719
  %1721 = vmatmul.bf16.gmra.mxu0 %v35
  %v1722 = vpop.f32.mrf.mxu0
  %v1723 = vadd.f32 %v1704, %v1722
  %v1724 = vpop.f32.mrf.mxu0
  %v1725 = vadd.f32 %v1706, %v1724
  %1726 = vdwg.mxu0
  %1727 = vmatpush.bf16.msra.mxu0 %v1664
  %1728 = vmatpush.bf16.msra.mxu0 %v1663
  %1729 = vmatpush.bf16.msra.mxu0 %v1662
  %1730 = vmatpush.bf16.msra.mxu0 %v1661
  %1731 = vmatpush.bf16.msra.mxu0 %v1660
  %1732 = vmatpush.bf16.msra.mxu0 %v1659
  %1733 = vmatpush.bf16.msra.mxu0 %v1658
  %1734 = vmatpush.bf16.msra.mxu0 %v1657
  %1735 = vmatmul.bf16.gmra.mxu0 %v66
  %v1736 = vpop.f32.mrf.mxu0
  %v1737 = vadd.f32 %v1718, %v1736
  %v1738 = vpop.f32.mrf.mxu0
  %v1739 = vadd.f32 %v1720, %v1738
  %1740 = vmatmul.bf16.gmra.mxu0 %v67
  %v1741 = vpop.f32.mrf.mxu0
  %v1742 = vadd.f32 %v1723, %v1741
  %v1743 = vpop.f32.mrf.mxu0
  %v1744 = vadd.f32 %v1725, %v1743
  %1745 = vdwg.mxu0
  %s1746 = scalar_lea.vmem %s3, 4
  %v1747 = vld [vmem:[%s1746] sm:$0x1]
  %v1749 = vperm.slane %v1747, 0
  %v1751 = vadd.f32 %v1737, %v1749
  %v1752 = vadd.f32 %v1739, %v1749
  %v1753 = vadd.f32 %v1742, %v1749
  %v1754 = vadd.f32 %v1744, %v1749
  %v1755 = vpack.c.bf16 %v1751, %v1751
  %v1756 = vpack.c.bf16 %v1752, %v1752
  %v1757 = vpack.c.bf16 %v1753, %v1753
  %v1758 = vpack.c.bf16 %v1754, %v1754
  %v1763 = vunpack.c.l.b16 %v1755
  %v1764 = vunpack.c.l.b16 %v1756
  %v1765 = vunpack.c.l.b16 %v1757
  %v1766 = vunpack.c.l.b16 %v1758
  %v1767 = vpack.c.b16 %v1764, %v1763
  %v1768 = vpack.c.b16 %v1766, %v1765
  %v1770 = vshrl.u32 %v1767, 16
  %v1772 = vrot.slane %v1770, 7
  %v1773 = vshll.u32 %v1767, 16
  %v1775 = vor.u32 %v1772, %v1773
  %v1777 = vshrl.u32 %v1768, 16
  %v1779 = vrot.slane %v1777, 7
  %v1780 = vshll.u32 %v1768, 16
  %v1782 = vor.u32 %v1779, %v1780
  %v1785 = vsel %vm54, 0, %v1775
  %v1786 = vsel %vm54, 0, %v1782
  %v1787 = vrot.slane %v1773, 1
  %v1788 = vor.u32 %v1770, %v1787
  %v1789 = vrot.slane %v1780, 1
  %v1790 = vor.u32 %v1777, %v1789
  %v1793 = vsel %vm65, %v1788, 0
  %v1794 = vsel %vm65, %v1790, 0
  %s1797 = scalar_lea.vmem %s2, 1152
  %v1798 = vld [vmem:[%s1797] sm:$0xf]
  %v1799 = vld [vmem:[%s1797 + $0x4] sm:$0xf]
  %v1800 = vld [vmem:[%s1797 + $0x8] sm:$0xf]
  %v1801 = vld [vmem:[%s1797 + $0xc] sm:$0xf]
  %v1802 = vld [vmem:[%s1797 + $0x10] sm:$0xf]
  %v1803 = vld [vmem:[%s1797 + $0x14] sm:$0xf]
  %v1804 = vld [vmem:[%s1797 + $0x18] sm:$0xf]
  %v1805 = vld [vmem:[%s1797 + $0x1c] sm:$0xf]
  %v1806 = vld [vmem:[%s1797 + $0x20] sm:$0xf]
  %v1807 = vld [vmem:[%s1797 + $0x24] sm:$0xf]
  %v1808 = vld [vmem:[%s1797 + $0x28] sm:$0xf]
  %v1809 = vld [vmem:[%s1797 + $0x2c] sm:$0xf]
  %v1810 = vld [vmem:[%s1797 + $0x30] sm:$0xf]
  %v1811 = vld [vmem:[%s1797 + $0x34] sm:$0xf]
  %v1812 = vld [vmem:[%s1797 + $0x38] sm:$0xf]
  %v1813 = vld [vmem:[%s1797 + $0x3c] sm:$0xf]
  %v1814 = vld [vmem:[%s1797 + $0x40] sm:$0xf]
  %v1815 = vld [vmem:[%s1797 + $0x44] sm:$0xf]
  %v1816 = vld [vmem:[%s1797 + $0x48] sm:$0xf]
  %v1817 = vld [vmem:[%s1797 + $0x4c] sm:$0xf]
  %v1818 = vld [vmem:[%s1797 + $0x50] sm:$0xf]
  %v1819 = vld [vmem:[%s1797 + $0x54] sm:$0xf]
  %v1820 = vld [vmem:[%s1797 + $0x58] sm:$0xf]
  %v1821 = vld [vmem:[%s1797 + $0x5c] sm:$0xf]
  %v1822 = vld [vmem:[%s1797 + $0x60] sm:$0xf]
  %v1823 = vld [vmem:[%s1797 + $0x64] sm:$0xf]
  %v1824 = vld [vmem:[%s1797 + $0x68] sm:$0xf]
  %v1825 = vld [vmem:[%s1797 + $0x6c] sm:$0xf]
  %v1826 = vld [vmem:[%s1797 + $0x70] sm:$0xf]
  %v1827 = vld [vmem:[%s1797 + $0x74] sm:$0xf]
  %v1828 = vld [vmem:[%s1797 + $0x78] sm:$0xf]
  %v1829 = vld [vmem:[%s1797 + $0x7c] sm:$0xf]
  %v1830 = vld [vmem:[%s1797 + $0x80] sm:$0xf]
  %v1831 = vld [vmem:[%s1797 + $0x84] sm:$0xf]
  %v1832 = vld [vmem:[%s1797 + $0x88] sm:$0xf]
  %v1833 = vld [vmem:[%s1797 + $0x8c] sm:$0xf]
  %v1834 = vld [vmem:[%s1797 + $0x90] sm:$0xf]
  %v1835 = vld [vmem:[%s1797 + $0x94] sm:$0xf]
  %v1836 = vld [vmem:[%s1797 + $0x98] sm:$0xf]
  %v1837 = vld [vmem:[%s1797 + $0x9c] sm:$0xf]
  %v1838 = vld [vmem:[%s1797 + $0xa0] sm:$0xf]
  %v1839 = vld [vmem:[%s1797 + $0xa4] sm:$0xf]
  %v1840 = vld [vmem:[%s1797 + $0xa8] sm:$0xf]
  %v1841 = vld [vmem:[%s1797 + $0xac] sm:$0xf]
  %v1842 = vld [vmem:[%s1797 + $0xb0] sm:$0xf]
  %v1843 = vld [vmem:[%s1797 + $0xb4] sm:$0xf]
  %v1844 = vld [vmem:[%s1797 + $0xb8] sm:$0xf]
  %v1845 = vld [vmem:[%s1797 + $0xbc] sm:$0xf]
  %s1846 = scalar_lea.vmem %s3, 6
  %v1847 = vld [vmem:[%s1846] sm:$0x1]
  %v1849 = vperm.slane %v1847, 0
  %v1899 = vunpack.c.l.b16 %v1798
  %v1900 = vunpack.c.l.b16 %v1799
  %v1901 = vunpack.c.l.b16 %v1800
  %v1902 = vunpack.c.l.b16 %v1801
  %v1903 = vunpack.c.l.b16 %v1802
  %v1904 = vunpack.c.l.b16 %v1803
  %v1905 = vunpack.c.l.b16 %v1804
  %v1906 = vunpack.c.l.b16 %v1805
  %v1907 = vunpack.c.l.b16 %v1806
  %v1908 = vunpack.c.l.b16 %v1807
  %v1909 = vunpack.c.l.b16 %v1808
  %v1910 = vunpack.c.l.b16 %v1809
  %v1911 = vunpack.c.l.b16 %v1810
  %v1912 = vunpack.c.l.b16 %v1811
  %v1913 = vunpack.c.l.b16 %v1812
  %v1914 = vunpack.c.l.b16 %v1813
  %v1915 = vunpack.c.l.b16 %v1814
  %v1916 = vunpack.c.l.b16 %v1815
  %v1917 = vunpack.c.l.b16 %v1816
  %v1918 = vunpack.c.l.b16 %v1817
  %v1919 = vunpack.c.l.b16 %v1818
  %v1920 = vunpack.c.l.b16 %v1819
  %v1921 = vunpack.c.l.b16 %v1820
  %v1922 = vunpack.c.l.b16 %v1821
  %v1923 = vunpack.c.l.b16 %v1822
  %v1924 = vunpack.c.l.b16 %v1823
  %v1925 = vunpack.c.l.b16 %v1824
  %v1926 = vunpack.c.l.b16 %v1825
  %v1927 = vunpack.c.l.b16 %v1826
  %v1928 = vunpack.c.l.b16 %v1827
  %v1929 = vunpack.c.l.b16 %v1828
  %v1930 = vunpack.c.l.b16 %v1829
  %v1931 = vunpack.c.l.b16 %v1830
  %v1932 = vunpack.c.l.b16 %v1831
  %v1933 = vunpack.c.l.b16 %v1832
  %v1934 = vunpack.c.l.b16 %v1833
  %v1935 = vunpack.c.l.b16 %v1834
  %v1936 = vunpack.c.l.b16 %v1835
  %v1937 = vunpack.c.l.b16 %v1836
  %v1938 = vunpack.c.l.b16 %v1837
  %v1939 = vunpack.c.l.b16 %v1838
  %v1940 = vunpack.c.l.b16 %v1839
  %v1941 = vunpack.c.l.b16 %v1840
  %v1942 = vunpack.c.l.b16 %v1841
  %v1943 = vunpack.c.l.b16 %v1842
  %v1944 = vunpack.c.l.b16 %v1843
  %v1945 = vunpack.c.l.b16 %v1844
  %v1946 = vunpack.c.l.b16 %v1845
  %v1947 = vpack.c.b16 %v1900, %v1899
  %v1948 = vpack.c.b16 %v1902, %v1901
  %v1949 = vpack.c.b16 %v1904, %v1903
  %v1950 = vpack.c.b16 %v1906, %v1905
  %v1951 = vpack.c.b16 %v1908, %v1907
  %v1952 = vpack.c.b16 %v1910, %v1909
  %v1953 = vpack.c.b16 %v1912, %v1911
  %v1954 = vpack.c.b16 %v1914, %v1913
  %v1955 = vpack.c.b16 %v1916, %v1915
  %v1956 = vpack.c.b16 %v1918, %v1917
  %v1957 = vpack.c.b16 %v1920, %v1919
  %v1958 = vpack.c.b16 %v1922, %v1921
  %v1959 = vpack.c.b16 %v1924, %v1923
  %v1960 = vpack.c.b16 %v1926, %v1925
  %v1961 = vpack.c.b16 %v1928, %v1927
  %v1962 = vpack.c.b16 %v1930, %v1929
  %v1963 = vpack.c.b16 %v1932, %v1931
  %v1964 = vpack.c.b16 %v1934, %v1933
  %v1965 = vpack.c.b16 %v1936, %v1935
  %v1966 = vpack.c.b16 %v1938, %v1937
  %v1967 = vpack.c.b16 %v1940, %v1939
  %v1968 = vpack.c.b16 %v1942, %v1941
  %v1969 = vpack.c.b16 %v1944, %v1943
  %v1970 = vpack.c.b16 %v1946, %v1945
  %1995 = vmatpush.bf16.msra.mxu0 %v1954
  %1996 = vmatpush.bf16.msra.mxu0 %v1953
  %1997 = vmatpush.bf16.msra.mxu0 %v1952
  %1998 = vmatpush.bf16.msra.mxu0 %v1951
  %1999 = vmatpush.bf16.msra.mxu0 %v1950
  %2000 = vmatpush.bf16.msra.mxu0 %v1949
  %2001 = vmatpush.bf16.msra.mxu0 %v1948
  %2002 = vmatpush.bf16.msra.mxu0 %v1947
  %2003 = vmatmul.bf16.gmra.mxu0 %v1785
  %v2004 = vpop.f32.mrf.mxu0
  %v2005 = vadd.f32 %v1849, %v2004
  %v2006 = vpop.f32.mrf.mxu0
  %v2007 = vadd.f32 %v1849, %v2006
  %2008 = vmatmul.bf16.gmra.mxu0 %v1786
  %v2009 = vpop.f32.mrf.mxu0
  %v2010 = vadd.f32 %v1849, %v2009
  %v2011 = vpop.f32.mrf.mxu0
  %v2012 = vadd.f32 %v1849, %v2011
  %2013 = vdwg.mxu0
  %2014 = vmatpush.bf16.msra.mxu0 %v1962
  %2015 = vmatpush.bf16.msra.mxu0 %v1961
  %2016 = vmatpush.bf16.msra.mxu0 %v1960
  %2017 = vmatpush.bf16.msra.mxu0 %v1959
  %2018 = vmatpush.bf16.msra.mxu0 %v1958
  %2019 = vmatpush.bf16.msra.mxu0 %v1957
  %2020 = vmatpush.bf16.msra.mxu0 %v1956
  %2021 = vmatpush.bf16.msra.mxu0 %v1955
  %2022 = vmatmul.bf16.gmra.mxu0 %v1767
  %v2023 = vpop.f32.mrf.mxu0
  %v2024 = vadd.f32 %v2005, %v2023
  %v2025 = vpop.f32.mrf.mxu0
  %v2026 = vadd.f32 %v2007, %v2025
  %2027 = vmatmul.bf16.gmra.mxu0 %v1768
  %v2028 = vpop.f32.mrf.mxu0
  %v2029 = vadd.f32 %v2010, %v2028
  %v2030 = vpop.f32.mrf.mxu0
  %v2031 = vadd.f32 %v2012, %v2030
  %2032 = vdwg.mxu0
  %2033 = vmatpush.bf16.msra.mxu0 %v1970
  %2034 = vmatpush.bf16.msra.mxu0 %v1969
  %2035 = vmatpush.bf16.msra.mxu0 %v1968
  %2036 = vmatpush.bf16.msra.mxu0 %v1967
  %2037 = vmatpush.bf16.msra.mxu0 %v1966
  %2038 = vmatpush.bf16.msra.mxu0 %v1965
  %2039 = vmatpush.bf16.msra.mxu0 %v1964
  %2040 = vmatpush.bf16.msra.mxu0 %v1963
  %2041 = vmatmul.bf16.gmra.mxu0 %v1793
  %v2042 = vpop.f32.mrf.mxu0
  %v2043 = vadd.f32 %v2024, %v2042
  %v2044 = vpop.f32.mrf.mxu0
  %v2045 = vadd.f32 %v2026, %v2044
  %2046 = vmatmul.bf16.gmra.mxu0 %v1794
  %v2047 = vpop.f32.mrf.mxu0
  %v2048 = vadd.f32 %v2029, %v2047
  %v2049 = vpop.f32.mrf.mxu0
  %v2050 = vadd.f32 %v2031, %v2049
  %2051 = vdwg.mxu0
  %v2052 = vmax.f32 %v2043, 0.0
  %v2053 = vmax.f32 %v2045, 0.0
  %v2054 = vmax.f32 %v2048, 0.0
  %v2055 = vmax.f32 %v2050, 0.0
  %v2056 = vpack.c.bf16 %v2052, %v2052
  %v2057 = vpack.c.bf16 %v2053, %v2053
  %v2058 = vpack.c.bf16 %v2054, %v2054
  %v2059 = vpack.c.bf16 %v2055, %v2055
  %v2064 = vunpack.c.l.b16 %v2056
  %v2065 = vunpack.c.l.b16 %v2057
  %v2066 = vunpack.c.l.b16 %v2058
  %v2067 = vunpack.c.l.b16 %v2059
  %v2068 = vpack.c.b16 %v2065, %v2064
  %v2069 = vpack.c.b16 %v2067, %v2066
  %v2071 = vshrl.u32 %v2068, 16
  %v2073 = vrot.slane %v2071, 7
  %v2074 = vshll.u32 %v2068, 16
  %v2076 = vor.u32 %v2073, %v2074
  %v2078 = vshrl.u32 %v2069, 16
  %v2080 = vrot.slane %v2078, 7
  %v2081 = vshll.u32 %v2069, 16
  %v2083 = vor.u32 %v2080, %v2081
  %v2086 = vsel %vm54, 0, %v2076
  %v2087 = vsel %vm54, 0, %v2083
  %v2088 = vrot.slane %v2074, 1
  %v2089 = vor.u32 %v2071, %v2088
  %v2090 = vrot.slane %v2081, 1
  %v2091 = vor.u32 %v2078, %v2090
  %v2094 = vsel %vm65, %v2089, 0
  %v2095 = vsel %vm65, %v2091, 0
  %s2098 = scalar_lea.vmem %s2, 1344
  %v2099 = vld [vmem:[%s2098] sm:$0xf]
  %v2100 = vld [vmem:[%s2098 + $0x4] sm:$0xf]
  %v2101 = vld [vmem:[%s2098 + $0x8] sm:$0xf]
  %v2102 = vld [vmem:[%s2098 + $0xc] sm:$0xf]
  %v2103 = vld [vmem:[%s2098 + $0x10] sm:$0xf]
  %v2104 = vld [vmem:[%s2098 + $0x14] sm:$0xf]
  %v2105 = vld [vmem:[%s2098 + $0x18] sm:$0xf]
  %v2106 = vld [vmem:[%s2098 + $0x1c] sm:$0xf]
  %v2107 = vld [vmem:[%s2098 + $0x20] sm:$0xf]
  %v2108 = vld [vmem:[%s2098 + $0x24] sm:$0xf]
  %v2109 = vld [vmem:[%s2098 + $0x28] sm:$0xf]
  %v2110 = vld [vmem:[%s2098 + $0x2c] sm:$0xf]
  %v2111 = vld [vmem:[%s2098 + $0x30] sm:$0xf]
  %v2112 = vld [vmem:[%s2098 + $0x34] sm:$0xf]
  %v2113 = vld [vmem:[%s2098 + $0x38] sm:$0xf]
  %v2114 = vld [vmem:[%s2098 + $0x3c] sm:$0xf]
  %v2115 = vld [vmem:[%s2098 + $0x40] sm:$0xf]
  %v2116 = vld [vmem:[%s2098 + $0x44] sm:$0xf]
  %v2117 = vld [vmem:[%s2098 + $0x48] sm:$0xf]
  %v2118 = vld [vmem:[%s2098 + $0x4c] sm:$0xf]
  %v2119 = vld [vmem:[%s2098 + $0x50] sm:$0xf]
  %v2120 = vld [vmem:[%s2098 + $0x54] sm:$0xf]
  %v2121 = vld [vmem:[%s2098 + $0x58] sm:$0xf]
  %v2122 = vld [vmem:[%s2098 + $0x5c] sm:$0xf]
  %v2123 = vld [vmem:[%s2098 + $0x60] sm:$0xf]
  %v2124 = vld [vmem:[%s2098 + $0x64] sm:$0xf]
  %v2125 = vld [vmem:[%s2098 + $0x68] sm:$0xf]
  %v2126 = vld [vmem:[%s2098 + $0x6c] sm:$0xf]
  %v2127 = vld [vmem:[%s2098 + $0x70] sm:$0xf]
  %v2128 = vld [vmem:[%s2098 + $0x74] sm:$0xf]
  %v2129 = vld [vmem:[%s2098 + $0x78] sm:$0xf]
  %v2130 = vld [vmem:[%s2098 + $0x7c] sm:$0xf]
  %v2131 = vld [vmem:[%s2098 + $0x80] sm:$0xf]
  %v2132 = vld [vmem:[%s2098 + $0x84] sm:$0xf]
  %v2133 = vld [vmem:[%s2098 + $0x88] sm:$0xf]
  %v2134 = vld [vmem:[%s2098 + $0x8c] sm:$0xf]
  %v2135 = vld [vmem:[%s2098 + $0x90] sm:$0xf]
  %v2136 = vld [vmem:[%s2098 + $0x94] sm:$0xf]
  %v2137 = vld [vmem:[%s2098 + $0x98] sm:$0xf]
  %v2138 = vld [vmem:[%s2098 + $0x9c] sm:$0xf]
  %v2139 = vld [vmem:[%s2098 + $0xa0] sm:$0xf]
  %v2140 = vld [vmem:[%s2098 + $0xa4] sm:$0xf]
  %v2141 = vld [vmem:[%s2098 + $0xa8] sm:$0xf]
  %v2142 = vld [vmem:[%s2098 + $0xac] sm:$0xf]
  %v2143 = vld [vmem:[%s2098 + $0xb0] sm:$0xf]
  %v2144 = vld [vmem:[%s2098 + $0xb4] sm:$0xf]
  %v2145 = vld [vmem:[%s2098 + $0xb8] sm:$0xf]
  %v2146 = vld [vmem:[%s2098 + $0xbc] sm:$0xf]
  %s2147 = scalar_lea.vmem %s3, 7
  %v2148 = vld [vmem:[%s2147] sm:$0x1]
  %v2150 = vperm.slane %v2148, 0
  %v2200 = vunpack.c.l.b16 %v2099
  %v2201 = vunpack.c.l.b16 %v2100
  %v2202 = vunpack.c.l.b16 %v2101
  %v2203 = vunpack.c.l.b16 %v2102
  %v2204 = vunpack.c.l.b16 %v2103
  %v2205 = vunpack.c.l.b16 %v2104
  %v2206 = vunpack.c.l.b16 %v2105
  %v2207 = vunpack.c.l.b16 %v2106
  %v2208 = vunpack.c.l.b16 %v2107
  %v2209 = vunpack.c.l.b16 %v2108
  %v2210 = vunpack.c.l.b16 %v2109
  %v2211 = vunpack.c.l.b16 %v2110
  %v2212 = vunpack.c.l.b16 %v2111
  %v2213 = vunpack.c.l.b16 %v2112
  %v2214 = vunpack.c.l.b16 %v2113
  %v2215 = vunpack.c.l.b16 %v2114
  %v2216 = vunpack.c.l.b16 %v2115
  %v2217 = vunpack.c.l.b16 %v2116
  %v2218 = vunpack.c.l.b16 %v2117
  %v2219 = vunpack.c.l.b16 %v2118
  %v2220 = vunpack.c.l.b16 %v2119
  %v2221 = vunpack.c.l.b16 %v2120
  %v2222 = vunpack.c.l.b16 %v2121
  %v2223 = vunpack.c.l.b16 %v2122
  %v2224 = vunpack.c.l.b16 %v2123
  %v2225 = vunpack.c.l.b16 %v2124
  %v2226 = vunpack.c.l.b16 %v2125
  %v2227 = vunpack.c.l.b16 %v2126
  %v2228 = vunpack.c.l.b16 %v2127
  %v2229 = vunpack.c.l.b16 %v2128
  %v2230 = vunpack.c.l.b16 %v2129
  %v2231 = vunpack.c.l.b16 %v2130
  %v2232 = vunpack.c.l.b16 %v2131
  %v2233 = vunpack.c.l.b16 %v2132
  %v2234 = vunpack.c.l.b16 %v2133
  %v2235 = vunpack.c.l.b16 %v2134
  %v2236 = vunpack.c.l.b16 %v2135
  %v2237 = vunpack.c.l.b16 %v2136
  %v2238 = vunpack.c.l.b16 %v2137
  %v2239 = vunpack.c.l.b16 %v2138
  %v2240 = vunpack.c.l.b16 %v2139
  %v2241 = vunpack.c.l.b16 %v2140
  %v2242 = vunpack.c.l.b16 %v2141
  %v2243 = vunpack.c.l.b16 %v2142
  %v2244 = vunpack.c.l.b16 %v2143
  %v2245 = vunpack.c.l.b16 %v2144
  %v2246 = vunpack.c.l.b16 %v2145
  %v2247 = vunpack.c.l.b16 %v2146
  %v2248 = vpack.c.b16 %v2201, %v2200
  %v2249 = vpack.c.b16 %v2203, %v2202
  %v2250 = vpack.c.b16 %v2205, %v2204
  %v2251 = vpack.c.b16 %v2207, %v2206
  %v2252 = vpack.c.b16 %v2209, %v2208
  %v2253 = vpack.c.b16 %v2211, %v2210
  %v2254 = vpack.c.b16 %v2213, %v2212
  %v2255 = vpack.c.b16 %v2215, %v2214
  %v2256 = vpack.c.b16 %v2217, %v2216
  %v2257 = vpack.c.b16 %v2219, %v2218
  %v2258 = vpack.c.b16 %v2221, %v2220
  %v2259 = vpack.c.b16 %v2223, %v2222
  %v2260 = vpack.c.b16 %v2225, %v2224
  %v2261 = vpack.c.b16 %v2227, %v2226
  %v2262 = vpack.c.b16 %v2229, %v2228
  %v2263 = vpack.c.b16 %v2231, %v2230
  %v2264 = vpack.c.b16 %v2233, %v2232
  %v2265 = vpack.c.b16 %v2235, %v2234
  %v2266 = vpack.c.b16 %v2237, %v2236
  %v2267 = vpack.c.b16 %v2239, %v2238
  %v2268 = vpack.c.b16 %v2241, %v2240
  %v2269 = vpack.c.b16 %v2243, %v2242
  %v2270 = vpack.c.b16 %v2245, %v2244
  %v2271 = vpack.c.b16 %v2247, %v2246
  %2296 = vmatpush.bf16.msra.mxu0 %v2255
  %2297 = vmatpush.bf16.msra.mxu0 %v2254
  %2298 = vmatpush.bf16.msra.mxu0 %v2253
  %2299 = vmatpush.bf16.msra.mxu0 %v2252
  %2300 = vmatpush.bf16.msra.mxu0 %v2251
  %2301 = vmatpush.bf16.msra.mxu0 %v2250
  %2302 = vmatpush.bf16.msra.mxu0 %v2249
  %2303 = vmatpush.bf16.msra.mxu0 %v2248
  %2304 = vmatmul.bf16.gmra.mxu0 %v2086
  %v2305 = vpop.f32.mrf.mxu0
  %v2306 = vadd.f32 %v2150, %v2305
  %v2307 = vpop.f32.mrf.mxu0
  %v2308 = vadd.f32 %v2150, %v2307
  %2309 = vmatmul.bf16.gmra.mxu0 %v2087
  %v2310 = vpop.f32.mrf.mxu0
  %v2311 = vadd.f32 %v2150, %v2310
  %v2312 = vpop.f32.mrf.mxu0
  %v2313 = vadd.f32 %v2150, %v2312
  %2314 = vdwg.mxu0
  %2315 = vmatpush.bf16.msra.mxu0 %v2263
  %2316 = vmatpush.bf16.msra.mxu0 %v2262
  %2317 = vmatpush.bf16.msra.mxu0 %v2261
  %2318 = vmatpush.bf16.msra.mxu0 %v2260
  %2319 = vmatpush.bf16.msra.mxu0 %v2259
  %2320 = vmatpush.bf16.msra.mxu0 %v2258
  %2321 = vmatpush.bf16.msra.mxu0 %v2257
  %2322 = vmatpush.bf16.msra.mxu0 %v2256
  %2323 = vmatmul.bf16.gmra.mxu0 %v2068
  %v2324 = vpop.f32.mrf.mxu0
  %v2325 = vadd.f32 %v2306, %v2324
  %v2326 = vpop.f32.mrf.mxu0
  %v2327 = vadd.f32 %v2308, %v2326
  %2328 = vmatmul.bf16.gmra.mxu0 %v2069
  %v2329 = vpop.f32.mrf.mxu0
  %v2330 = vadd.f32 %v2311, %v2329
  %v2331 = vpop.f32.mrf.mxu0
  %v2332 = vadd.f32 %v2313, %v2331
  %2333 = vdwg.mxu0
  %2334 = vmatpush.bf16.msra.mxu0 %v2271
  %2335 = vmatpush.bf16.msra.mxu0 %v2270
  %2336 = vmatpush.bf16.msra.mxu0 %v2269
  %2337 = vmatpush.bf16.msra.mxu0 %v2268
  %2338 = vmatpush.bf16.msra.mxu0 %v2267
  %2339 = vmatpush.bf16.msra.mxu0 %v2266
  %2340 = vmatpush.bf16.msra.mxu0 %v2265
  %2341 = vmatpush.bf16.msra.mxu0 %v2264
  %2342 = vmatmul.bf16.gmra.mxu0 %v2094
  %v2343 = vpop.f32.mrf.mxu0
  %v2344 = vadd.f32 %v2325, %v2343
  %v2345 = vpop.f32.mrf.mxu0
  %v2346 = vadd.f32 %v2327, %v2345
  %2347 = vmatmul.bf16.gmra.mxu0 %v2095
  %v2348 = vpop.f32.mrf.mxu0
  %v2349 = vadd.f32 %v2330, %v2348
  %v2350 = vpop.f32.mrf.mxu0
  %v2351 = vadd.f32 %v2332, %v2350
  %2352 = vdwg.mxu0
  %v2353 = vadd.f32 %v1751, %v2344
  %v2354 = vadd.f32 %v1752, %v2346
  %v2355 = vadd.f32 %v1753, %v2349
  %v2356 = vadd.f32 %v1754, %v2351
  %v2357 = vpack.c.bf16 %v2353, %v2353
  %v2358 = vpack.c.bf16 %v2354, %v2354
  %v2359 = vpack.c.bf16 %v2355, %v2355
  %v2360 = vpack.c.bf16 %v2356, %v2356
  %v2365 = vunpack.c.l.b16 %v2357
  %v2366 = vunpack.c.l.b16 %v2358
  %v2367 = vunpack.c.l.b16 %v2359
  %v2368 = vunpack.c.l.b16 %v2360
  %v2369 = vpack.c.b16 %v2366, %v2365
  %v2370 = vpack.c.b16 %v2368, %v2367
  %v2372 = vshrl.u32 %v2369, 16
  %v2374 = vrot.slane %v2372, 7
  %v2375 = vshll.u32 %v2369, 16
  %v2377 = vor.u32 %v2374, %v2375
  %v2379 = vshrl.u32 %v2370, 16
  %v2381 = vrot.slane %v2379, 7
  %v2382 = vshll.u32 %v2370, 16
  %v2384 = vor.u32 %v2381, %v2382
  %v2387 = vsel %vm54, 0, %v2377
  %v2388 = vsel %vm54, 0, %v2384
  %v2389 = vrot.slane %v2375, 1
  %v2390 = vor.u32 %v2372, %v2389
  %v2391 = vrot.slane %v2382, 1
  %v2392 = vor.u32 %v2379, %v2391
  %v2395 = vsel %vm65, %v2390, 0
  %v2396 = vsel %vm65, %v2392, 0
  %s2399 = scalar_lea.vmem %s2, 1536
  %v2400 = vld [vmem:[%s2399] sm:$0xf]
  %v2401 = vld [vmem:[%s2399 + $0x4] sm:$0xf]
  %v2402 = vld [vmem:[%s2399 + $0x8] sm:$0xf]
  %v2403 = vld [vmem:[%s2399 + $0xc] sm:$0xf]
  %v2404 = vld [vmem:[%s2399 + $0x10] sm:$0xf]
  %v2405 = vld [vmem:[%s2399 + $0x14] sm:$0xf]
  %v2406 = vld [vmem:[%s2399 + $0x18] sm:$0xf]
  %v2407 = vld [vmem:[%s2399 + $0x1c] sm:$0xf]
  %v2408 = vld [vmem:[%s2399 + $0x20] sm:$0xf]
  %v2409 = vld [vmem:[%s2399 + $0x24] sm:$0xf]
  %v2410 = vld [vmem:[%s2399 + $0x28] sm:$0xf]
  %v2411 = vld [vmem:[%s2399 + $0x2c] sm:$0xf]
  %v2412 = vld [vmem:[%s2399 + $0x30] sm:$0xf]
  %v2413 = vld [vmem:[%s2399 + $0x34] sm:$0xf]
  %v2414 = vld [vmem:[%s2399 + $0x38] sm:$0xf]
  %v2415 = vld [vmem:[%s2399 + $0x3c] sm:$0xf]
  %v2416 = vld [vmem:[%s2399 + $0x40] sm:$0xf]
  %v2417 = vld [vmem:[%s2399 + $0x44] sm:$0xf]
  %v2418 = vld [vmem:[%s2399 + $0x48] sm:$0xf]
  %v2419 = vld [vmem:[%s2399 + $0x4c] sm:$0xf]
  %v2420 = vld [vmem:[%s2399 + $0x50] sm:$0xf]
  %v2421 = vld [vmem:[%s2399 + $0x54] sm:$0xf]
  %v2422 = vld [vmem:[%s2399 + $0x58] sm:$0xf]
  %v2423 = vld [vmem:[%s2399 + $0x5c] sm:$0xf]
  %v2424 = vld [vmem:[%s2399 + $0x60] sm:$0xf]
  %v2425 = vld [vmem:[%s2399 + $0x64] sm:$0xf]
  %v2426 = vld [vmem:[%s2399 + $0x68] sm:$0xf]
  %v2427 = vld [vmem:[%s2399 + $0x6c] sm:$0xf]
  %v2428 = vld [vmem:[%s2399 + $0x70] sm:$0xf]
  %v2429 = vld [vmem:[%s2399 + $0x74] sm:$0xf]
  %v2430 = vld [vmem:[%s2399 + $0x78] sm:$0xf]
  %v2431 = vld [vmem:[%s2399 + $0x7c] sm:$0xf]
  %v2432 = vld [vmem:[%s2399 + $0x80] sm:$0xf]
  %v2433 = vld [vmem:[%s2399 + $0x84] sm:$0xf]
  %v2434 = vld [vmem:[%s2399 + $0x88] sm:$0xf]
  %v2435 = vld [vmem:[%s2399 + $0x8c] sm:$0xf]
  %v2436 = vld [vmem:[%s2399 + $0x90] sm:$0xf]
  %v2437 = vld [vmem:[%s2399 + $0x94] sm:$0xf]
  %v2438 = vld [vmem:[%s2399 + $0x98] sm:$0xf]
  %v2439 = vld [vmem:[%s2399 + $0x9c] sm:$0xf]
  %v2440 = vld [vmem:[%s2399 + $0xa0] sm:$0xf]
  %v2441 = vld [vmem:[%s2399 + $0xa4] sm:$0xf]
  %v2442 = vld [vmem:[%s2399 + $0xa8] sm:$0xf]
  %v2443 = vld [vmem:[%s2399 + $0xac] sm:$0xf]
  %v2444 = vld [vmem:[%s2399 + $0xb0] sm:$0xf]
  %v2445 = vld [vmem:[%s2399 + $0xb4] sm:$0xf]
  %v2446 = vld [vmem:[%s2399 + $0xb8] sm:$0xf]
  %v2447 = vld [vmem:[%s2399 + $0xbc] sm:$0xf]
  %s2448 = scalar_lea.vmem %s3, 8
  %v2449 = vld [vmem:[%s2448] sm:$0x1]
  %v2451 = vperm.slane %v2449, 0
  %v2501 = vunpack.c.l.b16 %v2400
  %v2502 = vunpack.c.l.b16 %v2401
  %v2503 = vunpack.c.l.b16 %v2402
  %v2504 = vunpack.c.l.b16 %v2403
  %v2505 = vunpack.c.l.b16 %v2404
  %v2506 = vunpack.c.l.b16 %v2405
  %v2507 = vunpack.c.l.b16 %v2406
  %v2508 = vunpack.c.l.b16 %v2407
  %v2509 = vunpack.c.l.b16 %v2408
  %v2510 = vunpack.c.l.b16 %v2409
  %v2511 = vunpack.c.l.b16 %v2410
  %v2512 = vunpack.c.l.b16 %v2411
  %v2513 = vunpack.c.l.b16 %v2412
  %v2514 = vunpack.c.l.b16 %v2413
  %v2515 = vunpack.c.l.b16 %v2414
  %v2516 = vunpack.c.l.b16 %v2415
  %v2517 = vunpack.c.l.b16 %v2416
  %v2518 = vunpack.c.l.b16 %v2417
  %v2519 = vunpack.c.l.b16 %v2418
  %v2520 = vunpack.c.l.b16 %v2419
  %v2521 = vunpack.c.l.b16 %v2420
  %v2522 = vunpack.c.l.b16 %v2421
  %v2523 = vunpack.c.l.b16 %v2422
  %v2524 = vunpack.c.l.b16 %v2423
  %v2525 = vunpack.c.l.b16 %v2424
  %v2526 = vunpack.c.l.b16 %v2425
  %v2527 = vunpack.c.l.b16 %v2426
  %v2528 = vunpack.c.l.b16 %v2427
  %v2529 = vunpack.c.l.b16 %v2428
  %v2530 = vunpack.c.l.b16 %v2429
  %v2531 = vunpack.c.l.b16 %v2430
  %v2532 = vunpack.c.l.b16 %v2431
  %v2533 = vunpack.c.l.b16 %v2432
  %v2534 = vunpack.c.l.b16 %v2433
  %v2535 = vunpack.c.l.b16 %v2434
  %v2536 = vunpack.c.l.b16 %v2435
  %v2537 = vunpack.c.l.b16 %v2436
  %v2538 = vunpack.c.l.b16 %v2437
  %v2539 = vunpack.c.l.b16 %v2438
  %v2540 = vunpack.c.l.b16 %v2439
  %v2541 = vunpack.c.l.b16 %v2440
  %v2542 = vunpack.c.l.b16 %v2441
  %v2543 = vunpack.c.l.b16 %v2442
  %v2544 = vunpack.c.l.b16 %v2443
  %v2545 = vunpack.c.l.b16 %v2444
  %v2546 = vunpack.c.l.b16 %v2445
  %v2547 = vunpack.c.l.b16 %v2446
  %v2548 = vunpack.c.l.b16 %v2447
  %v2549 = vpack.c.b16 %v2502, %v2501
  %v2550 = vpack.c.b16 %v2504, %v2503
  %v2551 = vpack.c.b16 %v2506, %v2505
  %v2552 = vpack.c.b16 %v2508, %v2507
  %v2553 = vpack.c.b16 %v2510, %v2509
  %v2554 = vpack.c.b16 %v2512, %v2511
  %v2555 = vpack.c.b16 %v2514, %v2513
  %v2556 = vpack.c.b16 %v2516, %v2515
  %v2557 = vpack.c.b16 %v2518, %v2517
  %v2558 = vpack.c.b16 %v2520, %v2519
  %v2559 = vpack.c.b16 %v2522, %v2521
  %v2560 = vpack.c.b16 %v2524, %v2523
  %v2561 = vpack.c.b16 %v2526, %v2525
  %v2562 = vpack.c.b16 %v2528, %v2527
  %v2563 = vpack.c.b16 %v2530, %v2529
  %v2564 = vpack.c.b16 %v2532, %v2531
  %v2565 = vpack.c.b16 %v2534, %v2533
  %v2566 = vpack.c.b16 %v2536, %v2535
  %v2567 = vpack.c.b16 %v2538, %v2537
  %v2568 = vpack.c.b16 %v2540, %v2539
  %v2569 = vpack.c.b16 %v2542, %v2541
  %v2570 = vpack.c.b16 %v2544, %v2543
  %v2571 = vpack.c.b16 %v2546, %v2545
  %v2572 = vpack.c.b16 %v2548, %v2547
  %2597 = vmatpush.bf16.msra.mxu0 %v2556
  %2598 = vmatpush.bf16.msra.mxu0 %v2555
  %2599 = vmatpush.bf16.msra.mxu0 %v2554
  %2600 = vmatpush.bf16.msra.mxu0 %v2553
  %2601 = vmatpush.bf16.msra.mxu0 %v2552
  %2602 = vmatpush.bf16.msra.mxu0 %v2551
  %2603 = vmatpush.bf16.msra.mxu0 %v2550
  %2604 = vmatpush.bf16.msra.mxu0 %v2549
  %2605 = vmatmul.bf16.gmra.mxu0 %v2387
  %v2606 = vpop.f32.mrf.mxu0
  %v2607 = vadd.f32 %v2451, %v2606
  %v2608 = vpop.f32.mrf.mxu0
  %v2609 = vadd.f32 %v2451, %v2608
  %2610 = vmatmul.bf16.gmra.mxu0 %v2388
  %v2611 = vpop.f32.mrf.mxu0
  %v2612 = vadd.f32 %v2451, %v2611
  %v2613 = vpop.f32.mrf.mxu0
  %v2614 = vadd.f32 %v2451, %v2613
  %2615 = vdwg.mxu0
  %2616 = vmatpush.bf16.msra.mxu0 %v2564
  %2617 = vmatpush.bf16.msra.mxu0 %v2563
  %2618 = vmatpush.bf16.msra.mxu0 %v2562
  %2619 = vmatpush.bf16.msra.mxu0 %v2561
  %2620 = vmatpush.bf16.msra.mxu0 %v2560
  %2621 = vmatpush.bf16.msra.mxu0 %v2559
  %2622 = vmatpush.bf16.msra.mxu0 %v2558
  %2623 = vmatpush.bf16.msra.mxu0 %v2557
  %2624 = vmatmul.bf16.gmra.mxu0 %v2369
  %v2625 = vpop.f32.mrf.mxu0
  %v2626 = vadd.f32 %v2607, %v2625
  %v2627 = vpop.f32.mrf.mxu0
  %v2628 = vadd.f32 %v2609, %v2627
  %2629 = vmatmul.bf16.gmra.mxu0 %v2370
  %v2630 = vpop.f32.mrf.mxu0
  %v2631 = vadd.f32 %v2612, %v2630
  %v2632 = vpop.f32.mrf.mxu0
  %v2633 = vadd.f32 %v2614, %v2632
  %2634 = vdwg.mxu0
  %2635 = vmatpush.bf16.msra.mxu0 %v2572
  %2636 = vmatpush.bf16.msra.mxu0 %v2571
  %2637 = vmatpush.bf16.msra.mxu0 %v2570
  %2638 = vmatpush.bf16.msra.mxu0 %v2569
  %2639 = vmatpush.bf16.msra.mxu0 %v2568
  %2640 = vmatpush.bf16.msra.mxu0 %v2567
  %2641 = vmatpush.bf16.msra.mxu0 %v2566
  %2642 = vmatpush.bf16.msra.mxu0 %v2565
  %2643 = vmatmul.bf16.gmra.mxu0 %v2395
  %v2644 = vpop.f32.mrf.mxu0
  %v2645 = vadd.f32 %v2626, %v2644
  %v2646 = vpop.f32.mrf.mxu0
  %v2647 = vadd.f32 %v2628, %v2646
  %2648 = vmatmul.bf16.gmra.mxu0 %v2396
  %v2649 = vpop.f32.mrf.mxu0
  %v2650 = vadd.f32 %v2631, %v2649
  %v2651 = vpop.f32.mrf.mxu0
  %v2652 = vadd.f32 %v2633, %v2651
  %2653 = vdwg.mxu0
  %v2654 = vmax.f32 %v2645, 0.0
  %v2655 = vmax.f32 %v2647, 0.0
  %v2656 = vmax.f32 %v2650, 0.0
  %v2657 = vmax.f32 %v2652, 0.0
  %v2658 = vpack.c.bf16 %v2654, %v2654
  %v2659 = vpack.c.bf16 %v2655, %v2655
  %v2660 = vpack.c.bf16 %v2656, %v2656
  %v2661 = vpack.c.bf16 %v2657, %v2657
  %v2666 = vunpack.c.l.b16 %v2658
  %v2667 = vunpack.c.l.b16 %v2659
  %v2668 = vunpack.c.l.b16 %v2660
  %v2669 = vunpack.c.l.b16 %v2661
  %v2670 = vpack.c.b16 %v2667, %v2666
  %v2671 = vpack.c.b16 %v2669, %v2668
  %v2673 = vshrl.u32 %v2670, 16
  %v2675 = vrot.slane %v2673, 7
  %v2676 = vshll.u32 %v2670, 16
  %v2678 = vor.u32 %v2675, %v2676
  %v2680 = vshrl.u32 %v2671, 16
  %v2682 = vrot.slane %v2680, 7
  %v2683 = vshll.u32 %v2671, 16
  %v2685 = vor.u32 %v2682, %v2683
  %v2688 = vsel %vm54, 0, %v2678
  %v2689 = vsel %vm54, 0, %v2685
  %v2690 = vrot.slane %v2676, 1
  %v2691 = vor.u32 %v2673, %v2690
  %v2692 = vrot.slane %v2683, 1
  %v2693 = vor.u32 %v2680, %v2692
  %v2696 = vsel %vm65, %v2691, 0
  %v2697 = vsel %vm65, %v2693, 0
  %s2700 = scalar_lea.vmem %s2, 1728
  %v2701 = vld [vmem:[%s2700] sm:$0xf]
  %v2702 = vld [vmem:[%s2700 + $0x4] sm:$0xf]
  %v2703 = vld [vmem:[%s2700 + $0x8] sm:$0xf]
  %v2704 = vld [vmem:[%s2700 + $0xc] sm:$0xf]
  %v2705 = vld [vmem:[%s2700 + $0x10] sm:$0xf]
  %v2706 = vld [vmem:[%s2700 + $0x14] sm:$0xf]
  %v2707 = vld [vmem:[%s2700 + $0x18] sm:$0xf]
  %v2708 = vld [vmem:[%s2700 + $0x1c] sm:$0xf]
  %v2709 = vld [vmem:[%s2700 + $0x20] sm:$0xf]
  %v2710 = vld [vmem:[%s2700 + $0x24] sm:$0xf]
  %v2711 = vld [vmem:[%s2700 + $0x28] sm:$0xf]
  %v2712 = vld [vmem:[%s2700 + $0x2c] sm:$0xf]
  %v2713 = vld [vmem:[%s2700 + $0x30] sm:$0xf]
  %v2714 = vld [vmem:[%s2700 + $0x34] sm:$0xf]
  %v2715 = vld [vmem:[%s2700 + $0x38] sm:$0xf]
  %v2716 = vld [vmem:[%s2700 + $0x3c] sm:$0xf]
  %v2717 = vld [vmem:[%s2700 + $0x40] sm:$0xf]
  %v2718 = vld [vmem:[%s2700 + $0x44] sm:$0xf]
  %v2719 = vld [vmem:[%s2700 + $0x48] sm:$0xf]
  %v2720 = vld [vmem:[%s2700 + $0x4c] sm:$0xf]
  %v2721 = vld [vmem:[%s2700 + $0x50] sm:$0xf]
  %v2722 = vld [vmem:[%s2700 + $0x54] sm:$0xf]
  %v2723 = vld [vmem:[%s2700 + $0x58] sm:$0xf]
  %v2724 = vld [vmem:[%s2700 + $0x5c] sm:$0xf]
  %v2725 = vld [vmem:[%s2700 + $0x60] sm:$0xf]
  %v2726 = vld [vmem:[%s2700 + $0x64] sm:$0xf]
  %v2727 = vld [vmem:[%s2700 + $0x68] sm:$0xf]
  %v2728 = vld [vmem:[%s2700 + $0x6c] sm:$0xf]
  %v2729 = vld [vmem:[%s2700 + $0x70] sm:$0xf]
  %v2730 = vld [vmem:[%s2700 + $0x74] sm:$0xf]
  %v2731 = vld [vmem:[%s2700 + $0x78] sm:$0xf]
  %v2732 = vld [vmem:[%s2700 + $0x7c] sm:$0xf]
  %v2733 = vld [vmem:[%s2700 + $0x80] sm:$0xf]
  %v2734 = vld [vmem:[%s2700 + $0x84] sm:$0xf]
  %v2735 = vld [vmem:[%s2700 + $0x88] sm:$0xf]
  %v2736 = vld [vmem:[%s2700 + $0x8c] sm:$0xf]
  %v2737 = vld [vmem:[%s2700 + $0x90] sm:$0xf]
  %v2738 = vld [vmem:[%s2700 + $0x94] sm:$0xf]
  %v2739 = vld [vmem:[%s2700 + $0x98] sm:$0xf]
  %v2740 = vld [vmem:[%s2700 + $0x9c] sm:$0xf]
  %v2741 = vld [vmem:[%s2700 + $0xa0] sm:$0xf]
  %v2742 = vld [vmem:[%s2700 + $0xa4] sm:$0xf]
  %v2743 = vld [vmem:[%s2700 + $0xa8] sm:$0xf]
  %v2744 = vld [vmem:[%s2700 + $0xac] sm:$0xf]
  %v2745 = vld [vmem:[%s2700 + $0xb0] sm:$0xf]
  %v2746 = vld [vmem:[%s2700 + $0xb4] sm:$0xf]
  %v2747 = vld [vmem:[%s2700 + $0xb8] sm:$0xf]
  %v2748 = vld [vmem:[%s2700 + $0xbc] sm:$0xf]
  %s2749 = scalar_lea.vmem %s3, 9
  %v2750 = vld [vmem:[%s2749] sm:$0x1]
  %v2752 = vperm.slane %v2750, 0
  %v2802 = vunpack.c.l.b16 %v2701
  %v2803 = vunpack.c.l.b16 %v2702
  %v2804 = vunpack.c.l.b16 %v2703
  %v2805 = vunpack.c.l.b16 %v2704
  %v2806 = vunpack.c.l.b16 %v2705
  %v2807 = vunpack.c.l.b16 %v2706
  %v2808 = vunpack.c.l.b16 %v2707
  %v2809 = vunpack.c.l.b16 %v2708
  %v2810 = vunpack.c.l.b16 %v2709
  %v2811 = vunpack.c.l.b16 %v2710
  %v2812 = vunpack.c.l.b16 %v2711
  %v2813 = vunpack.c.l.b16 %v2712
  %v2814 = vunpack.c.l.b16 %v2713
  %v2815 = vunpack.c.l.b16 %v2714
  %v2816 = vunpack.c.l.b16 %v2715
  %v2817 = vunpack.c.l.b16 %v2716
  %v2818 = vunpack.c.l.b16 %v2717
  %v2819 = vunpack.c.l.b16 %v2718
  %v2820 = vunpack.c.l.b16 %v2719
  %v2821 = vunpack.c.l.b16 %v2720
  %v2822 = vunpack.c.l.b16 %v2721
  %v2823 = vunpack.c.l.b16 %v2722
  %v2824 = vunpack.c.l.b16 %v2723
  %v2825 = vunpack.c.l.b16 %v2724
  %v2826 = vunpack.c.l.b16 %v2725
  %v2827 = vunpack.c.l.b16 %v2726
  %v2828 = vunpack.c.l.b16 %v2727
  %v2829 = vunpack.c.l.b16 %v2728
  %v2830 = vunpack.c.l.b16 %v2729
  %v2831 = vunpack.c.l.b16 %v2730
  %v2832 = vunpack.c.l.b16 %v2731
  %v2833 = vunpack.c.l.b16 %v2732
  %v2834 = vunpack.c.l.b16 %v2733
  %v2835 = vunpack.c.l.b16 %v2734
  %v2836 = vunpack.c.l.b16 %v2735
  %v2837 = vunpack.c.l.b16 %v2736
  %v2838 = vunpack.c.l.b16 %v2737
  %v2839 = vunpack.c.l.b16 %v2738
  %v2840 = vunpack.c.l.b16 %v2739
  %v2841 = vunpack.c.l.b16 %v2740
  %v2842 = vunpack.c.l.b16 %v2741
  %v2843 = vunpack.c.l.b16 %v2742
  %v2844 = vunpack.c.l.b16 %v2743
  %v2845 = vunpack.c.l.b16 %v2744
  %v2846 = vunpack.c.l.b16 %v2745
  %v2847 = vunpack.c.l.b16 %v2746
  %v2848 = vunpack.c.l.b16 %v2747
  %v2849 = vunpack.c.l.b16 %v2748
  %v2850 = vpack.c.b16 %v2803, %v2802
  %v2851 = vpack.c.b16 %v2805, %v2804
  %v2852 = vpack.c.b16 %v2807, %v2806
  %v2853 = vpack.c.b16 %v2809, %v2808
  %v2854 = vpack.c.b16 %v2811, %v2810
  %v2855 = vpack.c.b16 %v2813, %v2812
  %v2856 = vpack.c.b16 %v2815, %v2814
  %v2857 = vpack.c.b16 %v2817, %v2816
  %v2858 = vpack.c.b16 %v2819, %v2818
  %v2859 = vpack.c.b16 %v2821, %v2820
  %v2860 = vpack.c.b16 %v2823, %v2822
  %v2861 = vpack.c.b16 %v2825, %v2824
  %v2862 = vpack.c.b16 %v2827, %v2826
  %v2863 = vpack.c.b16 %v2829, %v2828
  %v2864 = vpack.c.b16 %v2831, %v2830
  %v2865 = vpack.c.b16 %v2833, %v2832
  %v2866 = vpack.c.b16 %v2835, %v2834
  %v2867 = vpack.c.b16 %v2837, %v2836
  %v2868 = vpack.c.b16 %v2839, %v2838
  %v2869 = vpack.c.b16 %v2841, %v2840
  %v2870 = vpack.c.b16 %v2843, %v2842
  %v2871 = vpack.c.b16 %v2845, %v2844
  %v2872 = vpack.c.b16 %v2847, %v2846
  %v2873 = vpack.c.b16 %v2849, %v2848
  %2898 = vmatpush.bf16.msra.mxu0 %v2857
  %2899 = vmatpush.bf16.msra.mxu0 %v2856
  %2900 = vmatpush.bf16.msra.mxu0 %v2855
  %2901 = vmatpush.bf16.msra.mxu0 %v2854
  %2902 = vmatpush.bf16.msra.mxu0 %v2853
  %2903 = vmatpush.bf16.msra.mxu0 %v2852
  %2904 = vmatpush.bf16.msra.mxu0 %v2851
  %2905 = vmatpush.bf16.msra.mxu0 %v2850
  %2906 = vmatmul.bf16.gmra.mxu0 %v2688
  %v2907 = vpop.f32.mrf.mxu0
  %v2908 = vadd.f32 %v2752, %v2907
  %v2909 = vpop.f32.mrf.mxu0
  %v2910 = vadd.f32 %v2752, %v2909
  %2911 = vmatmul.bf16.gmra.mxu0 %v2689
  %v2912 = vpop.f32.mrf.mxu0
  %v2913 = vadd.f32 %v2752, %v2912
  %v2914 = vpop.f32.mrf.mxu0
  %v2915 = vadd.f32 %v2752, %v2914
  %2916 = vdwg.mxu0
  %2917 = vmatpush.bf16.msra.mxu0 %v2865
  %2918 = vmatpush.bf16.msra.mxu0 %v2864
  %2919 = vmatpush.bf16.msra.mxu0 %v2863
  %2920 = vmatpush.bf16.msra.mxu0 %v2862
  %2921 = vmatpush.bf16.msra.mxu0 %v2861
  %2922 = vmatpush.bf16.msra.mxu0 %v2860
  %2923 = vmatpush.bf16.msra.mxu0 %v2859
  %2924 = vmatpush.bf16.msra.mxu0 %v2858
  %2925 = vmatmul.bf16.gmra.mxu0 %v2670
  %v2926 = vpop.f32.mrf.mxu0
  %v2927 = vadd.f32 %v2908, %v2926
  %v2928 = vpop.f32.mrf.mxu0
  %v2929 = vadd.f32 %v2910, %v2928
  %2930 = vmatmul.bf16.gmra.mxu0 %v2671
  %v2931 = vpop.f32.mrf.mxu0
  %v2932 = vadd.f32 %v2913, %v2931
  %v2933 = vpop.f32.mrf.mxu0
  %v2934 = vadd.f32 %v2915, %v2933
  %2935 = vdwg.mxu0
  %2936 = vmatpush.bf16.msra.mxu0 %v2873
  %2937 = vmatpush.bf16.msra.mxu0 %v2872
  %2938 = vmatpush.bf16.msra.mxu0 %v2871
  %2939 = vmatpush.bf16.msra.mxu0 %v2870
  %2940 = vmatpush.bf16.msra.mxu0 %v2869
  %2941 = vmatpush.bf16.msra.mxu0 %v2868
  %2942 = vmatpush.bf16.msra.mxu0 %v2867
  %2943 = vmatpush.bf16.msra.mxu0 %v2866
  %2944 = vmatmul.bf16.gmra.mxu0 %v2696
  %v2945 = vpop.f32.mrf.mxu0
  %v2946 = vadd.f32 %v2927, %v2945
  %v2947 = vpop.f32.mrf.mxu0
  %v2948 = vadd.f32 %v2929, %v2947
  %2949 = vmatmul.bf16.gmra.mxu0 %v2697
  %v2950 = vpop.f32.mrf.mxu0
  %v2951 = vadd.f32 %v2932, %v2950
  %v2952 = vpop.f32.mrf.mxu0
  %v2953 = vadd.f32 %v2934, %v2952
  %2954 = vdwg.mxu0
  %v2955 = vadd.f32 %v2353, %v2946
  %v2956 = vadd.f32 %v2354, %v2948
  %v2957 = vadd.f32 %v2355, %v2951
  %v2958 = vadd.f32 %v2356, %v2953
  %v2959 = vpack.c.bf16 %v2955, %v2955
  %v2960 = vpack.c.bf16 %v2956, %v2956
  %v2961 = vpack.c.bf16 %v2957, %v2957
  %v2962 = vpack.c.bf16 %v2958, %v2958
  %v2967 = vunpack.c.l.b16 %v2959
  %v2968 = vunpack.c.l.b16 %v2960
  %v2969 = vunpack.c.l.b16 %v2961
  %v2970 = vunpack.c.l.b16 %v2962
  %v2971 = vpack.c.b16 %v2968, %v2967
  %v2972 = vpack.c.b16 %v2970, %v2969
  %v2974 = vshrl.u32 %v2971, 16
  %v2976 = vrot.slane %v2974, 7
  %v2977 = vshll.u32 %v2971, 16
  %v2979 = vor.u32 %v2976, %v2977
  %v2981 = vshrl.u32 %v2972, 16
  %v2983 = vrot.slane %v2981, 7
  %v2984 = vshll.u32 %v2972, 16
  %v2986 = vor.u32 %v2983, %v2984
  %v2989 = vsel %vm54, 0, %v2979
  %v2990 = vsel %vm54, 0, %v2986
  %v2991 = vrot.slane %v2977, 1
  %v2992 = vor.u32 %v2974, %v2991
  %v2993 = vrot.slane %v2984, 1
  %v2994 = vor.u32 %v2981, %v2993
  %v2997 = vsel %vm65, %v2992, 0
  %v2998 = vsel %vm65, %v2994, 0
  %s3001 = scalar_lea.vmem %s2, 1920
  %v3002 = vld [vmem:[%s3001] sm:$0xf]
  %v3003 = vld [vmem:[%s3001 + $0x4] sm:$0xf]
  %v3004 = vld [vmem:[%s3001 + $0x8] sm:$0xf]
  %v3005 = vld [vmem:[%s3001 + $0xc] sm:$0xf]
  %v3006 = vld [vmem:[%s3001 + $0x10] sm:$0xf]
  %v3007 = vld [vmem:[%s3001 + $0x14] sm:$0xf]
  %v3008 = vld [vmem:[%s3001 + $0x18] sm:$0xf]
  %v3009 = vld [vmem:[%s3001 + $0x1c] sm:$0xf]
  %v3010 = vld [vmem:[%s3001 + $0x20] sm:$0xf]
  %v3011 = vld [vmem:[%s3001 + $0x24] sm:$0xf]
  %v3012 = vld [vmem:[%s3001 + $0x28] sm:$0xf]
  %v3013 = vld [vmem:[%s3001 + $0x2c] sm:$0xf]
  %v3014 = vld [vmem:[%s3001 + $0x30] sm:$0xf]
  %v3015 = vld [vmem:[%s3001 + $0x34] sm:$0xf]
  %v3016 = vld [vmem:[%s3001 + $0x38] sm:$0xf]
  %v3017 = vld [vmem:[%s3001 + $0x3c] sm:$0xf]
  %v3018 = vld [vmem:[%s3001 + $0x40] sm:$0xf]
  %v3019 = vld [vmem:[%s3001 + $0x44] sm:$0xf]
  %v3020 = vld [vmem:[%s3001 + $0x48] sm:$0xf]
  %v3021 = vld [vmem:[%s3001 + $0x4c] sm:$0xf]
  %v3022 = vld [vmem:[%s3001 + $0x50] sm:$0xf]
  %v3023 = vld [vmem:[%s3001 + $0x54] sm:$0xf]
  %v3024 = vld [vmem:[%s3001 + $0x58] sm:$0xf]
  %v3025 = vld [vmem:[%s3001 + $0x5c] sm:$0xf]
  %v3026 = vld [vmem:[%s3001 + $0x60] sm:$0xf]
  %v3027 = vld [vmem:[%s3001 + $0x64] sm:$0xf]
  %v3028 = vld [vmem:[%s3001 + $0x68] sm:$0xf]
  %v3029 = vld [vmem:[%s3001 + $0x6c] sm:$0xf]
  %v3030 = vld [vmem:[%s3001 + $0x70] sm:$0xf]
  %v3031 = vld [vmem:[%s3001 + $0x74] sm:$0xf]
  %v3032 = vld [vmem:[%s3001 + $0x78] sm:$0xf]
  %v3033 = vld [vmem:[%s3001 + $0x7c] sm:$0xf]
  %v3034 = vld [vmem:[%s3001 + $0x80] sm:$0xf]
  %v3035 = vld [vmem:[%s3001 + $0x84] sm:$0xf]
  %v3036 = vld [vmem:[%s3001 + $0x88] sm:$0xf]
  %v3037 = vld [vmem:[%s3001 + $0x8c] sm:$0xf]
  %v3038 = vld [vmem:[%s3001 + $0x90] sm:$0xf]
  %v3039 = vld [vmem:[%s3001 + $0x94] sm:$0xf]
  %v3040 = vld [vmem:[%s3001 + $0x98] sm:$0xf]
  %v3041 = vld [vmem:[%s3001 + $0x9c] sm:$0xf]
  %v3042 = vld [vmem:[%s3001 + $0xa0] sm:$0xf]
  %v3043 = vld [vmem:[%s3001 + $0xa4] sm:$0xf]
  %v3044 = vld [vmem:[%s3001 + $0xa8] sm:$0xf]
  %v3045 = vld [vmem:[%s3001 + $0xac] sm:$0xf]
  %v3046 = vld [vmem:[%s3001 + $0xb0] sm:$0xf]
  %v3047 = vld [vmem:[%s3001 + $0xb4] sm:$0xf]
  %v3048 = vld [vmem:[%s3001 + $0xb8] sm:$0xf]
  %v3049 = vld [vmem:[%s3001 + $0xbc] sm:$0xf]
  %s3050 = scalar_lea.vmem %s3, 10
  %v3051 = vld [vmem:[%s3050] sm:$0x1]
  %v3053 = vperm.slane %v3051, 0
  %v3103 = vunpack.c.l.b16 %v3002
  %v3104 = vunpack.c.l.b16 %v3003
  %v3105 = vunpack.c.l.b16 %v3004
  %v3106 = vunpack.c.l.b16 %v3005
  %v3107 = vunpack.c.l.b16 %v3006
  %v3108 = vunpack.c.l.b16 %v3007
  %v3109 = vunpack.c.l.b16 %v3008
  %v3110 = vunpack.c.l.b16 %v3009
  %v3111 = vunpack.c.l.b16 %v3010
  %v3112 = vunpack.c.l.b16 %v3011
  %v3113 = vunpack.c.l.b16 %v3012
  %v3114 = vunpack.c.l.b16 %v3013
  %v3115 = vunpack.c.l.b16 %v3014
  %v3116 = vunpack.c.l.b16 %v3015
  %v3117 = vunpack.c.l.b16 %v3016
  %v3118 = vunpack.c.l.b16 %v3017
  %v3119 = vunpack.c.l.b16 %v3018
  %v3120 = vunpack.c.l.b16 %v3019
  %v3121 = vunpack.c.l.b16 %v3020
  %v3122 = vunpack.c.l.b16 %v3021
  %v3123 = vunpack.c.l.b16 %v3022
  %v3124 = vunpack.c.l.b16 %v3023
  %v3125 = vunpack.c.l.b16 %v3024
  %v3126 = vunpack.c.l.b16 %v3025
  %v3127 = vunpack.c.l.b16 %v3026
  %v3128 = vunpack.c.l.b16 %v3027
  %v3129 = vunpack.c.l.b16 %v3028
  %v3130 = vunpack.c.l.b16 %v3029
  %v3131 = vunpack.c.l.b16 %v3030
  %v3132 = vunpack.c.l.b16 %v3031
  %v3133 = vunpack.c.l.b16 %v3032
  %v3134 = vunpack.c.l.b16 %v3033
  %v3135 = vunpack.c.l.b16 %v3034
  %v3136 = vunpack.c.l.b16 %v3035
  %v3137 = vunpack.c.l.b16 %v3036
  %v3138 = vunpack.c.l.b16 %v3037
  %v3139 = vunpack.c.l.b16 %v3038
  %v3140 = vunpack.c.l.b16 %v3039
  %v3141 = vunpack.c.l.b16 %v3040
  %v3142 = vunpack.c.l.b16 %v3041
  %v3143 = vunpack.c.l.b16 %v3042
  %v3144 = vunpack.c.l.b16 %v3043
  %v3145 = vunpack.c.l.b16 %v3044
  %v3146 = vunpack.c.l.b16 %v3045
  %v3147 = vunpack.c.l.b16 %v3046
  %v3148 = vunpack.c.l.b16 %v3047
  %v3149 = vunpack.c.l.b16 %v3048
  %v3150 = vunpack.c.l.b16 %v3049
  %v3151 = vpack.c.b16 %v3104, %v3103
  %v3152 = vpack.c.b16 %v3106, %v3105
  %v3153 = vpack.c.b16 %v3108, %v3107
  %v3154 = vpack.c.b16 %v3110, %v3109
  %v3155 = vpack.c.b16 %v3112, %v3111
  %v3156 = vpack.c.b16 %v3114, %v3113
  %v3157 = vpack.c.b16 %v3116, %v3115
  %v3158 = vpack.c.b16 %v3118, %v3117
  %v3159 = vpack.c.b16 %v3120, %v3119
  %v3160 = vpack.c.b16 %v3122, %v3121
  %v3161 = vpack.c.b16 %v3124, %v3123
  %v3162 = vpack.c.b16 %v3126, %v3125
  %v3163 = vpack.c.b16 %v3128, %v3127
  %v3164 = vpack.c.b16 %v3130, %v3129
  %v3165 = vpack.c.b16 %v3132, %v3131
  %v3166 = vpack.c.b16 %v3134, %v3133
  %v3167 = vpack.c.b16 %v3136, %v3135
  %v3168 = vpack.c.b16 %v3138, %v3137
  %v3169 = vpack.c.b16 %v3140, %v3139
  %v3170 = vpack.c.b16 %v3142, %v3141
  %v3171 = vpack.c.b16 %v3144, %v3143
  %v3172 = vpack.c.b16 %v3146, %v3145
  %v3173 = vpack.c.b16 %v3148, %v3147
  %v3174 = vpack.c.b16 %v3150, %v3149
  %3199 = vmatpush.bf16.msra.mxu0 %v3158
  %3200 = vmatpush.bf16.msra.mxu0 %v3157
  %3201 = vmatpush.bf16.msra.mxu0 %v3156
  %3202 = vmatpush.bf16.msra.mxu0 %v3155
  %3203 = vmatpush.bf16.msra.mxu0 %v3154
  %3204 = vmatpush.bf16.msra.mxu0 %v3153
  %3205 = vmatpush.bf16.msra.mxu0 %v3152
  %3206 = vmatpush.bf16.msra.mxu0 %v3151
  %3207 = vmatmul.bf16.gmra.mxu0 %v2989
  %v3208 = vpop.f32.mrf.mxu0
  %v3209 = vadd.f32 %v3053, %v3208
  %v3210 = vpop.f32.mrf.mxu0
  %v3211 = vadd.f32 %v3053, %v3210
  %3212 = vmatmul.bf16.gmra.mxu0 %v2990
  %v3213 = vpop.f32.mrf.mxu0
  %v3214 = vadd.f32 %v3053, %v3213
  %v3215 = vpop.f32.mrf.mxu0
  %v3216 = vadd.f32 %v3053, %v3215
  %3217 = vdwg.mxu0
  %3218 = vmatpush.bf16.msra.mxu0 %v3166
  %3219 = vmatpush.bf16.msra.mxu0 %v3165
  %3220 = vmatpush.bf16.msra.mxu0 %v3164
  %3221 = vmatpush.bf16.msra.mxu0 %v3163
  %3222 = vmatpush.bf16.msra.mxu0 %v3162
  %3223 = vmatpush.bf16.msra.mxu0 %v3161
  %3224 = vmatpush.bf16.msra.mxu0 %v3160
  %3225 = vmatpush.bf16.msra.mxu0 %v3159
  %3226 = vmatmul.bf16.gmra.mxu0 %v2971
  %v3227 = vpop.f32.mrf.mxu0
  %v3228 = vadd.f32 %v3209, %v3227
  %v3229 = vpop.f32.mrf.mxu0
  %v3230 = vadd.f32 %v3211, %v3229
  %3231 = vmatmul.bf16.gmra.mxu0 %v2972
  %v3232 = vpop.f32.mrf.mxu0
  %v3233 = vadd.f32 %v3214, %v3232
  %v3234 = vpop.f32.mrf.mxu0
  %v3235 = vadd.f32 %v3216, %v3234
  %3236 = vdwg.mxu0
  %3237 = vmatpush.bf16.msra.mxu0 %v3174
  %3238 = vmatpush.bf16.msra.mxu0 %v3173
  %3239 = vmatpush.bf16.msra.mxu0 %v3172
  %3240 = vmatpush.bf16.msra.mxu0 %v3171
  %3241 = vmatpush.bf16.msra.mxu0 %v3170
  %3242 = vmatpush.bf16.msra.mxu0 %v3169
  %3243 = vmatpush.bf16.msra.mxu0 %v3168
  %3244 = vmatpush.bf16.msra.mxu0 %v3167
  %3245 = vmatmul.bf16.gmra.mxu0 %v2997
  %v3246 = vpop.f32.mrf.mxu0
  %v3247 = vadd.f32 %v3228, %v3246
  %v3248 = vpop.f32.mrf.mxu0
  %v3249 = vadd.f32 %v3230, %v3248
  %3250 = vmatmul.bf16.gmra.mxu0 %v2998
  %v3251 = vpop.f32.mrf.mxu0
  %v3252 = vadd.f32 %v3233, %v3251
  %v3253 = vpop.f32.mrf.mxu0
  %v3254 = vadd.f32 %v3235, %v3253
  %3255 = vdwg.mxu0
  %v3256 = vadd.f32 %v1751, %v3247
  %v3257 = vadd.f32 %v1752, %v3249
  %v3258 = vadd.f32 %v1753, %v3252
  %v3259 = vadd.f32 %v1754, %v3254
  %v3260 = vpack.c.bf16 %v3256, %v3256
  %v3261 = vpack.c.bf16 %v3257, %v3257
  %v3262 = vpack.c.bf16 %v3258, %v3258
  %v3263 = vpack.c.bf16 %v3259, %v3259
  %v3268 = vunpack.c.l.b16 %v3260
  %v3269 = vunpack.c.l.b16 %v3261
  %v3270 = vunpack.c.l.b16 %v3262
  %v3271 = vunpack.c.l.b16 %v3263
  %v3272 = vpack.c.b16 %v3269, %v3268
  %v3273 = vpack.c.b16 %v3271, %v3270
  %v3275 = vshrl.u32 %v3272, 16
  %v3277 = vrot.slane %v3275, 7
  %v3278 = vshll.u32 %v3272, 16
  %v3280 = vor.u32 %v3277, %v3278
  %v3282 = vshrl.u32 %v3273, 16
  %v3284 = vrot.slane %v3282, 7
  %v3285 = vshll.u32 %v3273, 16
  %v3287 = vor.u32 %v3284, %v3285
  %v3290 = vsel %vm54, 0, %v3280
  %v3291 = vsel %vm54, 0, %v3287
  %v3292 = vrot.slane %v3278, 1
  %v3293 = vor.u32 %v3275, %v3292
  %v3294 = vrot.slane %v3285, 1
  %v3295 = vor.u32 %v3282, %v3294
  %v3298 = vsel %vm65, %v3293, 0
  %v3299 = vsel %vm65, %v3295, 0
  %s3302 = scalar_lea.vmem %s2, 2112
  %v3303 = vld [vmem:[%s3302] sm:$0xf]
  %v3304 = vld [vmem:[%s3302 + $0x4] sm:$0xf]
  %v3305 = vld [vmem:[%s3302 + $0x8] sm:$0xf]
  %v3306 = vld [vmem:[%s3302 + $0xc] sm:$0xf]
  %v3307 = vld [vmem:[%s3302 + $0x10] sm:$0xf]
  %v3308 = vld [vmem:[%s3302 + $0x14] sm:$0xf]
  %v3309 = vld [vmem:[%s3302 + $0x18] sm:$0xf]
  %v3310 = vld [vmem:[%s3302 + $0x1c] sm:$0xf]
  %v3311 = vld [vmem:[%s3302 + $0x20] sm:$0xf]
  %v3312 = vld [vmem:[%s3302 + $0x24] sm:$0xf]
  %v3313 = vld [vmem:[%s3302 + $0x28] sm:$0xf]
  %v3314 = vld [vmem:[%s3302 + $0x2c] sm:$0xf]
  %v3315 = vld [vmem:[%s3302 + $0x30] sm:$0xf]
  %v3316 = vld [vmem:[%s3302 + $0x34] sm:$0xf]
  %v3317 = vld [vmem:[%s3302 + $0x38] sm:$0xf]
  %v3318 = vld [vmem:[%s3302 + $0x3c] sm:$0xf]
  %v3319 = vld [vmem:[%s3302 + $0x40] sm:$0xf]
  %v3320 = vld [vmem:[%s3302 + $0x44] sm:$0xf]
  %v3321 = vld [vmem:[%s3302 + $0x48] sm:$0xf]
  %v3322 = vld [vmem:[%s3302 + $0x4c] sm:$0xf]
  %v3323 = vld [vmem:[%s3302 + $0x50] sm:$0xf]
  %v3324 = vld [vmem:[%s3302 + $0x54] sm:$0xf]
  %v3325 = vld [vmem:[%s3302 + $0x58] sm:$0xf]
  %v3326 = vld [vmem:[%s3302 + $0x5c] sm:$0xf]
  %v3327 = vld [vmem:[%s3302 + $0x60] sm:$0xf]
  %v3328 = vld [vmem:[%s3302 + $0x64] sm:$0xf]
  %v3329 = vld [vmem:[%s3302 + $0x68] sm:$0xf]
  %v3330 = vld [vmem:[%s3302 + $0x6c] sm:$0xf]
  %v3331 = vld [vmem:[%s3302 + $0x70] sm:$0xf]
  %v3332 = vld [vmem:[%s3302 + $0x74] sm:$0xf]
  %v3333 = vld [vmem:[%s3302 + $0x78] sm:$0xf]
  %v3334 = vld [vmem:[%s3302 + $0x7c] sm:$0xf]
  %v3335 = vld [vmem:[%s3302 + $0x80] sm:$0xf]
  %v3336 = vld [vmem:[%s3302 + $0x84] sm:$0xf]
  %v3337 = vld [vmem:[%s3302 + $0x88] sm:$0xf]
  %v3338 = vld [vmem:[%s3302 + $0x8c] sm:$0xf]
  %v3339 = vld [vmem:[%s3302 + $0x90] sm:$0xf]
  %v3340 = vld [vmem:[%s3302 + $0x94] sm:$0xf]
  %v3341 = vld [vmem:[%s3302 + $0x98] sm:$0xf]
  %v3342 = vld [vmem:[%s3302 + $0x9c] sm:$0xf]
  %v3343 = vld [vmem:[%s3302 + $0xa0] sm:$0xf]
  %v3344 = vld [vmem:[%s3302 + $0xa4] sm:$0xf]
  %v3345 = vld [vmem:[%s3302 + $0xa8] sm:$0xf]
  %v3346 = vld [vmem:[%s3302 + $0xac] sm:$0xf]
  %v3347 = vld [vmem:[%s3302 + $0xb0] sm:$0xf]
  %v3348 = vld [vmem:[%s3302 + $0xb4] sm:$0xf]
  %v3349 = vld [vmem:[%s3302 + $0xb8] sm:$0xf]
  %v3350 = vld [vmem:[%s3302 + $0xbc] sm:$0xf]
  %s3351 = scalar_lea.vmem %s3, 11
  %v3352 = vld [vmem:[%s3351] sm:$0x1]
  %v3354 = vperm.slane %v3352, 0
  %v3404 = vunpack.c.l.b16 %v3303
  %v3405 = vunpack.c.l.b16 %v3304
  %v3406 = vunpack.c.l.b16 %v3305
  %v3407 = vunpack.c.l.b16 %v3306
  %v3408 = vunpack.c.l.b16 %v3307
  %v3409 = vunpack.c.l.b16 %v3308
  %v3410 = vunpack.c.l.b16 %v3309
  %v3411 = vunpack.c.l.b16 %v3310
  %v3412 = vunpack.c.l.b16 %v3311
  %v3413 = vunpack.c.l.b16 %v3312
  %v3414 = vunpack.c.l.b16 %v3313
  %v3415 = vunpack.c.l.b16 %v3314
  %v3416 = vunpack.c.l.b16 %v3315
  %v3417 = vunpack.c.l.b16 %v3316
  %v3418 = vunpack.c.l.b16 %v3317
  %v3419 = vunpack.c.l.b16 %v3318
  %v3420 = vunpack.c.l.b16 %v3319
  %v3421 = vunpack.c.l.b16 %v3320
  %v3422 = vunpack.c.l.b16 %v3321
  %v3423 = vunpack.c.l.b16 %v3322
  %v3424 = vunpack.c.l.b16 %v3323
  %v3425 = vunpack.c.l.b16 %v3324
  %v3426 = vunpack.c.l.b16 %v3325
  %v3427 = vunpack.c.l.b16 %v3326
  %v3428 = vunpack.c.l.b16 %v3327
  %v3429 = vunpack.c.l.b16 %v3328
  %v3430 = vunpack.c.l.b16 %v3329
  %v3431 = vunpack.c.l.b16 %v3330
  %v3432 = vunpack.c.l.b16 %v3331
  %v3433 = vunpack.c.l.b16 %v3332
  %v3434 = vunpack.c.l.b16 %v3333
  %v3435 = vunpack.c.l.b16 %v3334
  %v3436 = vunpack.c.l.b16 %v3335
  %v3437 = vunpack.c.l.b16 %v3336
  %v3438 = vunpack.c.l.b16 %v3337
  %v3439 = vunpack.c.l.b16 %v3338
  %v3440 = vunpack.c.l.b16 %v3339
  %v3441 = vunpack.c.l.b16 %v3340
  %v3442 = vunpack.c.l.b16 %v3341
  %v3443 = vunpack.c.l.b16 %v3342
  %v3444 = vunpack.c.l.b16 %v3343
  %v3445 = vunpack.c.l.b16 %v3344
  %v3446 = vunpack.c.l.b16 %v3345
  %v3447 = vunpack.c.l.b16 %v3346
  %v3448 = vunpack.c.l.b16 %v3347
  %v3449 = vunpack.c.l.b16 %v3348
  %v3450 = vunpack.c.l.b16 %v3349
  %v3451 = vunpack.c.l.b16 %v3350
  %v3452 = vpack.c.b16 %v3405, %v3404
  %v3453 = vpack.c.b16 %v3407, %v3406
  %v3454 = vpack.c.b16 %v3409, %v3408
  %v3455 = vpack.c.b16 %v3411, %v3410
  %v3456 = vpack.c.b16 %v3413, %v3412
  %v3457 = vpack.c.b16 %v3415, %v3414
  %v3458 = vpack.c.b16 %v3417, %v3416
  %v3459 = vpack.c.b16 %v3419, %v3418
  %v3460 = vpack.c.b16 %v3421, %v3420
  %v3461 = vpack.c.b16 %v3423, %v3422
  %v3462 = vpack.c.b16 %v3425, %v3424
  %v3463 = vpack.c.b16 %v3427, %v3426
  %v3464 = vpack.c.b16 %v3429, %v3428
  %v3465 = vpack.c.b16 %v3431, %v3430
  %v3466 = vpack.c.b16 %v3433, %v3432
  %v3467 = vpack.c.b16 %v3435, %v3434
  %v3468 = vpack.c.b16 %v3437, %v3436
  %v3469 = vpack.c.b16 %v3439, %v3438
  %v3470 = vpack.c.b16 %v3441, %v3440
  %v3471 = vpack.c.b16 %v3443, %v3442
  %v3472 = vpack.c.b16 %v3445, %v3444
  %v3473 = vpack.c.b16 %v3447, %v3446
  %v3474 = vpack.c.b16 %v3449, %v3448
  %v3475 = vpack.c.b16 %v3451, %v3450
  %3500 = vmatpush.bf16.msra.mxu0 %v3459
  %3501 = vmatpush.bf16.msra.mxu0 %v3458
  %3502 = vmatpush.bf16.msra.mxu0 %v3457
  %3503 = vmatpush.bf16.msra.mxu0 %v3456
  %3504 = vmatpush.bf16.msra.mxu0 %v3455
  %3505 = vmatpush.bf16.msra.mxu0 %v3454
  %3506 = vmatpush.bf16.msra.mxu0 %v3453
  %3507 = vmatpush.bf16.msra.mxu0 %v3452
  %3508 = vmatmul.bf16.gmra.mxu0 %v3290
  %v3509 = vpop.f32.mrf.mxu0
  %v3510 = vadd.f32 %v3354, %v3509
  %v3511 = vpop.f32.mrf.mxu0
  %v3512 = vadd.f32 %v3354, %v3511
  %3513 = vmatmul.bf16.gmra.mxu0 %v3291
  %v3514 = vpop.f32.mrf.mxu0
  %v3515 = vadd.f32 %v3354, %v3514
  %v3516 = vpop.f32.mrf.mxu0
  %v3517 = vadd.f32 %v3354, %v3516
  %3518 = vdwg.mxu0
  %3519 = vmatpush.bf16.msra.mxu0 %v3467
  %3520 = vmatpush.bf16.msra.mxu0 %v3466
  %3521 = vmatpush.bf16.msra.mxu0 %v3465
  %3522 = vmatpush.bf16.msra.mxu0 %v3464
  %3523 = vmatpush.bf16.msra.mxu0 %v3463
  %3524 = vmatpush.bf16.msra.mxu0 %v3462
  %3525 = vmatpush.bf16.msra.mxu0 %v3461
  %3526 = vmatpush.bf16.msra.mxu0 %v3460
  %3527 = vmatmul.bf16.gmra.mxu0 %v3272
  %v3528 = vpop.f32.mrf.mxu0
  %v3529 = vadd.f32 %v3510, %v3528
  %v3530 = vpop.f32.mrf.mxu0
  %v3531 = vadd.f32 %v3512, %v3530
  %3532 = vmatmul.bf16.gmra.mxu0 %v3273
  %v3533 = vpop.f32.mrf.mxu0
  %v3534 = vadd.f32 %v3515, %v3533
  %v3535 = vpop.f32.mrf.mxu0
  %v3536 = vadd.f32 %v3517, %v3535
  %3537 = vdwg.mxu0
  %3538 = vmatpush.bf16.msra.mxu0 %v3475
  %3539 = vmatpush.bf16.msra.mxu0 %v3474
  %3540 = vmatpush.bf16.msra.mxu0 %v3473
  %3541 = vmatpush.bf16.msra.mxu0 %v3472
  %3542 = vmatpush.bf16.msra.mxu0 %v3471
  %3543 = vmatpush.bf16.msra.mxu0 %v3470
  %3544 = vmatpush.bf16.msra.mxu0 %v3469
  %3545 = vmatpush.bf16.msra.mxu0 %v3468
  %3546 = vmatmul.bf16.gmra.mxu0 %v3298
  %v3547 = vpop.f32.mrf.mxu0
  %v3548 = vadd.f32 %v3529, %v3547
  %v3549 = vpop.f32.mrf.mxu0
  %v3550 = vadd.f32 %v3531, %v3549
  %3551 = vmatmul.bf16.gmra.mxu0 %v3299
  %v3552 = vpop.f32.mrf.mxu0
  %v3553 = vadd.f32 %v3534, %v3552
  %v3554 = vpop.f32.mrf.mxu0
  %v3555 = vadd.f32 %v3536, %v3554
  %3556 = vdwg.mxu0
  %v3557 = vmax.f32 %v3548, 0.0
  %v3558 = vmax.f32 %v3550, 0.0
  %v3559 = vmax.f32 %v3553, 0.0
  %v3560 = vmax.f32 %v3555, 0.0
  %v3561 = vpack.c.bf16 %v3557, %v3557
  %v3562 = vpack.c.bf16 %v3558, %v3558
  %v3563 = vpack.c.bf16 %v3559, %v3559
  %v3564 = vpack.c.bf16 %v3560, %v3560
  %v3569 = vunpack.c.l.b16 %v3561
  %v3570 = vunpack.c.l.b16 %v3562
  %v3571 = vunpack.c.l.b16 %v3563
  %v3572 = vunpack.c.l.b16 %v3564
  %v3573 = vpack.c.b16 %v3570, %v3569
  %v3574 = vpack.c.b16 %v3572, %v3571
  %v3576 = vshrl.u32 %v3573, 16
  %v3578 = vrot.slane %v3576, 7
  %v3579 = vshll.u32 %v3573, 16
  %v3581 = vor.u32 %v3578, %v3579
  %v3583 = vshrl.u32 %v3574, 16
  %v3585 = vrot.slane %v3583, 7
  %v3586 = vshll.u32 %v3574, 16
  %v3588 = vor.u32 %v3585, %v3586
  %v3591 = vsel %vm54, 0, %v3581
  %v3592 = vsel %vm54, 0, %v3588
  %v3593 = vrot.slane %v3579, 1
  %v3594 = vor.u32 %v3576, %v3593
  %v3595 = vrot.slane %v3586, 1
  %v3596 = vor.u32 %v3583, %v3595
  %v3599 = vsel %vm65, %v3594, 0
  %v3600 = vsel %vm65, %v3596, 0
  %s3603 = scalar_lea.vmem %s2, 2304
  %v3604 = vld [vmem:[%s3603] sm:$0xf]
  %v3605 = vld [vmem:[%s3603 + $0x4] sm:$0xf]
  %v3606 = vld [vmem:[%s3603 + $0x8] sm:$0xf]
  %v3607 = vld [vmem:[%s3603 + $0xc] sm:$0xf]
  %v3608 = vld [vmem:[%s3603 + $0x10] sm:$0xf]
  %v3609 = vld [vmem:[%s3603 + $0x14] sm:$0xf]
  %v3610 = vld [vmem:[%s3603 + $0x18] sm:$0xf]
  %v3611 = vld [vmem:[%s3603 + $0x1c] sm:$0xf]
  %v3612 = vld [vmem:[%s3603 + $0x20] sm:$0xf]
  %v3613 = vld [vmem:[%s3603 + $0x24] sm:$0xf]
  %v3614 = vld [vmem:[%s3603 + $0x28] sm:$0xf]
  %v3615 = vld [vmem:[%s3603 + $0x2c] sm:$0xf]
  %v3616 = vld [vmem:[%s3603 + $0x30] sm:$0xf]
  %v3617 = vld [vmem:[%s3603 + $0x34] sm:$0xf]
  %v3618 = vld [vmem:[%s3603 + $0x38] sm:$0xf]
  %v3619 = vld [vmem:[%s3603 + $0x3c] sm:$0xf]
  %v3620 = vld [vmem:[%s3603 + $0x40] sm:$0xf]
  %v3621 = vld [vmem:[%s3603 + $0x44] sm:$0xf]
  %v3622 = vld [vmem:[%s3603 + $0x48] sm:$0xf]
  %v3623 = vld [vmem:[%s3603 + $0x4c] sm:$0xf]
  %v3624 = vld [vmem:[%s3603 + $0x50] sm:$0xf]
  %v3625 = vld [vmem:[%s3603 + $0x54] sm:$0xf]
  %v3626 = vld [vmem:[%s3603 + $0x58] sm:$0xf]
  %v3627 = vld [vmem:[%s3603 + $0x5c] sm:$0xf]
  %v3628 = vld [vmem:[%s3603 + $0x60] sm:$0xf]
  %v3629 = vld [vmem:[%s3603 + $0x64] sm:$0xf]
  %v3630 = vld [vmem:[%s3603 + $0x68] sm:$0xf]
  %v3631 = vld [vmem:[%s3603 + $0x6c] sm:$0xf]
  %v3632 = vld [vmem:[%s3603 + $0x70] sm:$0xf]
  %v3633 = vld [vmem:[%s3603 + $0x74] sm:$0xf]
  %v3634 = vld [vmem:[%s3603 + $0x78] sm:$0xf]
  %v3635 = vld [vmem:[%s3603 + $0x7c] sm:$0xf]
  %v3636 = vld [vmem:[%s3603 + $0x80] sm:$0xf]
  %v3637 = vld [vmem:[%s3603 + $0x84] sm:$0xf]
  %v3638 = vld [vmem:[%s3603 + $0x88] sm:$0xf]
  %v3639 = vld [vmem:[%s3603 + $0x8c] sm:$0xf]
  %v3640 = vld [vmem:[%s3603 + $0x90] sm:$0xf]
  %v3641 = vld [vmem:[%s3603 + $0x94] sm:$0xf]
  %v3642 = vld [vmem:[%s3603 + $0x98] sm:$0xf]
  %v3643 = vld [vmem:[%s3603 + $0x9c] sm:$0xf]
  %v3644 = vld [vmem:[%s3603 + $0xa0] sm:$0xf]
  %v3645 = vld [vmem:[%s3603 + $0xa4] sm:$0xf]
  %v3646 = vld [vmem:[%s3603 + $0xa8] sm:$0xf]
  %v3647 = vld [vmem:[%s3603 + $0xac] sm:$0xf]
  %v3648 = vld [vmem:[%s3603 + $0xb0] sm:$0xf]
  %v3649 = vld [vmem:[%s3603 + $0xb4] sm:$0xf]
  %v3650 = vld [vmem:[%s3603 + $0xb8] sm:$0xf]
  %v3651 = vld [vmem:[%s3603 + $0xbc] sm:$0xf]
  %s3652 = scalar_lea.vmem %s3, 12
  %v3653 = vld [vmem:[%s3652] sm:$0x1]
  %v3655 = vperm.slane %v3653, 0
  %v3705 = vunpack.c.l.b16 %v3604
  %v3706 = vunpack.c.l.b16 %v3605
  %v3707 = vunpack.c.l.b16 %v3606
  %v3708 = vunpack.c.l.b16 %v3607
  %v3709 = vunpack.c.l.b16 %v3608
  %v3710 = vunpack.c.l.b16 %v3609
  %v3711 = vunpack.c.l.b16 %v3610
  %v3712 = vunpack.c.l.b16 %v3611
  %v3713 = vunpack.c.l.b16 %v3612
  %v3714 = vunpack.c.l.b16 %v3613
  %v3715 = vunpack.c.l.b16 %v3614
  %v3716 = vunpack.c.l.b16 %v3615
  %v3717 = vunpack.c.l.b16 %v3616
  %v3718 = vunpack.c.l.b16 %v3617
  %v3719 = vunpack.c.l.b16 %v3618
  %v3720 = vunpack.c.l.b16 %v3619
  %v3721 = vunpack.c.l.b16 %v3620
  %v3722 = vunpack.c.l.b16 %v3621
  %v3723 = vunpack.c.l.b16 %v3622
  %v3724 = vunpack.c.l.b16 %v3623
  %v3725 = vunpack.c.l.b16 %v3624
  %v3726 = vunpack.c.l.b16 %v3625
  %v3727 = vunpack.c.l.b16 %v3626
  %v3728 = vunpack.c.l.b16 %v3627
  %v3729 = vunpack.c.l.b16 %v3628
  %v3730 = vunpack.c.l.b16 %v3629
  %v3731 = vunpack.c.l.b16 %v3630
  %v3732 = vunpack.c.l.b16 %v3631
  %v3733 = vunpack.c.l.b16 %v3632
  %v3734 = vunpack.c.l.b16 %v3633
  %v3735 = vunpack.c.l.b16 %v3634
  %v3736 = vunpack.c.l.b16 %v3635
  %v3737 = vunpack.c.l.b16 %v3636
  %v3738 = vunpack.c.l.b16 %v3637
  %v3739 = vunpack.c.l.b16 %v3638
  %v3740 = vunpack.c.l.b16 %v3639
  %v3741 = vunpack.c.l.b16 %v3640
  %v3742 = vunpack.c.l.b16 %v3641
  %v3743 = vunpack.c.l.b16 %v3642
  %v3744 = vunpack.c.l.b16 %v3643
  %v3745 = vunpack.c.l.b16 %v3644
  %v3746 = vunpack.c.l.b16 %v3645
  %v3747 = vunpack.c.l.b16 %v3646
  %v3748 = vunpack.c.l.b16 %v3647
  %v3749 = vunpack.c.l.b16 %v3648
  %v3750 = vunpack.c.l.b16 %v3649
  %v3751 = vunpack.c.l.b16 %v3650
  %v3752 = vunpack.c.l.b16 %v3651
  %v3753 = vpack.c.b16 %v3706, %v3705
  %v3754 = vpack.c.b16 %v3708, %v3707
  %v3755 = vpack.c.b16 %v3710, %v3709
  %v3756 = vpack.c.b16 %v3712, %v3711
  %v3757 = vpack.c.b16 %v3714, %v3713
  %v3758 = vpack.c.b16 %v3716, %v3715
  %v3759 = vpack.c.b16 %v3718, %v3717
  %v3760 = vpack.c.b16 %v3720, %v3719
  %v3761 = vpack.c.b16 %v3722, %v3721
  %v3762 = vpack.c.b16 %v3724, %v3723
  %v3763 = vpack.c.b16 %v3726, %v3725
  %v3764 = vpack.c.b16 %v3728, %v3727
  %v3765 = vpack.c.b16 %v3730, %v3729
  %v3766 = vpack.c.b16 %v3732, %v3731
  %v3767 = vpack.c.b16 %v3734, %v3733
  %v3768 = vpack.c.b16 %v3736, %v3735
  %v3769 = vpack.c.b16 %v3738, %v3737
  %v3770 = vpack.c.b16 %v3740, %v3739
  %v3771 = vpack.c.b16 %v3742, %v3741
  %v3772 = vpack.c.b16 %v3744, %v3743
  %v3773 = vpack.c.b16 %v3746, %v3745
  %v3774 = vpack.c.b16 %v3748, %v3747
  %v3775 = vpack.c.b16 %v3750, %v3749
  %v3776 = vpack.c.b16 %v3752, %v3751
  %3801 = vmatpush.bf16.msra.mxu0 %v3760
  %3802 = vmatpush.bf16.msra.mxu0 %v3759
  %3803 = vmatpush.bf16.msra.mxu0 %v3758
  %3804 = vmatpush.bf16.msra.mxu0 %v3757
  %3805 = vmatpush.bf16.msra.mxu0 %v3756
  %3806 = vmatpush.bf16.msra.mxu0 %v3755
  %3807 = vmatpush.bf16.msra.mxu0 %v3754
  %3808 = vmatpush.bf16.msra.mxu0 %v3753
  %3809 = vmatmul.bf16.gmra.mxu0 %v3591
  %v3810 = vpop.f32.mrf.mxu0
  %v3811 = vadd.f32 %v3655, %v3810
  %v3812 = vpop.f32.mrf.mxu0
  %v3813 = vadd.f32 %v3655, %v3812
  %3814 = vmatmul.bf16.gmra.mxu0 %v3592
  %v3815 = vpop.f32.mrf.mxu0
  %v3816 = vadd.f32 %v3655, %v3815
  %v3817 = vpop.f32.mrf.mxu0
  %v3818 = vadd.f32 %v3655, %v3817
  %3819 = vdwg.mxu0
  %3820 = vmatpush.bf16.msra.mxu0 %v3768
  %3821 = vmatpush.bf16.msra.mxu0 %v3767
  %3822 = vmatpush.bf16.msra.mxu0 %v3766
  %3823 = vmatpush.bf16.msra.mxu0 %v3765
  %3824 = vmatpush.bf16.msra.mxu0 %v3764
  %3825 = vmatpush.bf16.msra.mxu0 %v3763
  %3826 = vmatpush.bf16.msra.mxu0 %v3762
  %3827 = vmatpush.bf16.msra.mxu0 %v3761
  %3828 = vmatmul.bf16.gmra.mxu0 %v3573
  %v3829 = vpop.f32.mrf.mxu0
  %v3830 = vadd.f32 %v3811, %v3829
  %v3831 = vpop.f32.mrf.mxu0
  %v3832 = vadd.f32 %v3813, %v3831
  %3833 = vmatmul.bf16.gmra.mxu0 %v3574
  %v3834 = vpop.f32.mrf.mxu0
  %v3835 = vadd.f32 %v3816, %v3834
  %v3836 = vpop.f32.mrf.mxu0
  %v3837 = vadd.f32 %v3818, %v3836
  %3838 = vdwg.mxu0
  %3839 = vmatpush.bf16.msra.mxu0 %v3776
  %3840 = vmatpush.bf16.msra.mxu0 %v3775
  %3841 = vmatpush.bf16.msra.mxu0 %v3774
  %3842 = vmatpush.bf16.msra.mxu0 %v3773
  %3843 = vmatpush.bf16.msra.mxu0 %v3772
  %3844 = vmatpush.bf16.msra.mxu0 %v3771
  %3845 = vmatpush.bf16.msra.mxu0 %v3770
  %3846 = vmatpush.bf16.msra.mxu0 %v3769
  %3847 = vmatmul.bf16.gmra.mxu0 %v3599
  %v3848 = vpop.f32.mrf.mxu0
  %v3849 = vadd.f32 %v3830, %v3848
  %v3850 = vpop.f32.mrf.mxu0
  %v3851 = vadd.f32 %v3832, %v3850
  %3852 = vmatmul.bf16.gmra.mxu0 %v3600
  %v3853 = vpop.f32.mrf.mxu0
  %v3854 = vadd.f32 %v3835, %v3853
  %v3855 = vpop.f32.mrf.mxu0
  %v3856 = vadd.f32 %v3837, %v3855
  %3857 = vdwg.mxu0
  %v3858 = vadd.f32 %v3256, %v3849
  %v3859 = vadd.f32 %v3257, %v3851
  %v3860 = vadd.f32 %v3258, %v3854
  %v3861 = vadd.f32 %v3259, %v3856
  %v3862 = vpack.c.bf16 %v3858, %v3858
  %v3863 = vpack.c.bf16 %v3859, %v3859
  %v3864 = vpack.c.bf16 %v3860, %v3860
  %v3865 = vpack.c.bf16 %v3861, %v3861
  %v3870 = vunpack.c.l.b16 %v3862
  %v3871 = vunpack.c.l.b16 %v3863
  %v3872 = vunpack.c.l.b16 %v3864
  %v3873 = vunpack.c.l.b16 %v3865
  %v3874 = vpack.c.b16 %v3871, %v3870
  %v3875 = vpack.c.b16 %v3873, %v3872
  %v3877 = vshrl.u32 %v3874, 16
  %v3879 = vrot.slane %v3877, 7
  %v3880 = vshll.u32 %v3874, 16
  %v3882 = vor.u32 %v3879, %v3880
  %v3884 = vshrl.u32 %v3875, 16
  %v3886 = vrot.slane %v3884, 7
  %v3887 = vshll.u32 %v3875, 16
  %v3889 = vor.u32 %v3886, %v3887
  %v3892 = vsel %vm54, 0, %v3882
  %v3893 = vsel %vm54, 0, %v3889
  %v3894 = vrot.slane %v3880, 1
  %v3895 = vor.u32 %v3877, %v3894
  %v3896 = vrot.slane %v3887, 1
  %v3897 = vor.u32 %v3884, %v3896
  %v3900 = vsel %vm65, %v3895, 0
  %v3901 = vsel %vm65, %v3897, 0
  %s3904 = scalar_lea.vmem %s2, 2496
  %v3905 = vld [vmem:[%s3904] sm:$0xf]
  %v3906 = vld [vmem:[%s3904 + $0x4] sm:$0xf]
  %v3907 = vld [vmem:[%s3904 + $0x8] sm:$0xf]
  %v3908 = vld [vmem:[%s3904 + $0xc] sm:$0xf]
  %v3909 = vld [vmem:[%s3904 + $0x10] sm:$0xf]
  %v3910 = vld [vmem:[%s3904 + $0x14] sm:$0xf]
  %v3911 = vld [vmem:[%s3904 + $0x18] sm:$0xf]
  %v3912 = vld [vmem:[%s3904 + $0x1c] sm:$0xf]
  %v3913 = vld [vmem:[%s3904 + $0x20] sm:$0xf]
  %v3914 = vld [vmem:[%s3904 + $0x24] sm:$0xf]
  %v3915 = vld [vmem:[%s3904 + $0x28] sm:$0xf]
  %v3916 = vld [vmem:[%s3904 + $0x2c] sm:$0xf]
  %v3917 = vld [vmem:[%s3904 + $0x30] sm:$0xf]
  %v3918 = vld [vmem:[%s3904 + $0x34] sm:$0xf]
  %v3919 = vld [vmem:[%s3904 + $0x38] sm:$0xf]
  %v3920 = vld [vmem:[%s3904 + $0x3c] sm:$0xf]
  %v3921 = vld [vmem:[%s3904 + $0x40] sm:$0xf]
  %v3922 = vld [vmem:[%s3904 + $0x44] sm:$0xf]
  %v3923 = vld [vmem:[%s3904 + $0x48] sm:$0xf]
  %v3924 = vld [vmem:[%s3904 + $0x4c] sm:$0xf]
  %v3925 = vld [vmem:[%s3904 + $0x50] sm:$0xf]
  %v3926 = vld [vmem:[%s3904 + $0x54] sm:$0xf]
  %v3927 = vld [vmem:[%s3904 + $0x58] sm:$0xf]
  %v3928 = vld [vmem:[%s3904 + $0x5c] sm:$0xf]
  %v3929 = vld [vmem:[%s3904 + $0x60] sm:$0xf]
  %v3930 = vld [vmem:[%s3904 + $0x64] sm:$0xf]
  %v3931 = vld [vmem:[%s3904 + $0x68] sm:$0xf]
  %v3932 = vld [vmem:[%s3904 + $0x6c] sm:$0xf]
  %v3933 = vld [vmem:[%s3904 + $0x70] sm:$0xf]
  %v3934 = vld [vmem:[%s3904 + $0x74] sm:$0xf]
  %v3935 = vld [vmem:[%s3904 + $0x78] sm:$0xf]
  %v3936 = vld [vmem:[%s3904 + $0x7c] sm:$0xf]
  %v3937 = vld [vmem:[%s3904 + $0x80] sm:$0xf]
  %v3938 = vld [vmem:[%s3904 + $0x84] sm:$0xf]
  %v3939 = vld [vmem:[%s3904 + $0x88] sm:$0xf]
  %v3940 = vld [vmem:[%s3904 + $0x8c] sm:$0xf]
  %v3941 = vld [vmem:[%s3904 + $0x90] sm:$0xf]
  %v3942 = vld [vmem:[%s3904 + $0x94] sm:$0xf]
  %v3943 = vld [vmem:[%s3904 + $0x98] sm:$0xf]
  %v3944 = vld [vmem:[%s3904 + $0x9c] sm:$0xf]
  %v3945 = vld [vmem:[%s3904 + $0xa0] sm:$0xf]
  %v3946 = vld [vmem:[%s3904 + $0xa4] sm:$0xf]
  %v3947 = vld [vmem:[%s3904 + $0xa8] sm:$0xf]
  %v3948 = vld [vmem:[%s3904 + $0xac] sm:$0xf]
  %v3949 = vld [vmem:[%s3904 + $0xb0] sm:$0xf]
  %v3950 = vld [vmem:[%s3904 + $0xb4] sm:$0xf]
  %v3951 = vld [vmem:[%s3904 + $0xb8] sm:$0xf]
  %v3952 = vld [vmem:[%s3904 + $0xbc] sm:$0xf]
  %s3953 = scalar_lea.vmem %s3, 13
  %v3954 = vld [vmem:[%s3953] sm:$0x1]
  %v3956 = vperm.slane %v3954, 0
  %v4006 = vunpack.c.l.b16 %v3905
  %v4007 = vunpack.c.l.b16 %v3906
  %v4008 = vunpack.c.l.b16 %v3907
  %v4009 = vunpack.c.l.b16 %v3908
  %v4010 = vunpack.c.l.b16 %v3909
  %v4011 = vunpack.c.l.b16 %v3910
  %v4012 = vunpack.c.l.b16 %v3911
  %v4013 = vunpack.c.l.b16 %v3912
  %v4014 = vunpack.c.l.b16 %v3913
  %v4015 = vunpack.c.l.b16 %v3914
  %v4016 = vunpack.c.l.b16 %v3915
  %v4017 = vunpack.c.l.b16 %v3916
  %v4018 = vunpack.c.l.b16 %v3917
  %v4019 = vunpack.c.l.b16 %v3918
  %v4020 = vunpack.c.l.b16 %v3919
  %v4021 = vunpack.c.l.b16 %v3920
  %v4022 = vunpack.c.l.b16 %v3921
  %v4023 = vunpack.c.l.b16 %v3922
  %v4024 = vunpack.c.l.b16 %v3923
  %v4025 = vunpack.c.l.b16 %v3924
  %v4026 = vunpack.c.l.b16 %v3925
  %v4027 = vunpack.c.l.b16 %v3926
  %v4028 = vunpack.c.l.b16 %v3927
  %v4029 = vunpack.c.l.b16 %v3928
  %v4030 = vunpack.c.l.b16 %v3929
  %v4031 = vunpack.c.l.b16 %v3930
  %v4032 = vunpack.c.l.b16 %v3931
  %v4033 = vunpack.c.l.b16 %v3932
  %v4034 = vunpack.c.l.b16 %v3933
  %v4035 = vunpack.c.l.b16 %v3934
  %v4036 = vunpack.c.l.b16 %v3935
  %v4037 = vunpack.c.l.b16 %v3936
  %v4038 = vunpack.c.l.b16 %v3937
  %v4039 = vunpack.c.l.b16 %v3938
  %v4040 = vunpack.c.l.b16 %v3939
  %v4041 = vunpack.c.l.b16 %v3940
  %v4042 = vunpack.c.l.b16 %v3941
  %v4043 = vunpack.c.l.b16 %v3942
  %v4044 = vunpack.c.l.b16 %v3943
  %v4045 = vunpack.c.l.b16 %v3944
  %v4046 = vunpack.c.l.b16 %v3945
  %v4047 = vunpack.c.l.b16 %v3946
  %v4048 = vunpack.c.l.b16 %v3947
  %v4049 = vunpack.c.l.b16 %v3948
  %v4050 = vunpack.c.l.b16 %v3949
  %v4051 = vunpack.c.l.b16 %v3950
  %v4052 = vunpack.c.l.b16 %v3951
  %v4053 = vunpack.c.l.b16 %v3952
  %v4054 = vpack.c.b16 %v4007, %v4006
  %v4055 = vpack.c.b16 %v4009, %v4008
  %v4056 = vpack.c.b16 %v4011, %v4010
  %v4057 = vpack.c.b16 %v4013, %v4012
  %v4058 = vpack.c.b16 %v4015, %v4014
  %v4059 = vpack.c.b16 %v4017, %v4016
  %v4060 = vpack.c.b16 %v4019, %v4018
  %v4061 = vpack.c.b16 %v4021, %v4020
  %v4062 = vpack.c.b16 %v4023, %v4022
  %v4063 = vpack.c.b16 %v4025, %v4024
  %v4064 = vpack.c.b16 %v4027, %v4026
  %v4065 = vpack.c.b16 %v4029, %v4028
  %v4066 = vpack.c.b16 %v4031, %v4030
  %v4067 = vpack.c.b16 %v4033, %v4032
  %v4068 = vpack.c.b16 %v4035, %v4034
  %v4069 = vpack.c.b16 %v4037, %v4036
  %v4070 = vpack.c.b16 %v4039, %v4038
  %v4071 = vpack.c.b16 %v4041, %v4040
  %v4072 = vpack.c.b16 %v4043, %v4042
  %v4073 = vpack.c.b16 %v4045, %v4044
  %v4074 = vpack.c.b16 %v4047, %v4046
  %v4075 = vpack.c.b16 %v4049, %v4048
  %v4076 = vpack.c.b16 %v4051, %v4050
  %v4077 = vpack.c.b16 %v4053, %v4052
  %4102 = vmatpush.bf16.msra.mxu0 %v4061
  %4103 = vmatpush.bf16.msra.mxu0 %v4060
  %4104 = vmatpush.bf16.msra.mxu0 %v4059
  %4105 = vmatpush.bf16.msra.mxu0 %v4058
  %4106 = vmatpush.bf16.msra.mxu0 %v4057
  %4107 = vmatpush.bf16.msra.mxu0 %v4056
  %4108 = vmatpush.bf16.msra.mxu0 %v4055
  %4109 = vmatpush.bf16.msra.mxu0 %v4054
  %4110 = vmatmul.bf16.gmra.mxu0 %v3892
  %v4111 = vpop.f32.mrf.mxu0
  %v4112 = vadd.f32 %v3956, %v4111
  %v4113 = vpop.f32.mrf.mxu0
  %v4114 = vadd.f32 %v3956, %v4113
  %4115 = vmatmul.bf16.gmra.mxu0 %v3893
  %v4116 = vpop.f32.mrf.mxu0
  %v4117 = vadd.f32 %v3956, %v4116
  %v4118 = vpop.f32.mrf.mxu0
  %v4119 = vadd.f32 %v3956, %v4118
  %4120 = vdwg.mxu0
  %4121 = vmatpush.bf16.msra.mxu0 %v4069
  %4122 = vmatpush.bf16.msra.mxu0 %v4068
  %4123 = vmatpush.bf16.msra.mxu0 %v4067
  %4124 = vmatpush.bf16.msra.mxu0 %v4066
  %4125 = vmatpush.bf16.msra.mxu0 %v4065
  %4126 = vmatpush.bf16.msra.mxu0 %v4064
  %4127 = vmatpush.bf16.msra.mxu0 %v4063
  %4128 = vmatpush.bf16.msra.mxu0 %v4062
  %4129 = vmatmul.bf16.gmra.mxu0 %v3874
  %v4130 = vpop.f32.mrf.mxu0
  %v4131 = vadd.f32 %v4112, %v4130
  %v4132 = vpop.f32.mrf.mxu0
  %v4133 = vadd.f32 %v4114, %v4132
  %4134 = vmatmul.bf16.gmra.mxu0 %v3875
  %v4135 = vpop.f32.mrf.mxu0
  %v4136 = vadd.f32 %v4117, %v4135
  %v4137 = vpop.f32.mrf.mxu0
  %v4138 = vadd.f32 %v4119, %v4137
  %4139 = vdwg.mxu0
  %4140 = vmatpush.bf16.msra.mxu0 %v4077
  %4141 = vmatpush.bf16.msra.mxu0 %v4076
  %4142 = vmatpush.bf16.msra.mxu0 %v4075
  %4143 = vmatpush.bf16.msra.mxu0 %v4074
  %4144 = vmatpush.bf16.msra.mxu0 %v4073
  %4145 = vmatpush.bf16.msra.mxu0 %v4072
  %4146 = vmatpush.bf16.msra.mxu0 %v4071
  %4147 = vmatpush.bf16.msra.mxu0 %v4070
  %4148 = vmatmul.bf16.gmra.mxu0 %v3900
  %v4149 = vpop.f32.mrf.mxu0
  %v4150 = vadd.f32 %v4131, %v4149
  %v4151 = vpop.f32.mrf.mxu0
  %v4152 = vadd.f32 %v4133, %v4151
  %4153 = vmatmul.bf16.gmra.mxu0 %v3901
  %v4154 = vpop.f32.mrf.mxu0
  %v4155 = vadd.f32 %v4136, %v4154
  %v4156 = vpop.f32.mrf.mxu0
  %v4157 = vadd.f32 %v4138, %v4156
  %4158 = vdwg.mxu0
  %v4159 = vmax.f32 %v4150, 0.0
  %v4160 = vmax.f32 %v4152, 0.0
  %v4161 = vmax.f32 %v4155, 0.0
  %v4162 = vmax.f32 %v4157, 0.0
  %v4163 = vpack.c.bf16 %v4159, %v4159
  %v4164 = vpack.c.bf16 %v4160, %v4160
  %v4165 = vpack.c.bf16 %v4161, %v4161
  %v4166 = vpack.c.bf16 %v4162, %v4162
  %v4171 = vunpack.c.l.b16 %v4163
  %v4172 = vunpack.c.l.b16 %v4164
  %v4173 = vunpack.c.l.b16 %v4165
  %v4174 = vunpack.c.l.b16 %v4166
  %v4175 = vpack.c.b16 %v4172, %v4171
  %v4176 = vpack.c.b16 %v4174, %v4173
  %v4178 = vshrl.u32 %v4175, 16
  %v4180 = vrot.slane %v4178, 7
  %v4181 = vshll.u32 %v4175, 16
  %v4183 = vor.u32 %v4180, %v4181
  %v4185 = vshrl.u32 %v4176, 16
  %v4187 = vrot.slane %v4185, 7
  %v4188 = vshll.u32 %v4176, 16
  %v4190 = vor.u32 %v4187, %v4188
  %v4193 = vsel %vm54, 0, %v4183
  %v4194 = vsel %vm54, 0, %v4190
  %v4195 = vrot.slane %v4181, 1
  %v4196 = vor.u32 %v4178, %v4195
  %v4197 = vrot.slane %v4188, 1
  %v4198 = vor.u32 %v4185, %v4197
  %v4201 = vsel %vm65, %v4196, 0
  %v4202 = vsel %vm65, %v4198, 0
  %s4205 = scalar_lea.vmem %s2, 2688
  %v4206 = vld [vmem:[%s4205] sm:$0xf]
  %v4207 = vld [vmem:[%s4205 + $0x4] sm:$0xf]
  %v4208 = vld [vmem:[%s4205 + $0x8] sm:$0xf]
  %v4209 = vld [vmem:[%s4205 + $0xc] sm:$0xf]
  %v4210 = vld [vmem:[%s4205 + $0x10] sm:$0xf]
  %v4211 = vld [vmem:[%s4205 + $0x14] sm:$0xf]
  %v4212 = vld [vmem:[%s4205 + $0x18] sm:$0xf]
  %v4213 = vld [vmem:[%s4205 + $0x1c] sm:$0xf]
  %v4214 = vld [vmem:[%s4205 + $0x20] sm:$0xf]
  %v4215 = vld [vmem:[%s4205 + $0x24] sm:$0xf]
  %v4216 = vld [vmem:[%s4205 + $0x28] sm:$0xf]
  %v4217 = vld [vmem:[%s4205 + $0x2c] sm:$0xf]
  %v4218 = vld [vmem:[%s4205 + $0x30] sm:$0xf]
  %v4219 = vld [vmem:[%s4205 + $0x34] sm:$0xf]
  %v4220 = vld [vmem:[%s4205 + $0x38] sm:$0xf]
  %v4221 = vld [vmem:[%s4205 + $0x3c] sm:$0xf]
  %v4222 = vld [vmem:[%s4205 + $0x40] sm:$0xf]
  %v4223 = vld [vmem:[%s4205 + $0x44] sm:$0xf]
  %v4224 = vld [vmem:[%s4205 + $0x48] sm:$0xf]
  %v4225 = vld [vmem:[%s4205 + $0x4c] sm:$0xf]
  %v4226 = vld [vmem:[%s4205 + $0x50] sm:$0xf]
  %v4227 = vld [vmem:[%s4205 + $0x54] sm:$0xf]
  %v4228 = vld [vmem:[%s4205 + $0x58] sm:$0xf]
  %v4229 = vld [vmem:[%s4205 + $0x5c] sm:$0xf]
  %v4230 = vld [vmem:[%s4205 + $0x60] sm:$0xf]
  %v4231 = vld [vmem:[%s4205 + $0x64] sm:$0xf]
  %v4232 = vld [vmem:[%s4205 + $0x68] sm:$0xf]
  %v4233 = vld [vmem:[%s4205 + $0x6c] sm:$0xf]
  %v4234 = vld [vmem:[%s4205 + $0x70] sm:$0xf]
  %v4235 = vld [vmem:[%s4205 + $0x74] sm:$0xf]
  %v4236 = vld [vmem:[%s4205 + $0x78] sm:$0xf]
  %v4237 = vld [vmem:[%s4205 + $0x7c] sm:$0xf]
  %v4238 = vld [vmem:[%s4205 + $0x80] sm:$0xf]
  %v4239 = vld [vmem:[%s4205 + $0x84] sm:$0xf]
  %v4240 = vld [vmem:[%s4205 + $0x88] sm:$0xf]
  %v4241 = vld [vmem:[%s4205 + $0x8c] sm:$0xf]
  %v4242 = vld [vmem:[%s4205 + $0x90] sm:$0xf]
  %v4243 = vld [vmem:[%s4205 + $0x94] sm:$0xf]
  %v4244 = vld [vmem:[%s4205 + $0x98] sm:$0xf]
  %v4245 = vld [vmem:[%s4205 + $0x9c] sm:$0xf]
  %v4246 = vld [vmem:[%s4205 + $0xa0] sm:$0xf]
  %v4247 = vld [vmem:[%s4205 + $0xa4] sm:$0xf]
  %v4248 = vld [vmem:[%s4205 + $0xa8] sm:$0xf]
  %v4249 = vld [vmem:[%s4205 + $0xac] sm:$0xf]
  %v4250 = vld [vmem:[%s4205 + $0xb0] sm:$0xf]
  %v4251 = vld [vmem:[%s4205 + $0xb4] sm:$0xf]
  %v4252 = vld [vmem:[%s4205 + $0xb8] sm:$0xf]
  %v4253 = vld [vmem:[%s4205 + $0xbc] sm:$0xf]
  %s4254 = scalar_lea.vmem %s3, 14
  %v4255 = vld [vmem:[%s4254] sm:$0x1]
  %v4257 = vperm.slane %v4255, 0
  %v4307 = vunpack.c.l.b16 %v4206
  %v4308 = vunpack.c.l.b16 %v4207
  %v4309 = vunpack.c.l.b16 %v4208
  %v4310 = vunpack.c.l.b16 %v4209
  %v4311 = vunpack.c.l.b16 %v4210
  %v4312 = vunpack.c.l.b16 %v4211
  %v4313 = vunpack.c.l.b16 %v4212
  %v4314 = vunpack.c.l.b16 %v4213
  %v4315 = vunpack.c.l.b16 %v4214
  %v4316 = vunpack.c.l.b16 %v4215
  %v4317 = vunpack.c.l.b16 %v4216
  %v4318 = vunpack.c.l.b16 %v4217
  %v4319 = vunpack.c.l.b16 %v4218
  %v4320 = vunpack.c.l.b16 %v4219
  %v4321 = vunpack.c.l.b16 %v4220
  %v4322 = vunpack.c.l.b16 %v4221
  %v4323 = vunpack.c.l.b16 %v4222
  %v4324 = vunpack.c.l.b16 %v4223
  %v4325 = vunpack.c.l.b16 %v4224
  %v4326 = vunpack.c.l.b16 %v4225
  %v4327 = vunpack.c.l.b16 %v4226
  %v4328 = vunpack.c.l.b16 %v4227
  %v4329 = vunpack.c.l.b16 %v4228
  %v4330 = vunpack.c.l.b16 %v4229
  %v4331 = vunpack.c.l.b16 %v4230
  %v4332 = vunpack.c.l.b16 %v4231
  %v4333 = vunpack.c.l.b16 %v4232
  %v4334 = vunpack.c.l.b16 %v4233
  %v4335 = vunpack.c.l.b16 %v4234
  %v4336 = vunpack.c.l.b16 %v4235
  %v4337 = vunpack.c.l.b16 %v4236
  %v4338 = vunpack.c.l.b16 %v4237
  %v4339 = vunpack.c.l.b16 %v4238
  %v4340 = vunpack.c.l.b16 %v4239
  %v4341 = vunpack.c.l.b16 %v4240
  %v4342 = vunpack.c.l.b16 %v4241
  %v4343 = vunpack.c.l.b16 %v4242
  %v4344 = vunpack.c.l.b16 %v4243
  %v4345 = vunpack.c.l.b16 %v4244
  %v4346 = vunpack.c.l.b16 %v4245
  %v4347 = vunpack.c.l.b16 %v4246
  %v4348 = vunpack.c.l.b16 %v4247
  %v4349 = vunpack.c.l.b16 %v4248
  %v4350 = vunpack.c.l.b16 %v4249
  %v4351 = vunpack.c.l.b16 %v4250
  %v4352 = vunpack.c.l.b16 %v4251
  %v4353 = vunpack.c.l.b16 %v4252
  %v4354 = vunpack.c.l.b16 %v4253
  %v4355 = vpack.c.b16 %v4308, %v4307
  %v4356 = vpack.c.b16 %v4310, %v4309
  %v4357 = vpack.c.b16 %v4312, %v4311
  %v4358 = vpack.c.b16 %v4314, %v4313
  %v4359 = vpack.c.b16 %v4316, %v4315
  %v4360 = vpack.c.b16 %v4318, %v4317
  %v4361 = vpack.c.b16 %v4320, %v4319
  %v4362 = vpack.c.b16 %v4322, %v4321
  %v4363 = vpack.c.b16 %v4324, %v4323
  %v4364 = vpack.c.b16 %v4326, %v4325
  %v4365 = vpack.c.b16 %v4328, %v4327
  %v4366 = vpack.c.b16 %v4330, %v4329
  %v4367 = vpack.c.b16 %v4332, %v4331
  %v4368 = vpack.c.b16 %v4334, %v4333
  %v4369 = vpack.c.b16 %v4336, %v4335
  %v4370 = vpack.c.b16 %v4338, %v4337
  %v4371 = vpack.c.b16 %v4340, %v4339
  %v4372 = vpack.c.b16 %v4342, %v4341
  %v4373 = vpack.c.b16 %v4344, %v4343
  %v4374 = vpack.c.b16 %v4346, %v4345
  %v4375 = vpack.c.b16 %v4348, %v4347
  %v4376 = vpack.c.b16 %v4350, %v4349
  %v4377 = vpack.c.b16 %v4352, %v4351
  %v4378 = vpack.c.b16 %v4354, %v4353
  %4403 = vmatpush.bf16.msra.mxu0 %v4362
  %4404 = vmatpush.bf16.msra.mxu0 %v4361
  %4405 = vmatpush.bf16.msra.mxu0 %v4360
  %4406 = vmatpush.bf16.msra.mxu0 %v4359
  %4407 = vmatpush.bf16.msra.mxu0 %v4358
  %4408 = vmatpush.bf16.msra.mxu0 %v4357
  %4409 = vmatpush.bf16.msra.mxu0 %v4356
  %4410 = vmatpush.bf16.msra.mxu0 %v4355
  %4411 = vmatmul.bf16.gmra.mxu0 %v4193
  %v4412 = vpop.f32.mrf.mxu0
  %v4413 = vadd.f32 %v4257, %v4412
  %v4414 = vpop.f32.mrf.mxu0
  %v4415 = vadd.f32 %v4257, %v4414
  %4416 = vmatmul.bf16.gmra.mxu0 %v4194
  %v4417 = vpop.f32.mrf.mxu0
  %v4418 = vadd.f32 %v4257, %v4417
  %v4419 = vpop.f32.mrf.mxu0
  %v4420 = vadd.f32 %v4257, %v4419
  %4421 = vdwg.mxu0
  %4422 = vmatpush.bf16.msra.mxu0 %v4370
  %4423 = vmatpush.bf16.msra.mxu0 %v4369
  %4424 = vmatpush.bf16.msra.mxu0 %v4368
  %4425 = vmatpush.bf16.msra.mxu0 %v4367
  %4426 = vmatpush.bf16.msra.mxu0 %v4366
  %4427 = vmatpush.bf16.msra.mxu0 %v4365
  %4428 = vmatpush.bf16.msra.mxu0 %v4364
  %4429 = vmatpush.bf16.msra.mxu0 %v4363
  %4430 = vmatmul.bf16.gmra.mxu0 %v4175
  %v4431 = vpop.f32.mrf.mxu0
  %v4432 = vadd.f32 %v4413, %v4431
  %v4433 = vpop.f32.mrf.mxu0
  %v4434 = vadd.f32 %v4415, %v4433
  %4435 = vmatmul.bf16.gmra.mxu0 %v4176
  %v4436 = vpop.f32.mrf.mxu0
  %v4437 = vadd.f32 %v4418, %v4436
  %v4438 = vpop.f32.mrf.mxu0
  %v4439 = vadd.f32 %v4420, %v4438
  %4440 = vdwg.mxu0
  %4441 = vmatpush.bf16.msra.mxu0 %v4378
  %4442 = vmatpush.bf16.msra.mxu0 %v4377
  %4443 = vmatpush.bf16.msra.mxu0 %v4376
  %4444 = vmatpush.bf16.msra.mxu0 %v4375
  %4445 = vmatpush.bf16.msra.mxu0 %v4374
  %4446 = vmatpush.bf16.msra.mxu0 %v4373
  %4447 = vmatpush.bf16.msra.mxu0 %v4372
  %4448 = vmatpush.bf16.msra.mxu0 %v4371
  %4449 = vmatmul.bf16.gmra.mxu0 %v4201
  %v4450 = vpop.f32.mrf.mxu0
  %v4451 = vadd.f32 %v4432, %v4450
  %v4452 = vpop.f32.mrf.mxu0
  %v4453 = vadd.f32 %v4434, %v4452
  %4454 = vmatmul.bf16.gmra.mxu0 %v4202
  %v4455 = vpop.f32.mrf.mxu0
  %v4456 = vadd.f32 %v4437, %v4455
  %v4457 = vpop.f32.mrf.mxu0
  %v4458 = vadd.f32 %v4439, %v4457
  %4459 = vdwg.mxu0
  %v4460 = vadd.f32 %v3858, %v4451
  %v4461 = vadd.f32 %v3859, %v4453
  %v4462 = vadd.f32 %v3860, %v4456
  %v4463 = vadd.f32 %v3861, %v4458
  %v4464 = vpack.c.bf16 %v4460, %v4460
  %v4465 = vpack.c.bf16 %v4461, %v4461
  %v4466 = vpack.c.bf16 %v4462, %v4462
  %v4467 = vpack.c.bf16 %v4463, %v4463
  %v4472 = vunpack.c.l.b16 %v4464
  %v4473 = vunpack.c.l.b16 %v4465
  %v4474 = vunpack.c.l.b16 %v4466
  %v4475 = vunpack.c.l.b16 %v4467
  %v4476 = vpack.c.b16 %v4473, %v4472
  %v4477 = vpack.c.b16 %v4475, %v4474
  %v4479 = vshrl.u32 %v4476, 16
  %v4481 = vrot.slane %v4479, 7
  %v4482 = vshll.u32 %v4476, 16
  %v4484 = vor.u32 %v4481, %v4482
  %v4486 = vshrl.u32 %v4477, 16
  %v4488 = vrot.slane %v4486, 7
  %v4489 = vshll.u32 %v4477, 16
  %v4491 = vor.u32 %v4488, %v4489
  %v4494 = vsel %vm54, 0, %v4484
  %v4495 = vsel %vm54, 0, %v4491
  %v4496 = vrot.slane %v4482, 1
  %v4497 = vor.u32 %v4479, %v4496
  %v4498 = vrot.slane %v4489, 1
  %v4499 = vor.u32 %v4486, %v4498
  %v4502 = vsel %vm65, %v4497, 0
  %v4503 = vsel %vm65, %v4499, 0
  %s4506 = scalar_lea.vmem %s2, 2880
  %v4507 = vld [vmem:[%s4506] sm:$0xf]
  %v4508 = vld [vmem:[%s4506 + $0x4] sm:$0xf]
  %v4509 = vld [vmem:[%s4506 + $0x8] sm:$0xf]
  %v4510 = vld [vmem:[%s4506 + $0xc] sm:$0xf]
  %v4511 = vld [vmem:[%s4506 + $0x10] sm:$0xf]
  %v4512 = vld [vmem:[%s4506 + $0x14] sm:$0xf]
  %v4513 = vld [vmem:[%s4506 + $0x18] sm:$0xf]
  %v4514 = vld [vmem:[%s4506 + $0x1c] sm:$0xf]
  %v4515 = vld [vmem:[%s4506 + $0x20] sm:$0xf]
  %v4516 = vld [vmem:[%s4506 + $0x24] sm:$0xf]
  %v4517 = vld [vmem:[%s4506 + $0x28] sm:$0xf]
  %v4518 = vld [vmem:[%s4506 + $0x2c] sm:$0xf]
  %v4519 = vld [vmem:[%s4506 + $0x30] sm:$0xf]
  %v4520 = vld [vmem:[%s4506 + $0x34] sm:$0xf]
  %v4521 = vld [vmem:[%s4506 + $0x38] sm:$0xf]
  %v4522 = vld [vmem:[%s4506 + $0x3c] sm:$0xf]
  %v4523 = vld [vmem:[%s4506 + $0x40] sm:$0xf]
  %v4524 = vld [vmem:[%s4506 + $0x44] sm:$0xf]
  %v4525 = vld [vmem:[%s4506 + $0x48] sm:$0xf]
  %v4526 = vld [vmem:[%s4506 + $0x4c] sm:$0xf]
  %v4527 = vld [vmem:[%s4506 + $0x50] sm:$0xf]
  %v4528 = vld [vmem:[%s4506 + $0x54] sm:$0xf]
  %v4529 = vld [vmem:[%s4506 + $0x58] sm:$0xf]
  %v4530 = vld [vmem:[%s4506 + $0x5c] sm:$0xf]
  %v4531 = vld [vmem:[%s4506 + $0x60] sm:$0xf]
  %v4532 = vld [vmem:[%s4506 + $0x64] sm:$0xf]
  %v4533 = vld [vmem:[%s4506 + $0x68] sm:$0xf]
  %v4534 = vld [vmem:[%s4506 + $0x6c] sm:$0xf]
  %v4535 = vld [vmem:[%s4506 + $0x70] sm:$0xf]
  %v4536 = vld [vmem:[%s4506 + $0x74] sm:$0xf]
  %v4537 = vld [vmem:[%s4506 + $0x78] sm:$0xf]
  %v4538 = vld [vmem:[%s4506 + $0x7c] sm:$0xf]
  %v4539 = vld [vmem:[%s4506 + $0x80] sm:$0xf]
  %v4540 = vld [vmem:[%s4506 + $0x84] sm:$0xf]
  %v4541 = vld [vmem:[%s4506 + $0x88] sm:$0xf]
  %v4542 = vld [vmem:[%s4506 + $0x8c] sm:$0xf]
  %v4543 = vld [vmem:[%s4506 + $0x90] sm:$0xf]
  %v4544 = vld [vmem:[%s4506 + $0x94] sm:$0xf]
  %v4545 = vld [vmem:[%s4506 + $0x98] sm:$0xf]
  %v4546 = vld [vmem:[%s4506 + $0x9c] sm:$0xf]
  %v4547 = vld [vmem:[%s4506 + $0xa0] sm:$0xf]
  %v4548 = vld [vmem:[%s4506 + $0xa4] sm:$0xf]
  %v4549 = vld [vmem:[%s4506 + $0xa8] sm:$0xf]
  %v4550 = vld [vmem:[%s4506 + $0xac] sm:$0xf]
  %v4551 = vld [vmem:[%s4506 + $0xb0] sm:$0xf]
  %v4552 = vld [vmem:[%s4506 + $0xb4] sm:$0xf]
  %v4553 = vld [vmem:[%s4506 + $0xb8] sm:$0xf]
  %v4554 = vld [vmem:[%s4506 + $0xbc] sm:$0xf]
  %s4555 = scalar_lea.vmem %s3, 15
  %v4556 = vld [vmem:[%s4555] sm:$0x1]
  %v4558 = vperm.slane %v4556, 0
  %v4608 = vunpack.c.l.b16 %v4507
  %v4609 = vunpack.c.l.b16 %v4508
  %v4610 = vunpack.c.l.b16 %v4509
  %v4611 = vunpack.c.l.b16 %v4510
  %v4612 = vunpack.c.l.b16 %v4511
  %v4613 = vunpack.c.l.b16 %v4512
  %v4614 = vunpack.c.l.b16 %v4513
  %v4615 = vunpack.c.l.b16 %v4514
  %v4616 = vunpack.c.l.b16 %v4515
  %v4617 = vunpack.c.l.b16 %v4516
  %v4618 = vunpack.c.l.b16 %v4517
  %v4619 = vunpack.c.l.b16 %v4518
  %v4620 = vunpack.c.l.b16 %v4519
  %v4621 = vunpack.c.l.b16 %v4520
  %v4622 = vunpack.c.l.b16 %v4521
  %v4623 = vunpack.c.l.b16 %v4522
  %v4624 = vunpack.c.l.b16 %v4523
  %v4625 = vunpack.c.l.b16 %v4524
  %v4626 = vunpack.c.l.b16 %v4525
  %v4627 = vunpack.c.l.b16 %v4526
  %v4628 = vunpack.c.l.b16 %v4527
  %v4629 = vunpack.c.l.b16 %v4528
  %v4630 = vunpack.c.l.b16 %v4529
  %v4631 = vunpack.c.l.b16 %v4530
  %v4632 = vunpack.c.l.b16 %v4531
  %v4633 = vunpack.c.l.b16 %v4532
  %v4634 = vunpack.c.l.b16 %v4533
  %v4635 = vunpack.c.l.b16 %v4534
  %v4636 = vunpack.c.l.b16 %v4535
  %v4637 = vunpack.c.l.b16 %v4536
  %v4638 = vunpack.c.l.b16 %v4537
  %v4639 = vunpack.c.l.b16 %v4538
  %v4640 = vunpack.c.l.b16 %v4539
  %v4641 = vunpack.c.l.b16 %v4540
  %v4642 = vunpack.c.l.b16 %v4541
  %v4643 = vunpack.c.l.b16 %v4542
  %v4644 = vunpack.c.l.b16 %v4543
  %v4645 = vunpack.c.l.b16 %v4544
  %v4646 = vunpack.c.l.b16 %v4545
  %v4647 = vunpack.c.l.b16 %v4546
  %v4648 = vunpack.c.l.b16 %v4547
  %v4649 = vunpack.c.l.b16 %v4548
  %v4650 = vunpack.c.l.b16 %v4549
  %v4651 = vunpack.c.l.b16 %v4550
  %v4652 = vunpack.c.l.b16 %v4551
  %v4653 = vunpack.c.l.b16 %v4552
  %v4654 = vunpack.c.l.b16 %v4553
  %v4655 = vunpack.c.l.b16 %v4554
  %v4656 = vpack.c.b16 %v4609, %v4608
  %v4657 = vpack.c.b16 %v4611, %v4610
  %v4658 = vpack.c.b16 %v4613, %v4612
  %v4659 = vpack.c.b16 %v4615, %v4614
  %v4660 = vpack.c.b16 %v4617, %v4616
  %v4661 = vpack.c.b16 %v4619, %v4618
  %v4662 = vpack.c.b16 %v4621, %v4620
  %v4663 = vpack.c.b16 %v4623, %v4622
  %v4664 = vpack.c.b16 %v4625, %v4624
  %v4665 = vpack.c.b16 %v4627, %v4626
  %v4666 = vpack.c.b16 %v4629, %v4628
  %v4667 = vpack.c.b16 %v4631, %v4630
  %v4668 = vpack.c.b16 %v4633, %v4632
  %v4669 = vpack.c.b16 %v4635, %v4634
  %v4670 = vpack.c.b16 %v4637, %v4636
  %v4671 = vpack.c.b16 %v4639, %v4638
  %v4672 = vpack.c.b16 %v4641, %v4640
  %v4673 = vpack.c.b16 %v4643, %v4642
  %v4674 = vpack.c.b16 %v4645, %v4644
  %v4675 = vpack.c.b16 %v4647, %v4646
  %v4676 = vpack.c.b16 %v4649, %v4648
  %v4677 = vpack.c.b16 %v4651, %v4650
  %v4678 = vpack.c.b16 %v4653, %v4652
  %v4679 = vpack.c.b16 %v4655, %v4654
  %4704 = vmatpush.bf16.msra.mxu0 %v4663
  %4705 = vmatpush.bf16.msra.mxu0 %v4662
  %4706 = vmatpush.bf16.msra.mxu0 %v4661
  %4707 = vmatpush.bf16.msra.mxu0 %v4660
  %4708 = vmatpush.bf16.msra.mxu0 %v4659
  %4709 = vmatpush.bf16.msra.mxu0 %v4658
  %4710 = vmatpush.bf16.msra.mxu0 %v4657
  %4711 = vmatpush.bf16.msra.mxu0 %v4656
  %4712 = vmatmul.bf16.gmra.mxu0 %v4494
  %v4713 = vpop.f32.mrf.mxu0
  %v4714 = vadd.f32 %v4558, %v4713
  %v4715 = vpop.f32.mrf.mxu0
  %v4716 = vadd.f32 %v4558, %v4715
  %4717 = vmatmul.bf16.gmra.mxu0 %v4495
  %v4718 = vpop.f32.mrf.mxu0
  %v4719 = vadd.f32 %v4558, %v4718
  %v4720 = vpop.f32.mrf.mxu0
  %v4721 = vadd.f32 %v4558, %v4720
  %4722 = vdwg.mxu0
  %4723 = vmatpush.bf16.msra.mxu0 %v4671
  %4724 = vmatpush.bf16.msra.mxu0 %v4670
  %4725 = vmatpush.bf16.msra.mxu0 %v4669
  %4726 = vmatpush.bf16.msra.mxu0 %v4668
  %4727 = vmatpush.bf16.msra.mxu0 %v4667
  %4728 = vmatpush.bf16.msra.mxu0 %v4666
  %4729 = vmatpush.bf16.msra.mxu0 %v4665
  %4730 = vmatpush.bf16.msra.mxu0 %v4664
  %4731 = vmatmul.bf16.gmra.mxu0 %v4476
  %v4732 = vpop.f32.mrf.mxu0
  %v4733 = vadd.f32 %v4714, %v4732
  %v4734 = vpop.f32.mrf.mxu0
  %v4735 = vadd.f32 %v4716, %v4734
  %4736 = vmatmul.bf16.gmra.mxu0 %v4477
  %v4737 = vpop.f32.mrf.mxu0
  %v4738 = vadd.f32 %v4719, %v4737
  %v4739 = vpop.f32.mrf.mxu0
  %v4740 = vadd.f32 %v4721, %v4739
  %4741 = vdwg.mxu0
  %4742 = vmatpush.bf16.msra.mxu0 %v4679
  %4743 = vmatpush.bf16.msra.mxu0 %v4678
  %4744 = vmatpush.bf16.msra.mxu0 %v4677
  %4745 = vmatpush.bf16.msra.mxu0 %v4676
  %4746 = vmatpush.bf16.msra.mxu0 %v4675
  %4747 = vmatpush.bf16.msra.mxu0 %v4674
  %4748 = vmatpush.bf16.msra.mxu0 %v4673
  %4749 = vmatpush.bf16.msra.mxu0 %v4672
  %4750 = vmatmul.bf16.gmra.mxu0 %v4502
  %v4751 = vpop.f32.mrf.mxu0
  %v4752 = vadd.f32 %v4733, %v4751
  %v4753 = vpop.f32.mrf.mxu0
  %v4754 = vadd.f32 %v4735, %v4753
  %4755 = vmatmul.bf16.gmra.mxu0 %v4503
  %v4756 = vpop.f32.mrf.mxu0
  %v4757 = vadd.f32 %v4738, %v4756
  %v4758 = vpop.f32.mrf.mxu0
  %v4759 = vadd.f32 %v4740, %v4758
  %4760 = vdwg.mxu0
  %v4761 = vadd.f32 %v3256, %v4752
  %v4762 = vadd.f32 %v3257, %v4754
  %v4763 = vadd.f32 %v3258, %v4757
  %v4764 = vadd.f32 %v3259, %v4759
  %v4765 = vpack.c.bf16 %v4761, %v4761
  %v4766 = vpack.c.bf16 %v4762, %v4762
  %v4767 = vpack.c.bf16 %v4763, %v4763
  %v4768 = vpack.c.bf16 %v4764, %v4764
  %v4773 = vunpack.c.l.b16 %v4765
  %v4774 = vunpack.c.l.b16 %v4766
  %v4775 = vunpack.c.l.b16 %v4767
  %v4776 = vunpack.c.l.b16 %v4768
  %v4777 = vpack.c.b16 %v4774, %v4773
  %v4778 = vpack.c.b16 %v4776, %v4775
  %v4780 = vshrl.u32 %v4777, 16
  %v4782 = vrot.slane %v4780, 7
  %v4783 = vshll.u32 %v4777, 16
  %v4785 = vor.u32 %v4782, %v4783
  %v4787 = vshrl.u32 %v4778, 16
  %v4789 = vrot.slane %v4787, 7
  %v4790 = vshll.u32 %v4778, 16
  %v4792 = vor.u32 %v4789, %v4790
  %v4795 = vsel %vm54, 0, %v4785
  %v4796 = vsel %vm54, 0, %v4792
  %v4797 = vrot.slane %v4783, 1
  %v4798 = vor.u32 %v4780, %v4797
  %v4799 = vrot.slane %v4790, 1
  %v4800 = vor.u32 %v4787, %v4799
  %v4803 = vsel %vm65, %v4798, 0
  %v4804 = vsel %vm65, %v4800, 0
  %s4807 = scalar_lea.vmem %s2, 3072
  %v4808 = vld [vmem:[%s4807] sm:$0xf]
  %v4809 = vld [vmem:[%s4807 + $0x4] sm:$0xf]
  %v4810 = vld [vmem:[%s4807 + $0x8] sm:$0xf]
  %v4811 = vld [vmem:[%s4807 + $0xc] sm:$0xf]
  %v4812 = vld [vmem:[%s4807 + $0x10] sm:$0xf]
  %v4813 = vld [vmem:[%s4807 + $0x14] sm:$0xf]
  %v4814 = vld [vmem:[%s4807 + $0x18] sm:$0xf]
  %v4815 = vld [vmem:[%s4807 + $0x1c] sm:$0xf]
  %v4816 = vld [vmem:[%s4807 + $0x20] sm:$0xf]
  %v4817 = vld [vmem:[%s4807 + $0x24] sm:$0xf]
  %v4818 = vld [vmem:[%s4807 + $0x28] sm:$0xf]
  %v4819 = vld [vmem:[%s4807 + $0x2c] sm:$0xf]
  %v4820 = vld [vmem:[%s4807 + $0x30] sm:$0xf]
  %v4821 = vld [vmem:[%s4807 + $0x34] sm:$0xf]
  %v4822 = vld [vmem:[%s4807 + $0x38] sm:$0xf]
  %v4823 = vld [vmem:[%s4807 + $0x3c] sm:$0xf]
  %v4824 = vld [vmem:[%s4807 + $0x40] sm:$0xf]
  %v4825 = vld [vmem:[%s4807 + $0x44] sm:$0xf]
  %v4826 = vld [vmem:[%s4807 + $0x48] sm:$0xf]
  %v4827 = vld [vmem:[%s4807 + $0x4c] sm:$0xf]
  %v4828 = vld [vmem:[%s4807 + $0x50] sm:$0xf]
  %v4829 = vld [vmem:[%s4807 + $0x54] sm:$0xf]
  %v4830 = vld [vmem:[%s4807 + $0x58] sm:$0xf]
  %v4831 = vld [vmem:[%s4807 + $0x5c] sm:$0xf]
  %v4832 = vld [vmem:[%s4807 + $0x60] sm:$0xf]
  %v4833 = vld [vmem:[%s4807 + $0x64] sm:$0xf]
  %v4834 = vld [vmem:[%s4807 + $0x68] sm:$0xf]
  %v4835 = vld [vmem:[%s4807 + $0x6c] sm:$0xf]
  %v4836 = vld [vmem:[%s4807 + $0x70] sm:$0xf]
  %v4837 = vld [vmem:[%s4807 + $0x74] sm:$0xf]
  %v4838 = vld [vmem:[%s4807 + $0x78] sm:$0xf]
  %v4839 = vld [vmem:[%s4807 + $0x7c] sm:$0xf]
  %v4840 = vld [vmem:[%s4807 + $0x80] sm:$0xf]
  %v4841 = vld [vmem:[%s4807 + $0x84] sm:$0xf]
  %v4842 = vld [vmem:[%s4807 + $0x88] sm:$0xf]
  %v4843 = vld [vmem:[%s4807 + $0x8c] sm:$0xf]
  %v4844 = vld [vmem:[%s4807 + $0x90] sm:$0xf]
  %v4845 = vld [vmem:[%s4807 + $0x94] sm:$0xf]
  %v4846 = vld [vmem:[%s4807 + $0x98] sm:$0xf]
  %v4847 = vld [vmem:[%s4807 + $0x9c] sm:$0xf]
  %v4848 = vld [vmem:[%s4807 + $0xa0] sm:$0xf]
  %v4849 = vld [vmem:[%s4807 + $0xa4] sm:$0xf]
  %v4850 = vld [vmem:[%s4807 + $0xa8] sm:$0xf]
  %v4851 = vld [vmem:[%s4807 + $0xac] sm:$0xf]
  %v4852 = vld [vmem:[%s4807 + $0xb0] sm:$0xf]
  %v4853 = vld [vmem:[%s4807 + $0xb4] sm:$0xf]
  %v4854 = vld [vmem:[%s4807 + $0xb8] sm:$0xf]
  %v4855 = vld [vmem:[%s4807 + $0xbc] sm:$0xf]
  %s4856 = scalar_lea.vmem %s3, 16
  %v4857 = vld [vmem:[%s4856] sm:$0x1]
  %v4859 = vperm.slane %v4857, 0
  %v4909 = vunpack.c.l.b16 %v4808
  %v4910 = vunpack.c.l.b16 %v4809
  %v4911 = vunpack.c.l.b16 %v4810
  %v4912 = vunpack.c.l.b16 %v4811
  %v4913 = vunpack.c.l.b16 %v4812
  %v4914 = vunpack.c.l.b16 %v4813
  %v4915 = vunpack.c.l.b16 %v4814
  %v4916 = vunpack.c.l.b16 %v4815
  %v4917 = vunpack.c.l.b16 %v4816
  %v4918 = vunpack.c.l.b16 %v4817
  %v4919 = vunpack.c.l.b16 %v4818
  %v4920 = vunpack.c.l.b16 %v4819
  %v4921 = vunpack.c.l.b16 %v4820
  %v4922 = vunpack.c.l.b16 %v4821
  %v4923 = vunpack.c.l.b16 %v4822
  %v4924 = vunpack.c.l.b16 %v4823
  %v4925 = vunpack.c.l.b16 %v4824
  %v4926 = vunpack.c.l.b16 %v4825
  %v4927 = vunpack.c.l.b16 %v4826
  %v4928 = vunpack.c.l.b16 %v4827
  %v4929 = vunpack.c.l.b16 %v4828
  %v4930 = vunpack.c.l.b16 %v4829
  %v4931 = vunpack.c.l.b16 %v4830
  %v4932 = vunpack.c.l.b16 %v4831
  %v4933 = vunpack.c.l.b16 %v4832
  %v4934 = vunpack.c.l.b16 %v4833
  %v4935 = vunpack.c.l.b16 %v4834
  %v4936 = vunpack.c.l.b16 %v4835
  %v4937 = vunpack.c.l.b16 %v4836
  %v4938 = vunpack.c.l.b16 %v4837
  %v4939 = vunpack.c.l.b16 %v4838
  %v4940 = vunpack.c.l.b16 %v4839
  %v4941 = vunpack.c.l.b16 %v4840
  %v4942 = vunpack.c.l.b16 %v4841
  %v4943 = vunpack.c.l.b16 %v4842
  %v4944 = vunpack.c.l.b16 %v4843
  %v4945 = vunpack.c.l.b16 %v4844
  %v4946 = vunpack.c.l.b16 %v4845
  %v4947 = vunpack.c.l.b16 %v4846
  %v4948 = vunpack.c.l.b16 %v4847
  %v4949 = vunpack.c.l.b16 %v4848
  %v4950 = vunpack.c.l.b16 %v4849
  %v4951 = vunpack.c.l.b16 %v4850
  %v4952 = vunpack.c.l.b16 %v4851
  %v4953 = vunpack.c.l.b16 %v4852
  %v4954 = vunpack.c.l.b16 %v4853
  %v4955 = vunpack.c.l.b16 %v4854
  %v4956 = vunpack.c.l.b16 %v4855
  %v4957 = vpack.c.b16 %v4910, %v4909
  %v4958 = vpack.c.b16 %v4912, %v4911
  %v4959 = vpack.c.b16 %v4914, %v4913
  %v4960 = vpack.c.b16 %v4916, %v4915
  %v4961 = vpack.c.b16 %v4918, %v4917
  %v4962 = vpack.c.b16 %v4920, %v4919
  %v4963 = vpack.c.b16 %v4922, %v4921
  %v4964 = vpack.c.b16 %v4924, %v4923
  %v4965 = vpack.c.b16 %v4926, %v4925
  %v4966 = vpack.c.b16 %v4928, %v4927
  %v4967 = vpack.c.b16 %v4930, %v4929
  %v4968 = vpack.c.b16 %v4932, %v4931
  %v4969 = vpack.c.b16 %v4934, %v4933
  %v4970 = vpack.c.b16 %v4936, %v4935
  %v4971 = vpack.c.b16 %v4938, %v4937
  %v4972 = vpack.c.b16 %v4940, %v4939
  %v4973 = vpack.c.b16 %v4942, %v4941
  %v4974 = vpack.c.b16 %v4944, %v4943
  %v4975 = vpack.c.b16 %v4946, %v4945
  %v4976 = vpack.c.b16 %v4948, %v4947
  %v4977 = vpack.c.b16 %v4950, %v4949
  %v4978 = vpack.c.b16 %v4952, %v4951
  %v4979 = vpack.c.b16 %v4954, %v4953
  %v4980 = vpack.c.b16 %v4956, %v4955
  %5005 = vmatpush.bf16.msra.mxu0 %v4964
  %5006 = vmatpush.bf16.msra.mxu0 %v4963
  %5007 = vmatpush.bf16.msra.mxu0 %v4962
  %5008 = vmatpush.bf16.msra.mxu0 %v4961
  %5009 = vmatpush.bf16.msra.mxu0 %v4960
  %5010 = vmatpush.bf16.msra.mxu0 %v4959
  %5011 = vmatpush.bf16.msra.mxu0 %v4958
  %5012 = vmatpush.bf16.msra.mxu0 %v4957
  %5013 = vmatmul.bf16.gmra.mxu0 %v4795
  %v5014 = vpop.f32.mrf.mxu0
  %v5015 = vadd.f32 %v4859, %v5014
  %v5016 = vpop.f32.mrf.mxu0
  %v5017 = vadd.f32 %v4859, %v5016
  %5018 = vmatmul.bf16.gmra.mxu0 %v4796
  %v5019 = vpop.f32.mrf.mxu0
  %v5020 = vadd.f32 %v4859, %v5019
  %v5021 = vpop.f32.mrf.mxu0
  %v5022 = vadd.f32 %v4859, %v5021
  %5023 = vdwg.mxu0
  %5024 = vmatpush.bf16.msra.mxu0 %v4972
  %5025 = vmatpush.bf16.msra.mxu0 %v4971
  %5026 = vmatpush.bf16.msra.mxu0 %v4970
  %5027 = vmatpush.bf16.msra.mxu0 %v4969
  %5028 = vmatpush.bf16.msra.mxu0 %v4968
  %5029 = vmatpush.bf16.msra.mxu0 %v4967
  %5030 = vmatpush.bf16.msra.mxu0 %v4966
  %5031 = vmatpush.bf16.msra.mxu0 %v4965
  %5032 = vmatmul.bf16.gmra.mxu0 %v4777
  %v5033 = vpop.f32.mrf.mxu0
  %v5034 = vadd.f32 %v5015, %v5033
  %v5035 = vpop.f32.mrf.mxu0
  %v5036 = vadd.f32 %v5017, %v5035
  %5037 = vmatmul.bf16.gmra.mxu0 %v4778
  %v5038 = vpop.f32.mrf.mxu0
  %v5039 = vadd.f32 %v5020, %v5038
  %v5040 = vpop.f32.mrf.mxu0
  %v5041 = vadd.f32 %v5022, %v5040
  %5042 = vdwg.mxu0
  %5043 = vmatpush.bf16.msra.mxu0 %v4980
  %5044 = vmatpush.bf16.msra.mxu0 %v4979
  %5045 = vmatpush.bf16.msra.mxu0 %v4978
  %5046 = vmatpush.bf16.msra.mxu0 %v4977
  %5047 = vmatpush.bf16.msra.mxu0 %v4976
  %5048 = vmatpush.bf16.msra.mxu0 %v4975
  %5049 = vmatpush.bf16.msra.mxu0 %v4974
  %5050 = vmatpush.bf16.msra.mxu0 %v4973
  %5051 = vmatmul.bf16.gmra.mxu0 %v4803
  %v5052 = vpop.f32.mrf.mxu0
  %v5053 = vadd.f32 %v5034, %v5052
  %v5054 = vpop.f32.mrf.mxu0
  %v5055 = vadd.f32 %v5036, %v5054
  %5056 = vmatmul.bf16.gmra.mxu0 %v4804
  %v5057 = vpop.f32.mrf.mxu0
  %v5058 = vadd.f32 %v5039, %v5057
  %v5059 = vpop.f32.mrf.mxu0
  %v5060 = vadd.f32 %v5041, %v5059
  %5061 = vdwg.mxu0
  %v5062 = vadd.f32 %v5053, %v18
  %v5063 = vadd.f32 %v5055, %v19
  %v5064 = vadd.f32 %v5058, %v20
  %v5065 = vadd.f32 %v5060, %v21
  %5066 = vst [vmem:[%s4] sm:$0xff] %v5062
  %5067 = vst [vmem:[%s4 + $0x8] sm:$0xff] %v5063
  %5068 = vst [vmem:[%s4 + $0x10] sm:$0xff] %v5064
  %5069 = vst [vmem:[%s4 + $0x18] sm:$0xff] %v5065
  // Predicated region
  $region18: #{vdir_forward_packed.1} parent=0 // pred_check
    _
  $region19: #{vdir_forward_packed.1} parent=0 // pred_check_branch
    %5071 = sbr.rel (0) target = $region21
  $region20: #{vdir_forward_packed.1} parent=0 // pred_region
    _
  $region21: #{vdir_forward_packed.1} parent=0 // pred_fallthru
    _
  // Predicated region
  $region22: #{vdir_forward_packed.1} parent=0 // pred_check
    _
  $region23: #{vdir_forward_packed.1} parent=0 // pred_check_branch
    %5073 = sbr.rel (0) target = $region25
  $region24: #{vdir_forward_packed.1} parent=0 // pred_region
    _
  $region25: #{vdir_forward_packed.1} parent=0 // pred_fallthru
    _

</llo_original>
